<compile_context>
chip_gen: v7x
topology: tpu7x:2x2x1
jax: 0.10.0
libtpu: 0.0.40
codegen_flags: <defaults>
</compile_context>

<pallas_src>
import numpy as np
import jax
import jax.numpy as jnp
from jax.experimental import pallas as pl
from jax.experimental.pallas import tpu as pltpu

EPS_IN = 1e-5          # torch.nn.InstanceNorm2d default eps
LRELU_SLOPE = 0.2      # nn.LeakyReLU(0.2)
KSIZE = 4              # every CoordConv uses a 4x4 kernel


# ---------------------------------------------------------------------------
# static helpers (parameter-prep time only)
# ---------------------------------------------------------------------------
def _layer_cfg(nc, ndf, imsize):
    if imsize == 128:
        cfg = [(nc, ndf // 2, 2, 1, "lrelu"),
               (ndf // 2, ndf, 2, 1, "in_lrelu"),
               (ndf, ndf * 2, 2, 1, "in_lrelu")]
    elif imsize == 64:
        cfg = [(nc, ndf, 2, 1, "lrelu"),
               (ndf, ndf * 2, 2, 1, "in_lrelu")]
    else:
        cfg = [(nc, ndf * 2, 2, 1, "in_lrelu")]
    cfg += [(ndf * 2, ndf * 4, 2, 1, "in_lrelu"),
            (ndf * 4, ndf * 8, 2, 1, "in_lrelu"),
            (ndf * 8, 1, 1, 0, "none")]
    return cfg


def _coord_maps(h, w):
    # torch AddCoords orientation: xx varies along H, yy varies along W, in [-1, 1]
    xx = np.tile((2.0 * np.arange(h, dtype=np.float32) / (h - 1) - 1.0)[:, None], (1, w))
    yy = np.tile((2.0 * np.arange(w, dtype=np.float32) / (w - 1) - 1.0)[None, :], (h, 1))
    return xx, yy


def _im2col_np(img, ksize, stride, pad):
    """img: (H, W, C) -> (Ho*Wo, ksize*ksize*C), column order (kh, kw, c)."""
    h, w, c = img.shape
    ip = np.pad(img, ((pad, pad), (pad, pad), (0, 0)))
    ho = (h + 2 * pad - ksize) // stride + 1
    wo = (w + 2 * pad - ksize) // stride + 1
    cols = np.zeros((ho * wo, ksize * ksize * c), dtype=np.float32)
    for i in range(ksize):
        for j in range(ksize):
            tap = ip[i:i + stride * (ho - 1) + 1:stride,
                     j:j + stride * (wo - 1) + 1:stride, :]
            cols[:, (i * ksize + j) * c:(i * ksize + j + 1) * c] = tap.reshape(ho * wo, c)
    return cols


def _gather_matrix_np(h_in, w_in, ksize, stride, pad):
    """0/1 matrix S (ksize*ksize*HoWo, HinWin): row t*HoWo + p holds the one-hot of
    the input pixel read by kernel tap t at output position p (all-zero row == pad)."""
    ho = (h_in + 2 * pad - ksize) // stride + 1
    wo = (w_in + 2 * pad - ksize) // stride + 1
    S = np.zeros((ksize * ksize * ho * wo, h_in * w_in), dtype=np.float32)
    for i in range(ksize):
        for j in range(ksize):
            t = i * ksize + j
            for oh in range(ho):
                ih = stride * oh + i - pad
                if not (0 <= ih < h_in):
                    continue
                for ow in range(wo):
                    iw = stride * ow + j - pad
                    if not (0 <= iw < w_in):
                        continue
                    S[t * ho * wo + oh * wo + ow, ih * w_in + iw] = 1.0
    return S, ho, wo


def spectral_norm_weight(w, key, n_power_iterations=1, eps=1e-12):
    """torch.nn.utils.spectral_norm semantics for a fresh-init forward."""
    # TODO(synk): torch persists the power-iteration vector u across forwards; here we
    # match only the first forward from a fresh init (random u, one power iteration).
    co = w.shape[0]
    w_mat = w.reshape(co, -1)
    u = jax.random.normal(key, (co,), dtype=w.dtype)
    u = u / (jnp.linalg.norm(u) + eps)
    v = None
    for _ in range(n_power_iterations):
        v = w_mat.T @ u
        v = v / (jnp.linalg.norm(v) + eps)
        u = w_mat @ v
        u = u / (jnp.linalg.norm(u) + eps)
    sigma = u @ (w_mat @ v)
    return w / sigma


def make_discriminator_params(key, nc=3, ndf=8, imsize=32):
    """Random spectral-normalised CoordConv weights, torch layout (Co, Cin+2, kh, kw)."""
    assert imsize in (32, 64, 128)
    layers = []
    for cin, cout, stride, pad, mode in _layer_cfg(nc, ndf, imsize):
        key, wk, uk = jax.random.split(key, 3)
        w = jax.random.normal(wk, (cout, cin + 2, KSIZE, KSIZE), dtype=jnp.float32) * 0.05
        w = spectral_norm_weight(w, uk)
        layers.append(dict(weight=w, cin=cin, cout=cout,
                           stride=stride, pad=pad, mode=mode))
    return layers


def _coord_bias(h, stride, pad, w_coord):
    """Coord-channel contribution of a CoordConv as an f32 (HoWo, Co) bias map
    (operands rounded through bf16 to match the bf16 matmul path)."""
    xx, yy = _coord_maps(h, h)
    coord_img = np.stack([xx, yy], axis=-1).astype(np.float32)       # (h, h, 2)
    cols = _im2col_np(coord_img, KSIZE, stride, pad)                 # (HoWo, 32)
    return jnp.dot(jnp.asarray(cols, jnp.bfloat16),
                   jnp.asarray(w_coord, jnp.bfloat16),
                   preferred_element_type=jnp.float32)


def prepare_fused_operands(layers, nc, imsize):
    """Pack all resident kernel operands: bf16 conv weights, bf16 im2col gather
    matrices, f32 coord-bias maps and the folded final layer."""
    ops = {}

    # layer 0: consumes JAX-side im2col patches of the real image channels
    L0 = layers[0]
    w0 = np.asarray(L0["weight"], np.float32)                        # (Co, nc+2, 4, 4)
    w0_real = np.transpose(w0[:, :nc], (2, 3, 1, 0)).reshape(KSIZE * KSIZE * nc, -1)
    w0_coord = np.transpose(w0[:, nc:], (2, 3, 1, 0)).reshape(KSIZE * KSIZE * 2, -1)
    ops["w0"] = jnp.asarray(w0_real, jnp.bfloat16)
    ops["b0"] = _coord_bias(imsize, L0["stride"], L0["pad"], w0_coord)
    ops["mode0"] = L0["mode"]

    # inner stride-2 layers: in-kernel gather-matrix im2col + per-tap matmuls
    inner = []
    h = imsize // 2
    for L in layers[1:-1]:
        cin = L["cin"]
        S, ho, _ = _gather_matrix_np(h, h, KSIZE, L["stride"], L["pad"])
        w = np.asarray(L["weight"], np.float32)                      # (Co, cin+2, 4, 4)
        w_taps = np.transpose(w[:, :cin], (2, 3, 1, 0)).reshape(KSIZE * KSIZE, cin, -1)
        w_coord = np.transpose(w[:, cin:], (2, 3, 1, 0)).reshape(KSIZE * KSIZE * 2, -1)
        inner.append(dict(
            S=jnp.asarray(S, jnp.bfloat16),
            W=jnp.asarray(w_taps, jnp.bfloat16),
            b=_coord_bias(h, L["stride"], L["pad"], w_coord),
            mode=L["mode"],
            hw_out=ho * ho))
        h = ho
    ops["inner"] = inner

    # final 4x4 / stride-1 / valid conv (Cout=1): consumes the whole 4x4 map,
    # folded into the previous layer's epilogue as multiply + reduce.
    Lf = layers[-1]
    assert h == KSIZE and Lf["stride"] == 1 and Lf["pad"] == 0
    cinf = Lf["cin"]
    wf = np.asarray(Lf["weight"], np.float32)                        # (1, cinf+2, 4, 4)
    wf_map = np.transpose(wf[0, :cinf], (1, 2, 0)).reshape(KSIZE * KSIZE, cinf)
    ops["wf"] = jnp.asarray(wf_map, jnp.bfloat16).astype(jnp.float32)
    xx, yy = _coord_maps(KSIZE, KSIZE)
    wfc = jnp.asarray(wf[0, cinf:], jnp.bfloat16).astype(jnp.float32)
    bias_f = (jnp.sum(jnp.asarray(xx, jnp.bfloat16).astype(jnp.float32) * wfc[0]) +
              jnp.sum(jnp.asarray(yy, jnp.bfloat16).astype(jnp.float32) * wfc[1]))
    ops["bf"] = bias_f.reshape(1, 1).astype(jnp.float32)
    return ops


def _im2col_batched(x, ksize, stride, pad):
    """x: (B, H, W, C) -> (B, Ho*Wo, ksize*ksize*C), column order (kh, kw, c)."""
    B, H, W, C = x.shape
    xp = jnp.pad(x, ((0, 0), (pad, pad), (pad, pad), (0, 0)))
    ho = (H + 2 * pad - ksize) // stride + 1
    wo = (W + 2 * pad - ksize) // stride + 1
    taps = []
    for i in range(ksize):
        for j in range(ksize):
            taps.append(xp[:, i:i + stride * (ho - 1) + 1:stride,
                           j:j + stride * (wo - 1) + 1:stride, :])
    p = jnp.stack(taps, axis=3)                  # (B, Ho, Wo, 16, C)
    return p.reshape(B, ho * wo, ksize * ksize * C)


# ---------------------------------------------------------------------------
# fused Pallas kernel
# ---------------------------------------------------------------------------
def _make_fused_kernel(modes, hw_outs, samples_per_step):
    n_inner = len(hw_outs)

    def norm_act(y, mode):
        if mode == "in_lrelu":
            # one-pass InstanceNorm2d stats (biased variance), f32
            m = jnp.mean(y, axis=0, keepdims=True)
            v = jnp.mean(y * y, axis=0, keepdims=True) - m * m
            y = (y - m) * jax.lax.rsqrt(v + EPS_IN)
        if mode in ("in_lrelu", "lrelu"):
            y = jnp.where(y > 0, y, LRELU_SLOPE * y)
        return y

    def kernel(*refs):
        p0_ref, w0_ref, b0_ref = refs[0], refs[1], refs[2]
        inner_refs = [refs[3 + 3 * i: 6 + 3 * i] for i in range(n_inner)]
        wf_ref = refs[3 + 3 * n_inner]
        bf_ref = refs[4 + 3 * n_inner]
        o_ref = refs[5 + 3 * n_inner]

        outs = []
        for s in range(samples_per_step):
            # layer 0: conv as one bf16 MXU matmul over pre-built im2col patches
            # (coord channels pre-folded into the resident f32 bias map)
            y = jnp.dot(p0_ref[s], w0_ref[...],
                        preferred_element_type=jnp.float32) + b0_ref[...]
            y = norm_act(y, modes[0])

            # inner stride-2 CoordConv layers, entirely in VMEM
            for li in range(n_inner):
                s_ref, w_ref, b_ref = inner_refs[li]
                hw = hw_outs[li]
                yb = y.astype(jnp.bfloat16)
                # im2col via a constant 0/1 gather matrix on the MXU; rows are
                # ordered (tap, out_pos); all-zero rows realise the conv padding
                p = jnp.dot(s_ref[...], yb,
                            preferred_element_type=jnp.float32).astype(jnp.bfloat16)
                acc = b_ref[...]                       # coord-channel bias, f32
                for t in range(KSIZE * KSIZE):
                    acc = acc + jnp.dot(p[t * hw:(t + 1) * hw, :], w_ref[t],
                                        preferred_element_type=jnp.float32)
                y = norm_act(acc, modes[1 + li])

            # final 4x4 valid conv (Cout=1) folded: multiply + full reduce in f32
            r = jnp.sum(y * wf_ref[...], axis=1, keepdims=True)      # (16, 1)
            outs.append(jnp.sum(r, axis=0, keepdims=True))           # (1, 1)

        res = outs[0] if samples_per_step == 1 else jnp.concatenate(outs, axis=0)
        o_ref[...] = (res + bf_ref[...]).reshape(samples_per_step, 1, 1)

    return kernel


def discriminator_forward(inp, layers, ops, nc=3, imsize=32, samples_per_step=1):
    """Fused forward: the whole conv stack runs in a single pallas_call."""
    x = inp[:, :nc].reshape(-1, imsize, imsize, nc).astype(jnp.float32)
    B = x.shape[0]
    bb = samples_per_step
    assert B % bb == 0
    # TODO(synk): hflip branch (torch.randint random mask) omitted; hflip=False default.

    p0 = _im2col_batched(x, KSIZE, layers[0]["stride"],
                         layers[0]["pad"]).astype(jnp.bfloat16)
    hw0, k0 = p0.shape[1], p0.shape[2]

    inner = ops["inner"]
    modes = [ops["mode0"]] + [L["mode"] for L in inner]
    hw_outs = [L["hw_out"] for L in inner]
    kernel = _make_fused_kernel(modes, hw_outs, bb)

    in_specs = [
        pl.BlockSpec((bb, hw0, k0), lambda b: (b, 0, 0)),    # per-step patch slab
        pl.BlockSpec(ops["w0"].shape, lambda b: (0, 0)),     # resident weights/consts
        pl.BlockSpec(ops["b0"].shape, lambda b: (0, 0)),
    ]
    operands = [p0, ops["w0"], ops["b0"]]
    for L in inner:
        in_specs += [
            pl.BlockSpec(L["S"].shape, lambda b: (0, 0)),
            pl.BlockSpec(L["W"].shape, lambda b: (0, 0, 0)),
            pl.BlockSpec(L["b"].shape, lambda b: (0, 0)),
        ]
        operands += [L["S"], L["W"], L["b"]]
    in_specs += [
        pl.BlockSpec(ops["wf"].shape, lambda b: (0, 0)),
        pl.BlockSpec(ops["bf"].shape, lambda b: (0, 0)),
    ]
    operands += [ops["wf"], ops["bf"]]

    out = pl.pallas_call(
        kernel,
        out_shape=jax.ShapeDtypeStruct((B, 1, 1), jnp.float32),
        grid=(B // bb,),
        in_specs=in_specs,
        out_specs=pl.BlockSpec((bb, 1, 1), lambda b: (b, 0, 0)),
        compiler_params=pltpu.CompilerParams(
            dimension_semantics=("parallel",)),   # batch axis -> both TCs on v7x
    )(*operands)
    return out.reshape(B, 1, 1, 1)


# ---------------------------------------------------------------------------
# pure-JAX reference (XLA convs) for the numerical self-check
# ---------------------------------------------------------------------------
def _reference_forward(x_nhwc, layers):
    y = x_nhwc
    for L in layers:
        B, H, W, _ = y.shape
        xx_np, yy_np = _coord_maps(H, W)
        xx = jnp.broadcast_to(jnp.asarray(xx_np)[None, :, :, None], (B, H, W, 1))
        yy = jnp.broadcast_to(jnp.asarray(yy_np)[None, :, :, None], (B, H, W, 1))
        yc = jnp.concatenate([y, xx, yy], axis=-1)
        w = jnp.transpose(L["weight"], (2, 3, 1, 0))     # (kh, kw, cin+2, cout)
        out = jax.lax.conv_general_dilated(
            yc.astype(jnp.bfloat16), w.astype(jnp.bfloat16),
            window_strides=(L["stride"], L["stride"]),
            padding=[(L["pad"], L["pad"])] * 2,
            dimension_numbers=("NHWC", "HWIO", "NHWC"),
            preferred_element_type=jnp.float32)
        if L["mode"] == "in_lrelu":
            m = jnp.mean(out, axis=(1, 2), keepdims=True)
            v = jnp.mean((out - m) ** 2, axis=(1, 2), keepdims=True)
            out = (out - m) * jax.lax.rsqrt(v + EPS_IN)
        if L["mode"] in ("in_lrelu", "lrelu"):
            out = jnp.where(out > 0, out, LRELU_SLOPE * out)
        y = out
    return jnp.transpose(y, (0, 3, 1, 2))                # NCHW (B, 1, 1, 1)


if __name__ == "__main__":
    key = jax.random.PRNGKey(0)
    nc, ndf, imsize, B = 3, 8, 32, 2
    pkey, xkey = jax.random.split(key)
    layers = make_discriminator_params(pkey, nc=nc, ndf=ndf, imsize=imsize)
    ops = prepare_fused_operands(layers, nc, imsize)

    # module forward expects (B*imsize*imsize, C >= nc); extra channel exercises input[:, :nc]
    inp = jax.random.normal(xkey, (B * imsize * imsize, nc + 1), dtype=jnp.float32)

    fwd = jax.jit(lambda t: discriminator_forward(t, layers, ops, nc=nc, imsize=imsize))
    out = jax.block_until_ready(fwd(inp))
    assert out.shape == (B, 1, 1, 1), out.shape
    assert bool(jnp.all(jnp.isfinite(out)))

    # numerical cross-check against a pure-JAX/XLA implementation of the same forward
    x = inp[:, :nc].reshape(-1, imsize, imsize, nc).astype(jnp.float32)
    ref = jax.block_until_ready(_reference_forward(x, layers))
    if not np.allclose(np.asarray(out), np.asarray(ref), atol=5e-2, rtol=5e-2):
        raise AssertionError(
            f"mismatch: pallas={np.asarray(out).ravel()} ref={np.asarray(ref).ravel()}")
    print("KERNEL_OK")
</pallas_src>

<mosaic_0001>
module attributes {stable_mosaic.version = 11 : i64} {
  func.func @kernel(%arg0: i32, %arg1: memref<1x256x48xbf16, #tpu.memory_space<vmem>>, %arg2: memref<48x16xbf16, #tpu.memory_space<vmem>>, %arg3: memref<256x16xf32, #tpu.memory_space<vmem>>, %arg4: memref<1024x256xbf16, #tpu.memory_space<vmem>>, %arg5: memref<16x16x32xbf16, #tpu.memory_space<vmem>>, %arg6: memref<64x32xf32, #tpu.memory_space<vmem>>, %arg7: memref<256x64xbf16, #tpu.memory_space<vmem>>, %arg8: memref<16x32x64xbf16, #tpu.memory_space<vmem>>, %arg9: memref<16x64xf32, #tpu.memory_space<vmem>>, %arg10: memref<16x64xf32, #tpu.memory_space<vmem>>, %arg11: memref<1x1xf32, #tpu.memory_space<vmem>>, %arg12: memref<1x1x1xf32, #tpu.memory_space<vmem>>) attributes {dimension_semantics = [#tpu.dimension_semantics<parallel>], iteration_bounds = array<i64: 2>, scalar_prefetch = 0 : i64, scratch_operands = 0 : i64, tpu.core_type = #tpu.core_type<tc>, window_params = [{transform_indices = @transform_0, window_bounds = array<i64: 1, 256, 48>}, {pipeline_mode = #tpu.pipeline_mode<synchronous>, transform_indices = @transform_1, window_bounds = array<i64: 48, 16>}, {pipeline_mode = #tpu.pipeline_mode<synchronous>, transform_indices = @transform_2, window_bounds = array<i64: 256, 16>}, {pipeline_mode = #tpu.pipeline_mode<synchronous>, transform_indices = @transform_3, window_bounds = array<i64: 1024, 256>}, {pipeline_mode = #tpu.pipeline_mode<synchronous>, transform_indices = @transform_4, window_bounds = array<i64: 16, 16, 32>}, {pipeline_mode = #tpu.pipeline_mode<synchronous>, transform_indices = @transform_5, window_bounds = array<i64: 64, 32>}, {pipeline_mode = #tpu.pipeline_mode<synchronous>, transform_indices = @transform_6, window_bounds = array<i64: 256, 64>}, {pipeline_mode = #tpu.pipeline_mode<synchronous>, transform_indices = @transform_7, window_bounds = array<i64: 16, 32, 64>}, {pipeline_mode = #tpu.pipeline_mode<synchronous>, transform_indices = @transform_8, window_bounds = array<i64: 16, 64>}, {pipeline_mode = #tpu.pipeline_mode<synchronous>, transform_indices = @transform_9, window_bounds = array<i64: 16, 64>}, {pipeline_mode = #tpu.pipeline_mode<synchronous>, transform_indices = @transform_10, window_bounds = array<i64: 1, 1>}, {transform_indices = @transform_11, window_bounds = array<i64: 1, 1, 1>}]} {
    %c0 = arith.constant 0 : index
    %c0_0 = arith.constant 0 : index
    %c0_1 = arith.constant 0 : index
    %0 = vector.load %arg1[%c0, %c0_0, %c0_1] : memref<1x256x48xbf16, #tpu.memory_space<vmem>>, vector<1x256x48xbf16>
    %1 = vector.shape_cast %0 : vector<1x256x48xbf16> to vector<256x48xbf16>
    %c0_2 = arith.constant 0 : index
    %c0_3 = arith.constant 0 : index
    %2 = vector.load %arg2[%c0_2, %c0_3] : memref<48x16xbf16, #tpu.memory_space<vmem>>, vector<48x16xbf16>
    %cst = arith.constant dense<0.000000e+00> : vector<256x16xf32>
    %3 = tpu.matmul %1, %2, %cst {dimension_numbers = #tpu.dot_dimension_numbers<[1], [0], [0], [1], [0, 0, 1, 1], [], []>} : vector<256x48xbf16>, vector<48x16xbf16>, vector<256x16xf32> -> vector<256x16xf32>
    %c0_4 = arith.constant 0 : index
    %c0_5 = arith.constant 0 : index
    %4 = vector.load %arg3[%c0_4, %c0_5] : memref<256x16xf32, #tpu.memory_space<vmem>>, vector<256x16xf32>
    %5 = arith.addf %3, %4 : vector<256x16xf32>
    %cst_6 = arith.constant dense<0.000000e+00> : vector<16xf32>
    %6 = vector.multi_reduction <add>, %5, %cst_6 [0] : vector<256x16xf32> to vector<16xf32>
    %7 = vector.shape_cast %6 : vector<16xf32> to vector<1x16xf32>
    %cst_7 = arith.constant 2.560000e+02 : f32
    %8 = vector.broadcast %cst_7 : f32 to vector<1x16xf32>
    %9 = arith.divf %7, %8 : vector<1x16xf32>
    %10 = arith.mulf %5, %5 : vector<256x16xf32>
    %cst_8 = arith.constant dense<0.000000e+00> : vector<16xf32>
    %11 = vector.multi_reduction <add>, %10, %cst_8 [0] : vector<256x16xf32> to vector<16xf32>
    %12 = vector.shape_cast %11 : vector<16xf32> to vector<1x16xf32>
    %cst_9 = arith.constant 2.560000e+02 : f32
    %13 = vector.broadcast %cst_9 : f32 to vector<1x16xf32>
    %14 = arith.divf %12, %13 : vector<1x16xf32>
    %15 = arith.mulf %9, %9 : vector<1x16xf32>
    %16 = arith.subf %14, %15 : vector<1x16xf32>
    %17 = vector.broadcast %9 : vector<1x16xf32> to vector<256x16xf32>
    %18 = arith.subf %5, %17 : vector<256x16xf32>
    %cst_10 = arith.constant 9.99999974E-6 : f32
    %19 = vector.broadcast %cst_10 : f32 to vector<1x16xf32>
    %20 = arith.addf %16, %19 : vector<1x16xf32>
    %21 = math.rsqrt %20 : vector<1x16xf32>
    %22 = vector.broadcast %21 : vector<1x16xf32> to vector<256x16xf32>
    %23 = arith.mulf %18, %22 : vector<256x16xf32>
    %cst_11 = arith.constant 0.000000e+00 : f32
    %24 = vector.broadcast %cst_11 : f32 to vector<256x16xf32>
    %25 = arith.cmpf ogt, %23, %24 : vector<256x16xf32>
    %cst_12 = arith.constant 2.000000e-01 : f32
    %26 = vector.broadcast %cst_12 : f32 to vector<256x16xf32>
    %27 = arith.mulf %26, %23 : vector<256x16xf32>
    %28 = arith.select %25, %23, %27 : vector<256x16xi1>, vector<256x16xf32>
    %29 = arith.truncf %28 : vector<256x16xf32> to vector<256x16xbf16>
    %c0_13 = arith.constant 0 : index
    %c0_14 = arith.constant 0 : index
    %30 = vector.load %arg4[%c0_13, %c0_14] : memref<1024x256xbf16, #tpu.memory_space<vmem>>, vector<1024x256xbf16>
    %cst_15 = arith.constant dense<0.000000e+00> : vector<1024x16xf32>
    %31 = tpu.matmul %30, %29, %cst_15 {dimension_numbers = #tpu.dot_dimension_numbers<[1], [0], [0], [1], [0, 0, 1, 1], [], []>} : vector<1024x256xbf16>, vector<256x16xbf16>, vector<1024x16xf32> -> vector<1024x16xf32>
    %32 = arith.truncf %31 : vector<1024x16xf32> to vector<1024x16xbf16>
    %c0_16 = arith.constant 0 : index
    %c0_17 = arith.constant 0 : index
    %33 = vector.load %arg6[%c0_16, %c0_17] : memref<64x32xf32, #tpu.memory_space<vmem>>, vector<64x32xf32>
    %34 = vector.extract_strided_slice %32 {offsets = [0, 0], sizes = [64, 16], strides = [1, 1]} : vector<1024x16xbf16> to vector<64x16xbf16>
    %c0_18 = arith.constant 0 : index
    %c0_19 = arith.constant 0 : index
    %c0_20 = arith.constant 0 : index
    %35 = vector.load %arg5[%c0_18, %c0_19, %c0_20] : memref<16x16x32xbf16, #tpu.memory_space<vmem>>, vector<1x16x32xbf16>
    %36 = vector.shape_cast %35 : vector<1x16x32xbf16> to vector<16x32xbf16>
    %cst_21 = arith.constant dense<0.000000e+00> : vector<64x32xf32>
    %37 = tpu.matmul %34, %36, %cst_21 {dimension_numbers = #tpu.dot_dimension_numbers<[1], [0], [0], [1], [0, 0, 1, 1], [], []>} : vector<64x16xbf16>, vector<16x32xbf16>, vector<64x32xf32> -> vector<64x32xf32>
    %38 = arith.addf %33, %37 : vector<64x32xf32>
    %39 = vector.extract_strided_slice %32 {offsets = [64, 0], sizes = [64, 16], strides = [1, 1]} : vector<1024x16xbf16> to vector<64x16xbf16>
    %c1 = arith.constant 1 : index
    %c0_22 = arith.constant 0 : index
    %c0_23 = arith.constant 0 : index
    %40 = vector.load %arg5[%c1, %c0_22, %c0_23] : memref<16x16x32xbf16, #tpu.memory_space<vmem>>, vector<1x16x32xbf16>
    %41 = vector.shape_cast %40 : vector<1x16x32xbf16> to vector<16x32xbf16>
    %cst_24 = arith.constant dense<0.000000e+00> : vector<64x32xf32>
    %42 = tpu.matmul %39, %41, %cst_24 {dimension_numbers = #tpu.dot_dimension_numbers<[1], [0], [0], [1], [0, 0, 1, 1], [], []>} : vector<64x16xbf16>, vector<16x32xbf16>, vector<64x32xf32> -> vector<64x32xf32>
    %43 = arith.addf %38, %42 : vector<64x32xf32>
    %44 = vector.extract_strided_slice %32 {offsets = [128, 0], sizes = [64, 16], strides = [1, 1]} : vector<1024x16xbf16> to vector<64x16xbf16>
    %c2 = arith.constant 2 : index
    %c0_25 = arith.constant 0 : index
    %c0_26 = arith.constant 0 : index
    %45 = vector.load %arg5[%c2, %c0_25, %c0_26] : memref<16x16x32xbf16, #tpu.memory_space<vmem>>, vector<1x16x32xbf16>
    %46 = vector.shape_cast %45 : vector<1x16x32xbf16> to vector<16x32xbf16>
    %cst_27 = arith.constant dense<0.000000e+00> : vector<64x32xf32>
    %47 = tpu.matmul %44, %46, %cst_27 {dimension_numbers = #tpu.dot_dimension_numbers<[1], [0], [0], [1], [0, 0, 1, 1], [], []>} : vector<64x16xbf16>, vector<16x32xbf16>, vector<64x32xf32> -> vector<64x32xf32>
    %48 = arith.addf %43, %47 : vector<64x32xf32>
    %49 = vector.extract_strided_slice %32 {offsets = [192, 0], sizes = [64, 16], strides = [1, 1]} : vector<1024x16xbf16> to vector<64x16xbf16>
    %c3 = arith.constant 3 : index
    %c0_28 = arith.constant 0 : index
    %c0_29 = arith.constant 0 : index
    %50 = vector.load %arg5[%c3, %c0_28, %c0_29] : memref<16x16x32xbf16, #tpu.memory_space<vmem>>, vector<1x16x32xbf16>
    %51 = vector.shape_cast %50 : vector<1x16x32xbf16> to vector<16x32xbf16>
    %cst_30 = arith.constant dense<0.000000e+00> : vector<64x32xf32>
    %52 = tpu.matmul %49, %51, %cst_30 {dimension_numbers = #tpu.dot_dimension_numbers<[1], [0], [0], [1], [0, 0, 1, 1], [], []>} : vector<64x16xbf16>, vector<16x32xbf16>, vector<64x32xf32> -> vector<64x32xf32>
    %53 = arith.addf %48, %52 : vector<64x32xf32>
    %54 = vector.extract_strided_slice %32 {offsets = [256, 0], sizes = [64, 16], strides = [1, 1]} : vector<1024x16xbf16> to vector<64x16xbf16>
    %c4 = arith.constant 4 : index
    %c0_31 = arith.constant 0 : index
    %c0_32 = arith.constant 0 : index
    %55 = vector.load %arg5[%c4, %c0_31, %c0_32] : memref<16x16x32xbf16, #tpu.memory_space<vmem>>, vector<1x16x32xbf16>
    %56 = vector.shape_cast %55 : vector<1x16x32xbf16> to vector<16x32xbf16>
    %cst_33 = arith.constant dense<0.000000e+00> : vector<64x32xf32>
    %57 = tpu.matmul %54, %56, %cst_33 {dimension_numbers = #tpu.dot_dimension_numbers<[1], [0], [0], [1], [0, 0, 1, 1], [], []>} : vector<64x16xbf16>, vector<16x32xbf16>, vector<64x32xf32> -> vector<64x32xf32>
    %58 = arith.addf %53, %57 : vector<64x32xf32>
    %59 = vector.extract_strided_slice %32 {offsets = [320, 0], sizes = [64, 16], strides = [1, 1]} : vector<1024x16xbf16> to vector<64x16xbf16>
    %c5 = arith.constant 5 : index
    %c0_34 = arith.constant 0 : index
    %c0_35 = arith.constant 0 : index
    %60 = vector.load %arg5[%c5, %c0_34, %c0_35] : memref<16x16x32xbf16, #tpu.memory_space<vmem>>, vector<1x16x32xbf16>
    %61 = vector.shape_cast %60 : vector<1x16x32xbf16> to vector<16x32xbf16>
    %cst_36 = arith.constant dense<0.000000e+00> : vector<64x32xf32>
    %62 = tpu.matmul %59, %61, %cst_36 {dimension_numbers = #tpu.dot_dimension_numbers<[1], [0], [0], [1], [0, 0, 1, 1], [], []>} : vector<64x16xbf16>, vector<16x32xbf16>, vector<64x32xf32> -> vector<64x32xf32>
    %63 = arith.addf %58, %62 : vector<64x32xf32>
    %64 = vector.extract_strided_slice %32 {offsets = [384, 0], sizes = [64, 16], strides = [1, 1]} : vector<1024x16xbf16> to vector<64x16xbf16>
    %c6 = arith.constant 6 : index
    %c0_37 = arith.constant 0 : index
    %c0_38 = arith.constant 0 : index
    %65 = vector.load %arg5[%c6, %c0_37, %c0_38] : memref<16x16x32xbf16, #tpu.memory_space<vmem>>, vector<1x16x32xbf16>
    %66 = vector.shape_cast %65 : vector<1x16x32xbf16> to vector<16x32xbf16>
    %cst_39 = arith.constant dense<0.000000e+00> : vector<64x32xf32>
    %67 = tpu.matmul %64, %66, %cst_39 {dimension_numbers = #tpu.dot_dimension_numbers<[1], [0], [0], [1], [0, 0, 1, 1], [], []>} : vector<64x16xbf16>, vector<16x32xbf16>, vector<64x32xf32> -> vector<64x32xf32>
    %68 = arith.addf %63, %67 : vector<64x32xf32>
    %69 = vector.extract_strided_slice %32 {offsets = [448, 0], sizes = [64, 16], strides = [1, 1]} : vector<1024x16xbf16> to vector<64x16xbf16>
    %c7 = arith.constant 7 : index
    %c0_40 = arith.constant 0 : index
    %c0_41 = arith.constant 0 : index
    %70 = vector.load %arg5[%c7, %c0_40, %c0_41] : memref<16x16x32xbf16, #tpu.memory_space<vmem>>, vector<1x16x32xbf16>
    %71 = vector.shape_cast %70 : vector<1x16x32xbf16> to vector<16x32xbf16>
    %cst_42 = arith.constant dense<0.000000e+00> : vector<64x32xf32>
    %72 = tpu.matmul %69, %71, %cst_42 {dimension_numbers = #tpu.dot_dimension_numbers<[1], [0], [0], [1], [0, 0, 1, 1], [], []>} : vector<64x16xbf16>, vector<16x32xbf16>, vector<64x32xf32> -> vector<64x32xf32>
    %73 = arith.addf %68, %72 : vector<64x32xf32>
    %74 = vector.extract_strided_slice %32 {offsets = [512, 0], sizes = [64, 16], strides = [1, 1]} : vector<1024x16xbf16> to vector<64x16xbf16>
    %c8 = arith.constant 8 : index
    %c0_43 = arith.constant 0 : index
    %c0_44 = arith.constant 0 : index
    %75 = vector.load %arg5[%c8, %c0_43, %c0_44] : memref<16x16x32xbf16, #tpu.memory_space<vmem>>, vector<1x16x32xbf16>
    %76 = vector.shape_cast %75 : vector<1x16x32xbf16> to vector<16x32xbf16>
    %cst_45 = arith.constant dense<0.000000e+00> : vector<64x32xf32>
    %77 = tpu.matmul %74, %76, %cst_45 {dimension_numbers = #tpu.dot_dimension_numbers<[1], [0], [0], [1], [0, 0, 1, 1], [], []>} : vector<64x16xbf16>, vector<16x32xbf16>, vector<64x32xf32> -> vector<64x32xf32>
    %78 = arith.addf %73, %77 : vector<64x32xf32>
    %79 = vector.extract_strided_slice %32 {offsets = [576, 0], sizes = [64, 16], strides = [1, 1]} : vector<1024x16xbf16> to vector<64x16xbf16>
    %c9 = arith.constant 9 : index
    %c0_46 = arith.constant 0 : index
    %c0_47 = arith.constant 0 : index
    %80 = vector.load %arg5[%c9, %c0_46, %c0_47] : memref<16x16x32xbf16, #tpu.memory_space<vmem>>, vector<1x16x32xbf16>
    %81 = vector.shape_cast %80 : vector<1x16x32xbf16> to vector<16x32xbf16>
    %cst_48 = arith.constant dense<0.000000e+00> : vector<64x32xf32>
    %82 = tpu.matmul %79, %81, %cst_48 {dimension_numbers = #tpu.dot_dimension_numbers<[1], [0], [0], [1], [0, 0, 1, 1], [], []>} : vector<64x16xbf16>, vector<16x32xbf16>, vector<64x32xf32> -> vector<64x32xf32>
    %83 = arith.addf %78, %82 : vector<64x32xf32>
    %84 = vector.extract_strided_slice %32 {offsets = [640, 0], sizes = [64, 16], strides = [1, 1]} : vector<1024x16xbf16> to vector<64x16xbf16>
    %c10 = arith.constant 10 : index
    %c0_49 = arith.constant 0 : index
    %c0_50 = arith.constant 0 : index
    %85 = vector.load %arg5[%c10, %c0_49, %c0_50] : memref<16x16x32xbf16, #tpu.memory_space<vmem>>, vector<1x16x32xbf16>
    %86 = vector.shape_cast %85 : vector<1x16x32xbf16> to vector<16x32xbf16>
    %cst_51 = arith.constant dense<0.000000e+00> : vector<64x32xf32>
    %87 = tpu.matmul %84, %86, %cst_51 {dimension_numbers = #tpu.dot_dimension_numbers<[1], [0], [0], [1], [0, 0, 1, 1], [], []>} : vector<64x16xbf16>, vector<16x32xbf16>, vector<64x32xf32> -> vector<64x32xf32>
    %88 = arith.addf %83, %87 : vector<64x32xf32>
    %89 = vector.extract_strided_slice %32 {offsets = [704, 0], sizes = [64, 16], strides = [1, 1]} : vector<1024x16xbf16> to vector<64x16xbf16>
    %c11 = arith.constant 11 : index
    %c0_52 = arith.constant 0 : index
    %c0_53 = arith.constant 0 : index
    %90 = vector.load %arg5[%c11, %c0_52, %c0_53] : memref<16x16x32xbf16, #tpu.memory_space<vmem>>, vector<1x16x32xbf16>
    %91 = vector.shape_cast %90 : vector<1x16x32xbf16> to vector<16x32xbf16>
    %cst_54 = arith.constant dense<0.000000e+00> : vector<64x32xf32>
    %92 = tpu.matmul %89, %91, %cst_54 {dimension_numbers = #tpu.dot_dimension_numbers<[1], [0], [0], [1], [0, 0, 1, 1], [], []>} : vector<64x16xbf16>, vector<16x32xbf16>, vector<64x32xf32> -> vector<64x32xf32>
    %93 = arith.addf %88, %92 : vector<64x32xf32>
    %94 = vector.extract_strided_slice %32 {offsets = [768, 0], sizes = [64, 16], strides = [1, 1]} : vector<1024x16xbf16> to vector<64x16xbf16>
    %c12 = arith.constant 12 : index
    %c0_55 = arith.constant 0 : index
    %c0_56 = arith.constant 0 : index
    %95 = vector.load %arg5[%c12, %c0_55, %c0_56] : memref<16x16x32xbf16, #tpu.memory_space<vmem>>, vector<1x16x32xbf16>
    %96 = vector.shape_cast %95 : vector<1x16x32xbf16> to vector<16x32xbf16>
    %cst_57 = arith.constant dense<0.000000e+00> : vector<64x32xf32>
    %97 = tpu.matmul %94, %96, %cst_57 {dimension_numbers = #tpu.dot_dimension_numbers<[1], [0], [0], [1], [0, 0, 1, 1], [], []>} : vector<64x16xbf16>, vector<16x32xbf16>, vector<64x32xf32> -> vector<64x32xf32>
    %98 = arith.addf %93, %97 : vector<64x32xf32>
    %99 = vector.extract_strided_slice %32 {offsets = [832, 0], sizes = [64, 16], strides = [1, 1]} : vector<1024x16xbf16> to vector<64x16xbf16>
    %c13 = arith.constant 13 : index
    %c0_58 = arith.constant 0 : index
    %c0_59 = arith.constant 0 : index
    %100 = vector.load %arg5[%c13, %c0_58, %c0_59] : memref<16x16x32xbf16, #tpu.memory_space<vmem>>, vector<1x16x32xbf16>
    %101 = vector.shape_cast %100 : vector<1x16x32xbf16> to vector<16x32xbf16>
    %cst_60 = arith.constant dense<0.000000e+00> : vector<64x32xf32>
    %102 = tpu.matmul %99, %101, %cst_60 {dimension_numbers = #tpu.dot_dimension_numbers<[1], [0], [0], [1], [0, 0, 1, 1], [], []>} : vector<64x16xbf16>, vector<16x32xbf16>, vector<64x32xf32> -> vector<64x32xf32>
    %103 = arith.addf %98, %102 : vector<64x32xf32>
    %104 = vector.extract_strided_slice %32 {offsets = [896, 0], sizes = [64, 16], strides = [1, 1]} : vector<1024x16xbf16> to vector<64x16xbf16>
    %c14 = arith.constant 14 : index
    %c0_61 = arith.constant 0 : index
    %c0_62 = arith.constant 0 : index
    %105 = vector.load %arg5[%c14, %c0_61, %c0_62] : memref<16x16x32xbf16, #tpu.memory_space<vmem>>, vector<1x16x32xbf16>
    %106 = vector.shape_cast %105 : vector<1x16x32xbf16> to vector<16x32xbf16>
    %cst_63 = arith.constant dense<0.000000e+00> : vector<64x32xf32>
    %107 = tpu.matmul %104, %106, %cst_63 {dimension_numbers = #tpu.dot_dimension_numbers<[1], [0], [0], [1], [0, 0, 1, 1], [], []>} : vector<64x16xbf16>, vector<16x32xbf16>, vector<64x32xf32> -> vector<64x32xf32>
    %108 = arith.addf %103, %107 : vector<64x32xf32>
    %109 = vector.extract_strided_slice %32 {offsets = [960, 0], sizes = [64, 16], strides = [1, 1]} : vector<1024x16xbf16> to vector<64x16xbf16>
    %c15 = arith.constant 15 : index
    %c0_64 = arith.constant 0 : index
    %c0_65 = arith.constant 0 : index
    %110 = vector.load %arg5[%c15, %c0_64, %c0_65] : memref<16x16x32xbf16, #tpu.memory_space<vmem>>, vector<1x16x32xbf16>
    %111 = vector.shape_cast %110 : vector<1x16x32xbf16> to vector<16x32xbf16>
    %cst_66 = arith.constant dense<0.000000e+00> : vector<64x32xf32>
    %112 = tpu.matmul %109, %111, %cst_66 {dimension_numbers = #tpu.dot_dimension_numbers<[1], [0], [0], [1], [0, 0, 1, 1], [], []>} : vector<64x16xbf16>, vector<16x32xbf16>, vector<64x32xf32> -> vector<64x32xf32>
    %113 = arith.addf %108, %112 : vector<64x32xf32>
    %cst_67 = arith.constant dense<0.000000e+00> : vector<32xf32>
    %114 = vector.multi_reduction <add>, %113, %cst_67 [0] : vector<64x32xf32> to vector<32xf32>
    %115 = vector.shape_cast %114 : vector<32xf32> to vector<1x32xf32>
    %cst_68 = arith.constant 6.400000e+01 : f32
    %116 = vector.broadcast %cst_68 : f32 to vector<1x32xf32>
    %117 = arith.divf %115, %116 : vector<1x32xf32>
    %118 = arith.mulf %113, %113 : vector<64x32xf32>
    %cst_69 = arith.constant dense<0.000000e+00> : vector<32xf32>
    %119 = vector.multi_reduction <add>, %118, %cst_69 [0] : vector<64x32xf32> to vector<32xf32>
    %120 = vector.shape_cast %119 : vector<32xf32> to vector<1x32xf32>
    %cst_70 = arith.constant 6.400000e+01 : f32
    %121 = vector.broadcast %cst_70 : f32 to vector<1x32xf32>
    %122 = arith.divf %120, %121 : vector<1x32xf32>
    %123 = arith.mulf %117, %117 : vector<1x32xf32>
    %124 = arith.subf %122, %123 : vector<1x32xf32>
    %125 = vector.broadcast %117 : vector<1x32xf32> to vector<64x32xf32>
    %126 = arith.subf %113, %125 : vector<64x32xf32>
    %cst_71 = arith.constant 9.99999974E-6 : f32
    %127 = vector.broadcast %cst_71 : f32 to vector<1x32xf32>
    %128 = arith.addf %124, %127 : vector<1x32xf32>
    %129 = math.rsqrt %128 : vector<1x32xf32>
    %130 = vector.broadcast %129 : vector<1x32xf32> to vector<64x32xf32>
    %131 = arith.mulf %126, %130 : vector<64x32xf32>
    %cst_72 = arith.constant 0.000000e+00 : f32
    %132 = vector.broadcast %cst_72 : f32 to vector<64x32xf32>
    %133 = arith.cmpf ogt, %131, %132 : vector<64x32xf32>
    %cst_73 = arith.constant 2.000000e-01 : f32
    %134 = vector.broadcast %cst_73 : f32 to vector<64x32xf32>
    %135 = arith.mulf %134, %131 : vector<64x32xf32>
    %136 = arith.select %133, %131, %135 : vector<64x32xi1>, vector<64x32xf32>
    %137 = arith.truncf %136 : vector<64x32xf32> to vector<64x32xbf16>
    %c0_74 = arith.constant 0 : index
    %c0_75 = arith.constant 0 : index
    %138 = vector.load %arg7[%c0_74, %c0_75] : memref<256x64xbf16, #tpu.memory_space<vmem>>, vector<256x64xbf16>
    %cst_76 = arith.constant dense<0.000000e+00> : vector<256x32xf32>
    %139 = tpu.matmul %138, %137, %cst_76 {dimension_numbers = #tpu.dot_dimension_numbers<[1], [0], [0], [1], [0, 0, 1, 1], [], []>} : vector<256x64xbf16>, vector<64x32xbf16>, vector<256x32xf32> -> vector<256x32xf32>
    %140 = arith.truncf %139 : vector<256x32xf32> to vector<256x32xbf16>
    %c0_77 = arith.constant 0 : index
    %c0_78 = arith.constant 0 : index
    %141 = vector.load %arg9[%c0_77, %c0_78] : memref<16x64xf32, #tpu.memory_space<vmem>>, vector<16x64xf32>
    %142 = vector.extract_strided_slice %140 {offsets = [0, 0], sizes = [16, 32], strides = [1, 1]} : vector<256x32xbf16> to vector<16x32xbf16>
    %c0_79 = arith.constant 0 : index
    %c0_80 = arith.constant 0 : index
    %c0_81 = arith.constant 0 : index
    %143 = vector.load %arg8[%c0_79, %c0_80, %c0_81] : memref<16x32x64xbf16, #tpu.memory_space<vmem>>, vector<1x32x64xbf16>
    %144 = vector.shape_cast %143 : vector<1x32x64xbf16> to vector<32x64xbf16>
    %cst_82 = arith.constant dense<0.000000e+00> : vector<16x64xf32>
    %145 = tpu.matmul %142, %144, %cst_82 {dimension_numbers = #tpu.dot_dimension_numbers<[1], [0], [0], [1], [0, 0, 1, 1], [], []>} : vector<16x32xbf16>, vector<32x64xbf16>, vector<16x64xf32> -> vector<16x64xf32>
    %146 = arith.addf %141, %145 : vector<16x64xf32>
    %147 = vector.extract_strided_slice %140 {offsets = [16, 0], sizes = [16, 32], strides = [1, 1]} : vector<256x32xbf16> to vector<16x32xbf16>
    %c1_83 = arith.constant 1 : index
    %c0_84 = arith.constant 0 : index
    %c0_85 = arith.constant 0 : index
    %148 = vector.load %arg8[%c1_83, %c0_84, %c0_85] : memref<16x32x64xbf16, #tpu.memory_space<vmem>>, vector<1x32x64xbf16>
    %149 = vector.shape_cast %148 : vector<1x32x64xbf16> to vector<32x64xbf16>
    %cst_86 = arith.constant dense<0.000000e+00> : vector<16x64xf32>
    %150 = tpu.matmul %147, %149, %cst_86 {dimension_numbers = #tpu.dot_dimension_numbers<[1], [0], [0], [1], [0, 0, 1, 1], [], []>} : vector<16x32xbf16>, vector<32x64xbf16>, vector<16x64xf32> -> vector<16x64xf32>
    %151 = arith.addf %146, %150 : vector<16x64xf32>
    %152 = vector.extract_strided_slice %140 {offsets = [32, 0], sizes = [16, 32], strides = [1, 1]} : vector<256x32xbf16> to vector<16x32xbf16>
    %c2_87 = arith.constant 2 : index
    %c0_88 = arith.constant 0 : index
    %c0_89 = arith.constant 0 : index
    %153 = vector.load %arg8[%c2_87, %c0_88, %c0_89] : memref<16x32x64xbf16, #tpu.memory_space<vmem>>, vector<1x32x64xbf16>
    %154 = vector.shape_cast %153 : vector<1x32x64xbf16> to vector<32x64xbf16>
    %cst_90 = arith.constant dense<0.000000e+00> : vector<16x64xf32>
    %155 = tpu.matmul %152, %154, %cst_90 {dimension_numbers = #tpu.dot_dimension_numbers<[1], [0], [0], [1], [0, 0, 1, 1], [], []>} : vector<16x32xbf16>, vector<32x64xbf16>, vector<16x64xf32> -> vector<16x64xf32>
    %156 = arith.addf %151, %155 : vector<16x64xf32>
    %157 = vector.extract_strided_slice %140 {offsets = [48, 0], sizes = [16, 32], strides = [1, 1]} : vector<256x32xbf16> to vector<16x32xbf16>
    %c3_91 = arith.constant 3 : index
    %c0_92 = arith.constant 0 : index
    %c0_93 = arith.constant 0 : index
    %158 = vector.load %arg8[%c3_91, %c0_92, %c0_93] : memref<16x32x64xbf16, #tpu.memory_space<vmem>>, vector<1x32x64xbf16>
    %159 = vector.shape_cast %158 : vector<1x32x64xbf16> to vector<32x64xbf16>
    %cst_94 = arith.constant dense<0.000000e+00> : vector<16x64xf32>
    %160 = tpu.matmul %157, %159, %cst_94 {dimension_numbers = #tpu.dot_dimension_numbers<[1], [0], [0], [1], [0, 0, 1, 1], [], []>} : vector<16x32xbf16>, vector<32x64xbf16>, vector<16x64xf32> -> vector<16x64xf32>
    %161 = arith.addf %156, %160 : vector<16x64xf32>
    %162 = vector.extract_strided_slice %140 {offsets = [64, 0], sizes = [16, 32], strides = [1, 1]} : vector<256x32xbf16> to vector<16x32xbf16>
    %c4_95 = arith.constant 4 : index
    %c0_96 = arith.constant 0 : index
    %c0_97 = arith.constant 0 : index
    %163 = vector.load %arg8[%c4_95, %c0_96, %c0_97] : memref<16x32x64xbf16, #tpu.memory_space<vmem>>, vector<1x32x64xbf16>
    %164 = vector.shape_cast %163 : vector<1x32x64xbf16> to vector<32x64xbf16>
    %cst_98 = arith.constant dense<0.000000e+00> : vector<16x64xf32>
    %165 = tpu.matmul %162, %164, %cst_98 {dimension_numbers = #tpu.dot_dimension_numbers<[1], [0], [0], [1], [0, 0, 1, 1], [], []>} : vector<16x32xbf16>, vector<32x64xbf16>, vector<16x64xf32> -> vector<16x64xf32>
    %166 = arith.addf %161, %165 : vector<16x64xf32>
    %167 = vector.extract_strided_slice %140 {offsets = [80, 0], sizes = [16, 32], strides = [1, 1]} : vector<256x32xbf16> to vector<16x32xbf16>
    %c5_99 = arith.constant 5 : index
    %c0_100 = arith.constant 0 : index
    %c0_101 = arith.constant 0 : index
    %168 = vector.load %arg8[%c5_99, %c0_100, %c0_101] : memref<16x32x64xbf16, #tpu.memory_space<vmem>>, vector<1x32x64xbf16>
    %169 = vector.shape_cast %168 : vector<1x32x64xbf16> to vector<32x64xbf16>
    %cst_102 = arith.constant dense<0.000000e+00> : vector<16x64xf32>
    %170 = tpu.matmul %167, %169, %cst_102 {dimension_numbers = #tpu.dot_dimension_numbers<[1], [0], [0], [1], [0, 0, 1, 1], [], []>} : vector<16x32xbf16>, vector<32x64xbf16>, vector<16x64xf32> -> vector<16x64xf32>
    %171 = arith.addf %166, %170 : vector<16x64xf32>
    %172 = vector.extract_strided_slice %140 {offsets = [96, 0], sizes = [16, 32], strides = [1, 1]} : vector<256x32xbf16> to vector<16x32xbf16>
    %c6_103 = arith.constant 6 : index
    %c0_104 = arith.constant 0 : index
    %c0_105 = arith.constant 0 : index
    %173 = vector.load %arg8[%c6_103, %c0_104, %c0_105] : memref<16x32x64xbf16, #tpu.memory_space<vmem>>, vector<1x32x64xbf16>
    %174 = vector.shape_cast %173 : vector<1x32x64xbf16> to vector<32x64xbf16>
    %cst_106 = arith.constant dense<0.000000e+00> : vector<16x64xf32>
    %175 = tpu.matmul %172, %174, %cst_106 {dimension_numbers = #tpu.dot_dimension_numbers<[1], [0], [0], [1], [0, 0, 1, 1], [], []>} : vector<16x32xbf16>, vector<32x64xbf16>, vector<16x64xf32> -> vector<16x64xf32>
    %176 = arith.addf %171, %175 : vector<16x64xf32>
    %177 = vector.extract_strided_slice %140 {offsets = [112, 0], sizes = [16, 32], strides = [1, 1]} : vector<256x32xbf16> to vector<16x32xbf16>
    %c7_107 = arith.constant 7 : index
    %c0_108 = arith.constant 0 : index
    %c0_109 = arith.constant 0 : index
    %178 = vector.load %arg8[%c7_107, %c0_108, %c0_109] : memref<16x32x64xbf16, #tpu.memory_space<vmem>>, vector<1x32x64xbf16>
    %179 = vector.shape_cast %178 : vector<1x32x64xbf16> to vector<32x64xbf16>
    %cst_110 = arith.constant dense<0.000000e+00> : vector<16x64xf32>
    %180 = tpu.matmul %177, %179, %cst_110 {dimension_numbers = #tpu.dot_dimension_numbers<[1], [0], [0], [1], [0, 0, 1, 1], [], []>} : vector<16x32xbf16>, vector<32x64xbf16>, vector<16x64xf32> -> vector<16x64xf32>
    %181 = arith.addf %176, %180 : vector<16x64xf32>
    %182 = vector.extract_strided_slice %140 {offsets = [128, 0], sizes = [16, 32], strides = [1, 1]} : vector<256x32xbf16> to vector<16x32xbf16>
    %c8_111 = arith.constant 8 : index
    %c0_112 = arith.constant 0 : index
    %c0_113 = arith.constant 0 : index
    %183 = vector.load %arg8[%c8_111, %c0_112, %c0_113] : memref<16x32x64xbf16, #tpu.memory_space<vmem>>, vector<1x32x64xbf16>
    %184 = vector.shape_cast %183 : vector<1x32x64xbf16> to vector<32x64xbf16>
    %cst_114 = arith.constant dense<0.000000e+00> : vector<16x64xf32>
    %185 = tpu.matmul %182, %184, %cst_114 {dimension_numbers = #tpu.dot_dimension_numbers<[1], [0], [0], [1], [0, 0, 1, 1], [], []>} : vector<16x32xbf16>, vector<32x64xbf16>, vector<16x64xf32> -> vector<16x64xf32>
    %186 = arith.addf %181, %185 : vector<16x64xf32>
    %187 = vector.extract_strided_slice %140 {offsets = [144, 0], sizes = [16, 32], strides = [1, 1]} : vector<256x32xbf16> to vector<16x32xbf16>
    %c9_115 = arith.constant 9 : index
    %c0_116 = arith.constant 0 : index
    %c0_117 = arith.constant 0 : index
    %188 = vector.load %arg8[%c9_115, %c0_116, %c0_117] : memref<16x32x64xbf16, #tpu.memory_space<vmem>>, vector<1x32x64xbf16>
    %189 = vector.shape_cast %188 : vector<1x32x64xbf16> to vector<32x64xbf16>
    %cst_118 = arith.constant dense<0.000000e+00> : vector<16x64xf32>
    %190 = tpu.matmul %187, %189, %cst_118 {dimension_numbers = #tpu.dot_dimension_numbers<[1], [0], [0], [1], [0, 0, 1, 1], [], []>} : vector<16x32xbf16>, vector<32x64xbf16>, vector<16x64xf32> -> vector<16x64xf32>
    %191 = arith.addf %186, %190 : vector<16x64xf32>
    %192 = vector.extract_strided_slice %140 {offsets = [160, 0], sizes = [16, 32], strides = [1, 1]} : vector<256x32xbf16> to vector<16x32xbf16>
    %c10_119 = arith.constant 10 : index
    %c0_120 = arith.constant 0 : index
    %c0_121 = arith.constant 0 : index
    %193 = vector.load %arg8[%c10_119, %c0_120, %c0_121] : memref<16x32x64xbf16, #tpu.memory_space<vmem>>, vector<1x32x64xbf16>
    %194 = vector.shape_cast %193 : vector<1x32x64xbf16> to vector<32x64xbf16>
    %cst_122 = arith.constant dense<0.000000e+00> : vector<16x64xf32>
    %195 = tpu.matmul %192, %194, %cst_122 {dimension_numbers = #tpu.dot_dimension_numbers<[1], [0], [0], [1], [0, 0, 1, 1], [], []>} : vector<16x32xbf16>, vector<32x64xbf16>, vector<16x64xf32> -> vector<16x64xf32>
    %196 = arith.addf %191, %195 : vector<16x64xf32>
    %197 = vector.extract_strided_slice %140 {offsets = [176, 0], sizes = [16, 32], strides = [1, 1]} : vector<256x32xbf16> to vector<16x32xbf16>
    %c11_123 = arith.constant 11 : index
    %c0_124 = arith.constant 0 : index
    %c0_125 = arith.constant 0 : index
    %198 = vector.load %arg8[%c11_123, %c0_124, %c0_125] : memref<16x32x64xbf16, #tpu.memory_space<vmem>>, vector<1x32x64xbf16>
    %199 = vector.shape_cast %198 : vector<1x32x64xbf16> to vector<32x64xbf16>
    %cst_126 = arith.constant dense<0.000000e+00> : vector<16x64xf32>
    %200 = tpu.matmul %197, %199, %cst_126 {dimension_numbers = #tpu.dot_dimension_numbers<[1], [0], [0], [1], [0, 0, 1, 1], [], []>} : vector<16x32xbf16>, vector<32x64xbf16>, vector<16x64xf32> -> vector<16x64xf32>
    %201 = arith.addf %196, %200 : vector<16x64xf32>
    %202 = vector.extract_strided_slice %140 {offsets = [192, 0], sizes = [16, 32], strides = [1, 1]} : vector<256x32xbf16> to vector<16x32xbf16>
    %c12_127 = arith.constant 12 : index
    %c0_128 = arith.constant 0 : index
    %c0_129 = arith.constant 0 : index
    %203 = vector.load %arg8[%c12_127, %c0_128, %c0_129] : memref<16x32x64xbf16, #tpu.memory_space<vmem>>, vector<1x32x64xbf16>
    %204 = vector.shape_cast %203 : vector<1x32x64xbf16> to vector<32x64xbf16>
    %cst_130 = arith.constant dense<0.000000e+00> : vector<16x64xf32>
    %205 = tpu.matmul %202, %204, %cst_130 {dimension_numbers = #tpu.dot_dimension_numbers<[1], [0], [0], [1], [0, 0, 1, 1], [], []>} : vector<16x32xbf16>, vector<32x64xbf16>, vector<16x64xf32> -> vector<16x64xf32>
    %206 = arith.addf %201, %205 : vector<16x64xf32>
    %207 = vector.extract_strided_slice %140 {offsets = [208, 0], sizes = [16, 32], strides = [1, 1]} : vector<256x32xbf16> to vector<16x32xbf16>
    %c13_131 = arith.constant 13 : index
    %c0_132 = arith.constant 0 : index
    %c0_133 = arith.constant 0 : index
    %208 = vector.load %arg8[%c13_131, %c0_132, %c0_133] : memref<16x32x64xbf16, #tpu.memory_space<vmem>>, vector<1x32x64xbf16>
    %209 = vector.shape_cast %208 : vector<1x32x64xbf16> to vector<32x64xbf16>
    %cst_134 = arith.constant dense<0.000000e+00> : vector<16x64xf32>
    %210 = tpu.matmul %207, %209, %cst_134 {dimension_numbers = #tpu.dot_dimension_numbers<[1], [0], [0], [1], [0, 0, 1, 1], [], []>} : vector<16x32xbf16>, vector<32x64xbf16>, vector<16x64xf32> -> vector<16x64xf32>
    %211 = arith.addf %206, %210 : vector<16x64xf32>
    %212 = vector.extract_strided_slice %140 {offsets = [224, 0], sizes = [16, 32], strides = [1, 1]} : vector<256x32xbf16> to vector<16x32xbf16>
    %c14_135 = arith.constant 14 : index
    %c0_136 = arith.constant 0 : index
    %c0_137 = arith.constant 0 : index
    %213 = vector.load %arg8[%c14_135, %c0_136, %c0_137] : memref<16x32x64xbf16, #tpu.memory_space<vmem>>, vector<1x32x64xbf16>
    %214 = vector.shape_cast %213 : vector<1x32x64xbf16> to vector<32x64xbf16>
    %cst_138 = arith.constant dense<0.000000e+00> : vector<16x64xf32>
    %215 = tpu.matmul %212, %214, %cst_138 {dimension_numbers = #tpu.dot_dimension_numbers<[1], [0], [0], [1], [0, 0, 1, 1], [], []>} : vector<16x32xbf16>, vector<32x64xbf16>, vector<16x64xf32> -> vector<16x64xf32>
    %216 = arith.addf %211, %215 : vector<16x64xf32>
    %217 = vector.extract_strided_slice %140 {offsets = [240, 0], sizes = [16, 32], strides = [1, 1]} : vector<256x32xbf16> to vector<16x32xbf16>
    %c15_139 = arith.constant 15 : index
    %c0_140 = arith.constant 0 : index
    %c0_141 = arith.constant 0 : index
    %218 = vector.load %arg8[%c15_139, %c0_140, %c0_141] : memref<16x32x64xbf16, #tpu.memory_space<vmem>>, vector<1x32x64xbf16>
    %219 = vector.shape_cast %218 : vector<1x32x64xbf16> to vector<32x64xbf16>
    %cst_142 = arith.constant dense<0.000000e+00> : vector<16x64xf32>
    %220 = tpu.matmul %217, %219, %cst_142 {dimension_numbers = #tpu.dot_dimension_numbers<[1], [0], [0], [1], [0, 0, 1, 1], [], []>} : vector<16x32xbf16>, vector<32x64xbf16>, vector<16x64xf32> -> vector<16x64xf32>
    %221 = arith.addf %216, %220 : vector<16x64xf32>
    %cst_143 = arith.constant dense<0.000000e+00> : vector<64xf32>
    %222 = vector.multi_reduction <add>, %221, %cst_143 [0] : vector<16x64xf32> to vector<64xf32>
    %223 = vector.shape_cast %222 : vector<64xf32> to vector<1x64xf32>
    %cst_144 = arith.constant 1.600000e+01 : f32
    %224 = vector.broadcast %cst_144 : f32 to vector<1x64xf32>
    %225 = arith.divf %223, %224 : vector<1x64xf32>
    %226 = arith.mulf %221, %221 : vector<16x64xf32>
    %cst_145 = arith.constant dense<0.000000e+00> : vector<64xf32>
    %227 = vector.multi_reduction <add>, %226, %cst_145 [0] : vector<16x64xf32> to vector<64xf32>
    %228 = vector.shape_cast %227 : vector<64xf32> to vector<1x64xf32>
    %cst_146 = arith.constant 1.600000e+01 : f32
    %229 = vector.broadcast %cst_146 : f32 to vector<1x64xf32>
    %230 = arith.divf %228, %229 : vector<1x64xf32>
    %231 = arith.mulf %225, %225 : vector<1x64xf32>
    %232 = arith.subf %230, %231 : vector<1x64xf32>
    %233 = vector.broadcast %225 : vector<1x64xf32> to vector<16x64xf32>
    %234 = arith.subf %221, %233 : vector<16x64xf32>
    %cst_147 = arith.constant 9.99999974E-6 : f32
    %235 = vector.broadcast %cst_147 : f32 to vector<1x64xf32>
    %236 = arith.addf %232, %235 : vector<1x64xf32>
    %237 = math.rsqrt %236 : vector<1x64xf32>
    %238 = vector.broadcast %237 : vector<1x64xf32> to vector<16x64xf32>
    %239 = arith.mulf %234, %238 : vector<16x64xf32>
    %cst_148 = arith.constant 0.000000e+00 : f32
    %240 = vector.broadcast %cst_148 : f32 to vector<16x64xf32>
    %241 = arith.cmpf ogt, %239, %240 : vector<16x64xf32>
    %cst_149 = arith.constant 2.000000e-01 : f32
    %242 = vector.broadcast %cst_149 : f32 to vector<16x64xf32>
    %243 = arith.mulf %242, %239 : vector<16x64xf32>
    %244 = arith.select %241, %239, %243 : vector<16x64xi1>, vector<16x64xf32>
    %c0_150 = arith.constant 0 : index
    %c0_151 = arith.constant 0 : index
    %245 = vector.load %arg10[%c0_150, %c0_151] : memref<16x64xf32, #tpu.memory_space<vmem>>, vector<16x64xf32>
    %246 = arith.mulf %244, %245 : vector<16x64xf32>
    %cst_152 = arith.constant dense<0.000000e+00> : vector<16xf32>
    %247 = vector.multi_reduction <add>, %246, %cst_152 [1] : vector<16x64xf32> to vector<16xf32>
    %248 = vector.shape_cast %247 : vector<16xf32> to vector<16x1xf32>
    %cst_153 = arith.constant dense<0.000000e+00> : vector<1xf32>
    %249 = vector.multi_reduction <add>, %248, %cst_153 [0] : vector<16x1xf32> to vector<1xf32>
    %250 = vector.shape_cast %249 : vector<1xf32> to vector<1x1xf32>
    %c0_154 = arith.constant 0 : index
    %c0_155 = arith.constant 0 : index
    %251 = vector.load %arg11[%c0_154, %c0_155] : memref<1x1xf32, #tpu.memory_space<vmem>>, vector<1x1xf32>
    %252 = arith.addf %250, %251 : vector<1x1xf32>
    %253 = vector.shape_cast %252 : vector<1x1xf32> to vector<1x1x1xf32>
    %c0_156 = arith.constant 0 : index
    %c0_157 = arith.constant 0 : index
    %c0_158 = arith.constant 0 : index
    %254 = vector.load %arg12[%c0_156, %c0_157, %c0_158] : memref<1x1x1xf32, #tpu.memory_space<vmem>>, vector<1x1x1xf32>
    tpu.vector_store %arg12[%c0_156, %c0_157, %c0_158], %253 {strides = array<i32>} : memref<1x1x1xf32, #tpu.memory_space<vmem>>, vector<1x1x1xf32>,
    return
  }
  func.func @transform_0(%arg0: i32) -> (i32, i32, i32) {
    %c0_i32 = arith.constant 0 : i32
    %c0_i32_0 = arith.constant 0 : i32
    %c0_i32_1 = arith.constant 0 : i32
    return %arg0, %c0_i32, %c0_i32_0 : i32, i32, i32
  }
  func.func @transform_1(%arg0: i32) -> (i32, i32) {
    %c0_i32 = arith.constant 0 : i32
    %c0_i32_0 = arith.constant 0 : i32
    %c0_i32_1 = arith.constant 0 : i32
    return %c0_i32, %c0_i32_0 : i32, i32
  }
  func.func @transform_2(%arg0: i32) -> (i32, i32) {
    %c0_i32 = arith.constant 0 : i32
    %c0_i32_0 = arith.constant 0 : i32
    %c0_i32_1 = arith.constant 0 : i32
    return %c0_i32, %c0_i32_0 : i32, i32
  }
  func.func @transform_3(%arg0: i32) -> (i32, i32) {
    %c0_i32 = arith.constant 0 : i32
    %c0_i32_0 = arith.constant 0 : i32
    %c0_i32_1 = arith.constant 0 : i32
    return %c0_i32, %c0_i32_0 : i32, i32
  }
  func.func @transform_4(%arg0: i32) -> (i32, i32, i32) {
    %c0_i32 = arith.constant 0 : i32
    %c0_i32_0 = arith.constant 0 : i32
    %c0_i32_1 = arith.constant 0 : i32
    %c0_i32_2 = arith.constant 0 : i32
    return %c0_i32, %c0_i32_0, %c0_i32_1 : i32, i32, i32
  }
  func.func @transform_5(%arg0: i32) -> (i32, i32) {
    %c0_i32 = arith.constant 0 : i32
    %c0_i32_0 = arith.constant 0 : i32
    %c0_i32_1 = arith.constant 0 : i32
    return %c0_i32, %c0_i32_0 : i32, i32
  }
  func.func @transform_6(%arg0: i32) -> (i32, i32) {
    %c0_i32 = arith.constant 0 : i32
    %c0_i32_0 = arith.constant 0 : i32
    %c0_i32_1 = arith.constant 0 : i32
    return %c0_i32, %c0_i32_0 : i32, i32
  }
  func.func @transform_7(%arg0: i32) -> (i32, i32, i32) {
    %c0_i32 = arith.constant 0 : i32
    %c0_i32_0 = arith.constant 0 : i32
    %c0_i32_1 = arith.constant 0 : i32
    %c0_i32_2 = arith.constant 0 : i32
    return %c0_i32, %c0_i32_0, %c0_i32_1 : i32, i32, i32
  }
  func.func @transform_8(%arg0: i32) -> (i32, i32) {
    %c0_i32 = arith.constant 0 : i32
    %c0_i32_0 = arith.constant 0 : i32
    %c0_i32_1 = arith.constant 0 : i32
    return %c0_i32, %c0_i32_0 : i32, i32
  }
  func.func @transform_9(%arg0: i32) -> (i32, i32) {
    %c0_i32 = arith.constant 0 : i32
    %c0_i32_0 = arith.constant 0 : i32
    %c0_i32_1 = arith.constant 0 : i32
    return %c0_i32, %c0_i32_0 : i32, i32
  }
  func.func @transform_10(%arg0: i32) -> (i32, i32) {
    %c0_i32 = arith.constant 0 : i32
    %c0_i32_0 = arith.constant 0 : i32
    %c0_i32_1 = arith.constant 0 : i32
    return %c0_i32, %c0_i32_0 : i32, i32
  }
  func.func @transform_11(%arg0: i32) -> (i32, i32, i32) {
    %c0_i32 = arith.constant 0 : i32
    %c0_i32_0 = arith.constant 0 : i32
    %c0_i32_1 = arith.constant 0 : i32
    return %arg0, %c0_i32, %c0_i32_0 : i32, i32, i32
  }
}

</mosaic_0001>

<llo_original>
// kernel: _lambda_.1
$region0: #{_lambda_.1}
  #allocation0 [shape = 'u32[]', space=smem, size = 0x4, offset = 0x4, fixed_abs, tag = 'smem constant byte address 0x4 - core index']
  #allocation1 [shape = 'u32[144,128]{1,0:T(1,128)}', space=vmem, size = 0x12000, scoped, tag = 'internal scratch']
  #allocation2 [shape = 'f32[1,1]{1,0:T(1,128)S(1)}', space=vmem, size = 0x200, scoped, tag = 'scoped memory for _lambda_.1']
  %s0 = inlined_call_operand.vmem [shape: bf16[2,256,48], index: 0, kind: input, shape index: {}]
  %s1 = inlined_call_operand.vmem [shape: bf16[48,16], index: 1, kind: input, shape index: {}]
  %s2 = inlined_call_operand.vmem [shape: f32[256,16], index: 2, kind: input, shape index: {}]
  %s3 = inlined_call_operand.vmem [shape: bf16[1024,256], index: 3, kind: input, shape index: {}]
  %s4 = inlined_call_operand.vmem [shape: bf16[16,16,32], index: 4, kind: input, shape index: {}]
  %s5 = inlined_call_operand.vmem [shape: f32[64,32], index: 5, kind: input, shape index: {}]
  %s6 = inlined_call_operand.vmem [shape: bf16[256,64], index: 6, kind: input, shape index: {}]
  %s7 = inlined_call_operand.vmem [shape: bf16[16,32,64], index: 7, kind: input, shape index: {}]
  %s8 = inlined_call_operand.vmem [shape: f32[16,64], index: 8, kind: input, shape index: {}]
  %s9 = inlined_call_operand.vmem [shape: f32[16,64], index: 9, kind: input, shape index: {}]
  %s10 = inlined_call_operand.<no memory space> [shape: f32[1,1], index: 10, kind: input, shape index: {}]
  %s11 = inlined_call_operand.vmem [shape: f32[2,1,1], index: 11, kind: output, shape index: {}]
  %s12 = sld [smem:[#allocation0]]
  $region77: #{_lambda_.1} parent=0
    _
  %s14 = ssub.s32 1, %s12
  %s15 = scalar_select 0, %s14, %s12
  %v16 = vstv %s10
  %17 = vst [vmem:[#allocation2] sm:$0x1] %v16
  loop: start=0, step=1, limit=4
  $region2: #{_lambda_.1} parent=0 // loop_pre_header
    _
  $region3: #{_lambda_.1} parent=0 // loop_header
    %s19 = sphi 0, %s23
    %p20 = scmp.ge.s32.totalorder %s19, 4
    %s29 = sphi 0, %s31
    %s32 = sphi 0, %s29
    %s33 = sphi 0, %s32
    %s49 = sphi 0, %s33
    %s53 = sphi 0, %s53
    %s55 = sphi 0, %s53
    %s56 = sphi 0, %s55
    %s70 = sphi 0, %s56
    %s74 = sphi 0, %s74
    %s76 = sphi 0, %s74
    %s77 = sphi 0, %s76
    %s91 = sphi 0, %s77
    %s95 = sphi 0, %s95
    %s97 = sphi 0, %s95
    %s98 = sphi 0, %s97
    %s112 = sphi 0, %s98
    %s116 = sphi 0, %s116
    %s118 = sphi 0, %s116
    %s119 = sphi 0, %s118
    %s133 = sphi 0, %s119
    %s137 = sphi 0, %s137
    %s139 = sphi 0, %s137
    %s140 = sphi 0, %s139
    %s154 = sphi 0, %s140
    %s158 = sphi 0, %s158
    %s160 = sphi 0, %s158
    %s161 = sphi 0, %s160
    %s175 = sphi 0, %s161
    %s179 = sphi 0, %s179
    %s181 = sphi 0, %s179
    %s182 = sphi 0, %s181
    %s196 = sphi 0, %s182
    %s200 = sphi 0, %s200
    %s202 = sphi 0, %s200
    %s203 = sphi 0, %s202
    %s217 = sphi 0, %s203
    %s221 = sphi 0, %s221
    %s223 = sphi 0, %s221
    %s224 = sphi 0, %s223
    %s238 = sphi 0, %s224
    %s242 = sphi 0, %s242
    %s244 = sphi 0, %s242
    %s245 = sphi 0, %s244
    %s259 = sphi 0, %s245
    %s265 = sphi 0, %s267
    %s268 = sphi 0, %s265
    %s269 = sphi 0, %s268
    %s285 = sphi 0, %s269
  $region4: #{_lambda_.1} parent=0 // loop_header_branch
    %22 = sbr.rel (%p20) target = $region8
  $region5: #{_lambda_.1} parent=0 // loop_body
    %s24 = ssub.s32 %s19, 1
    %s25 = ssub.s32 %s19, 2
    %s26 = sadd.s32 %s19, 1
    %s27 = ssub.s32 %s19, %s26
    %p28 = scmp.eq.s32.totalorder %s27, 0
    %s30 = sadd.s32 %s29, 1
    %s31 = scalar_select %p28, %s29, %s30
    %p34 = pneg %p28
    %p35 = scmp.eq.s32.totalorder %s19, 1
    %p36 = por %p34, %p35
    %p37 = scmp.ne.s32.totalorder %s29, %s32
    %p38 = scmp.eq.s32.totalorder %s19, 0
    %p39 = por %p37, %p38
    %p40 = scmp.ne.s32.totalorder %s29, %s32
    %p41 = scmp.eq.s32.totalorder %s24, 1
    %p42 = por %p40, %p41
    %p43 = scmp.ne.s32.totalorder %s32, %s33
    %p44 = scmp.eq.s32.totalorder %s24, 0
    %p45 = por %p43, %p44
    %p46 = scmp.ne.s32.totalorder %s32, %s33
    %p47 = scmp.eq.s32.totalorder %s25, 1
    %p48 = por %p46, %p47
    %p50 = scmp.ne.s32.totalorder %s33, %s49
    %p51 = scmp.eq.s32.totalorder %s25, 0
    %p52 = por %p50, %p51
    %s54 = sadd.s32 %s53, 1
    %p57 = scmp.eq.s32.totalorder %s19, 1
    %p58 = scmp.ne.s32.totalorder %s53, %s55
    %p59 = scmp.eq.s32.totalorder %s19, 0
    %p60 = por %p58, %p59
    %p61 = scmp.ne.s32.totalorder %s53, %s55
    %p62 = scmp.eq.s32.totalorder %s24, 1
    %p63 = por %p61, %p62
    %p64 = scmp.ne.s32.totalorder %s55, %s56
    %p65 = scmp.eq.s32.totalorder %s24, 0
    %p66 = por %p64, %p65
    %p67 = scmp.ne.s32.totalorder %s55, %s56
    %p68 = scmp.eq.s32.totalorder %s25, 1
    %p69 = por %p67, %p68
    %p71 = scmp.ne.s32.totalorder %s56, %s70
    %p72 = scmp.eq.s32.totalorder %s25, 0
    %p73 = por %p71, %p72
    %s75 = sadd.s32 %s74, 1
    %p78 = scmp.eq.s32.totalorder %s19, 1
    %p79 = scmp.ne.s32.totalorder %s74, %s76
    %p80 = scmp.eq.s32.totalorder %s19, 0
    %p81 = por %p79, %p80
    %p82 = scmp.ne.s32.totalorder %s74, %s76
    %p83 = scmp.eq.s32.totalorder %s24, 1
    %p84 = por %p82, %p83
    %p85 = scmp.ne.s32.totalorder %s76, %s77
    %p86 = scmp.eq.s32.totalorder %s24, 0
    %p87 = por %p85, %p86
    %p88 = scmp.ne.s32.totalorder %s76, %s77
    %p89 = scmp.eq.s32.totalorder %s25, 1
    %p90 = por %p88, %p89
    %p92 = scmp.ne.s32.totalorder %s77, %s91
    %p93 = scmp.eq.s32.totalorder %s25, 0
    %p94 = por %p92, %p93
    %s96 = sadd.s32 %s95, 1
    %p99 = scmp.eq.s32.totalorder %s19, 1
    %p100 = scmp.ne.s32.totalorder %s95, %s97
    %p101 = scmp.eq.s32.totalorder %s19, 0
    %p102 = por %p100, %p101
    %p103 = scmp.ne.s32.totalorder %s95, %s97
    %p104 = scmp.eq.s32.totalorder %s24, 1
    %p105 = por %p103, %p104
    %p106 = scmp.ne.s32.totalorder %s97, %s98
    %p107 = scmp.eq.s32.totalorder %s24, 0
    %p108 = por %p106, %p107
    %p109 = scmp.ne.s32.totalorder %s97, %s98
    %p110 = scmp.eq.s32.totalorder %s25, 1
    %p111 = por %p109, %p110
    %p113 = scmp.ne.s32.totalorder %s98, %s112
    %p114 = scmp.eq.s32.totalorder %s25, 0
    %p115 = por %p113, %p114
    %s117 = sadd.s32 %s116, 1
    %p120 = scmp.eq.s32.totalorder %s19, 1
    %p121 = scmp.ne.s32.totalorder %s116, %s118
    %p122 = scmp.eq.s32.totalorder %s19, 0
    %p123 = por %p121, %p122
    %p124 = scmp.ne.s32.totalorder %s116, %s118
    %p125 = scmp.eq.s32.totalorder %s24, 1
    %p126 = por %p124, %p125
    %p127 = scmp.ne.s32.totalorder %s118, %s119
    %p128 = scmp.eq.s32.totalorder %s24, 0
    %p129 = por %p127, %p128
    %p130 = scmp.ne.s32.totalorder %s118, %s119
    %p131 = scmp.eq.s32.totalorder %s25, 1
    %p132 = por %p130, %p131
    %p134 = scmp.ne.s32.totalorder %s119, %s133
    %p135 = scmp.eq.s32.totalorder %s25, 0
    %p136 = por %p134, %p135
    %s138 = sadd.s32 %s137, 1
    %p141 = scmp.eq.s32.totalorder %s19, 1
    %p142 = scmp.ne.s32.totalorder %s137, %s139
    %p143 = scmp.eq.s32.totalorder %s19, 0
    %p144 = por %p142, %p143
    %p145 = scmp.ne.s32.totalorder %s137, %s139
    %p146 = scmp.eq.s32.totalorder %s24, 1
    %p147 = por %p145, %p146
    %p148 = scmp.ne.s32.totalorder %s139, %s140
    %p149 = scmp.eq.s32.totalorder %s24, 0
    %p150 = por %p148, %p149
    %p151 = scmp.ne.s32.totalorder %s139, %s140
    %p152 = scmp.eq.s32.totalorder %s25, 1
    %p153 = por %p151, %p152
    %p155 = scmp.ne.s32.totalorder %s140, %s154
    %p156 = scmp.eq.s32.totalorder %s25, 0
    %p157 = por %p155, %p156
    %s159 = sadd.s32 %s158, 1
    %p162 = scmp.eq.s32.totalorder %s19, 1
    %p163 = scmp.ne.s32.totalorder %s158, %s160
    %p164 = scmp.eq.s32.totalorder %s19, 0
    %p165 = por %p163, %p164
    %p166 = scmp.ne.s32.totalorder %s158, %s160
    %p167 = scmp.eq.s32.totalorder %s24, 1
    %p168 = por %p166, %p167
    %p169 = scmp.ne.s32.totalorder %s160, %s161
    %p170 = scmp.eq.s32.totalorder %s24, 0
    %p171 = por %p169, %p170
    %p172 = scmp.ne.s32.totalorder %s160, %s161
    %p173 = scmp.eq.s32.totalorder %s25, 1
    %p174 = por %p172, %p173
    %p176 = scmp.ne.s32.totalorder %s161, %s175
    %p177 = scmp.eq.s32.totalorder %s25, 0
    %p178 = por %p176, %p177
    %s180 = sadd.s32 %s179, 1
    %p183 = scmp.eq.s32.totalorder %s19, 1
    %p184 = scmp.ne.s32.totalorder %s179, %s181
    %p185 = scmp.eq.s32.totalorder %s19, 0
    %p186 = por %p184, %p185
    %p187 = scmp.ne.s32.totalorder %s179, %s181
    %p188 = scmp.eq.s32.totalorder %s24, 1
    %p189 = por %p187, %p188
    %p190 = scmp.ne.s32.totalorder %s181, %s182
    %p191 = scmp.eq.s32.totalorder %s24, 0
    %p192 = por %p190, %p191
    %p193 = scmp.ne.s32.totalorder %s181, %s182
    %p194 = scmp.eq.s32.totalorder %s25, 1
    %p195 = por %p193, %p194
    %p197 = scmp.ne.s32.totalorder %s182, %s196
    %p198 = scmp.eq.s32.totalorder %s25, 0
    %p199 = por %p197, %p198
    %s201 = sadd.s32 %s200, 1
    %p204 = scmp.eq.s32.totalorder %s19, 1
    %p205 = scmp.ne.s32.totalorder %s200, %s202
    %p206 = scmp.eq.s32.totalorder %s19, 0
    %p207 = por %p205, %p206
    %p208 = scmp.ne.s32.totalorder %s200, %s202
    %p209 = scmp.eq.s32.totalorder %s24, 1
    %p210 = por %p208, %p209
    %p211 = scmp.ne.s32.totalorder %s202, %s203
    %p212 = scmp.eq.s32.totalorder %s24, 0
    %p213 = por %p211, %p212
    %p214 = scmp.ne.s32.totalorder %s202, %s203
    %p215 = scmp.eq.s32.totalorder %s25, 1
    %p216 = por %p214, %p215
    %p218 = scmp.ne.s32.totalorder %s203, %s217
    %p219 = scmp.eq.s32.totalorder %s25, 0
    %p220 = por %p218, %p219
    %s222 = sadd.s32 %s221, 1
    %p225 = scmp.eq.s32.totalorder %s19, 1
    %p226 = scmp.ne.s32.totalorder %s221, %s223
    %p227 = scmp.eq.s32.totalorder %s19, 0
    %p228 = por %p226, %p227
    %p229 = scmp.ne.s32.totalorder %s221, %s223
    %p230 = scmp.eq.s32.totalorder %s24, 1
    %p231 = por %p229, %p230
    %p232 = scmp.ne.s32.totalorder %s223, %s224
    %p233 = scmp.eq.s32.totalorder %s24, 0
    %p234 = por %p232, %p233
    %p235 = scmp.ne.s32.totalorder %s223, %s224
    %p236 = scmp.eq.s32.totalorder %s25, 1
    %p237 = por %p235, %p236
    %p239 = scmp.ne.s32.totalorder %s224, %s238
    %p240 = scmp.eq.s32.totalorder %s25, 0
    %p241 = por %p239, %p240
    %s243 = sadd.s32 %s242, 1
    %p246 = scmp.eq.s32.totalorder %s19, 1
    %p247 = scmp.ne.s32.totalorder %s242, %s244
    %p248 = scmp.eq.s32.totalorder %s19, 0
    %p249 = por %p247, %p248
    %p250 = scmp.ne.s32.totalorder %s242, %s244
    %p251 = scmp.eq.s32.totalorder %s24, 1
    %p252 = por %p250, %p251
    %p253 = scmp.ne.s32.totalorder %s244, %s245
    %p254 = scmp.eq.s32.totalorder %s24, 0
    %p255 = por %p253, %p254
    %p256 = scmp.ne.s32.totalorder %s244, %s245
    %p257 = scmp.eq.s32.totalorder %s25, 1
    %p258 = por %p256, %p257
    %p260 = scmp.ne.s32.totalorder %s245, %s259
    %p261 = scmp.eq.s32.totalorder %s25, 0
    %p262 = por %p260, %p261
    %s263 = ssub.s32 %s19, %s26
    %p264 = scmp.eq.s32.totalorder %s263, 0
    %s266 = sadd.s32 %s265, 1
    %s267 = scalar_select %p264, %s265, %s266
    %p270 = pneg %p264
    %p271 = scmp.eq.s32.totalorder %s19, 1
    %p272 = por %p270, %p271
    %p273 = scmp.ne.s32.totalorder %s265, %s268
    %p274 = scmp.eq.s32.totalorder %s19, 0
    %p275 = por %p273, %p274
    %p276 = scmp.ne.s32.totalorder %s265, %s268
    %p277 = scmp.eq.s32.totalorder %s24, 1
    %p278 = por %p276, %p277
    %p279 = scmp.ne.s32.totalorder %s268, %s269
    %p280 = scmp.eq.s32.totalorder %s24, 0
    %p281 = por %p279, %p280
    %p282 = scmp.ne.s32.totalorder %s268, %s269
    %p283 = scmp.eq.s32.totalorder %s25, 1
    %p284 = por %p282, %p283
    %p286 = scmp.ne.s32.totalorder %s269, %s285
    %p287 = scmp.eq.s32.totalorder %s25, 0
    %p288 = por %p286, %p287
    %p289 = scmp.le.s32.totalorder 1, %s19
    %p290 = scmp.lt.s32.totalorder %s19, 3
    %p291 = pnand %p289, %p290
    %p292 = pneg %p291
    // Predicated region
    $region9: #{_lambda_.1} parent=5 // pred_check
      _
    $region10: #{_lambda_.1} parent=5 // pred_check_branch
      %294 = sbr.rel (%p291) target = $region12
    $region11: #{_lambda_.1} parent=5 // pred_region
      %s295 = ssub.s32 %s19, 1
      // Predicated region
      $region13: #{_lambda_.1} parent=11 // pred_check
        %p296 = pneg %p66
      $region14: #{_lambda_.1} parent=11 // pred_check_branch
        %298 = sbr.rel (%p296) target = $region16
      $region15: #{_lambda_.1} parent=11 // pred_region
        _
      $region16: #{_lambda_.1} parent=11 // pred_fallthru
        _
      // Predicated region
      $region17: #{_lambda_.1} parent=11 // pred_check
        %p299 = pneg %p87
      $region18: #{_lambda_.1} parent=11 // pred_check_branch
        %301 = sbr.rel (%p299) target = $region20
      $region19: #{_lambda_.1} parent=11 // pred_region
        _
      $region20: #{_lambda_.1} parent=11 // pred_fallthru
        _
      // Predicated region
      $region21: #{_lambda_.1} parent=11 // pred_check
        %p302 = pneg %p108
      $region22: #{_lambda_.1} parent=11 // pred_check_branch
        %304 = sbr.rel (%p302) target = $region24
      $region23: #{_lambda_.1} parent=11 // pred_region
        _
      $region24: #{_lambda_.1} parent=11 // pred_fallthru
        _
      // Predicated region
      $region25: #{_lambda_.1} parent=11 // pred_check
        %p305 = pneg %p129
      $region26: #{_lambda_.1} parent=11 // pred_check_branch
        %307 = sbr.rel (%p305) target = $region28
      $region27: #{_lambda_.1} parent=11 // pred_region
        _
      $region28: #{_lambda_.1} parent=11 // pred_fallthru
        _
      // Predicated region
      $region29: #{_lambda_.1} parent=11 // pred_check
        %p308 = pneg %p150
      $region30: #{_lambda_.1} parent=11 // pred_check_branch
        %310 = sbr.rel (%p308) target = $region32
      $region31: #{_lambda_.1} parent=11 // pred_region
        _
      $region32: #{_lambda_.1} parent=11 // pred_fallthru
        _
      // Predicated region
      $region33: #{_lambda_.1} parent=11 // pred_check
        %p311 = pneg %p171
      $region34: #{_lambda_.1} parent=11 // pred_check_branch
        %313 = sbr.rel (%p311) target = $region36
      $region35: #{_lambda_.1} parent=11 // pred_region
        _
      $region36: #{_lambda_.1} parent=11 // pred_fallthru
        _
      // Predicated region
      $region37: #{_lambda_.1} parent=11 // pred_check
        %p314 = pneg %p192
      $region38: #{_lambda_.1} parent=11 // pred_check_branch
        %316 = sbr.rel (%p314) target = $region40
      $region39: #{_lambda_.1} parent=11 // pred_region
        _
      $region40: #{_lambda_.1} parent=11 // pred_fallthru
        _
      // Predicated region
      $region41: #{_lambda_.1} parent=11 // pred_check
        %p317 = pneg %p213
      $region42: #{_lambda_.1} parent=11 // pred_check_branch
        %319 = sbr.rel (%p317) target = $region44
      $region43: #{_lambda_.1} parent=11 // pred_region
        _
      $region44: #{_lambda_.1} parent=11 // pred_fallthru
        _
      // Predicated region
      $region45: #{_lambda_.1} parent=11 // pred_check
        %p320 = pneg %p234
      $region46: #{_lambda_.1} parent=11 // pred_check_branch
        %322 = sbr.rel (%p320) target = $region48
      $region47: #{_lambda_.1} parent=11 // pred_region
        _
      $region48: #{_lambda_.1} parent=11 // pred_fallthru
        _
      // Predicated region
      $region49: #{_lambda_.1} parent=11 // pred_check
        %p323 = pneg %p255
      $region50: #{_lambda_.1} parent=11 // pred_check_branch
        %325 = sbr.rel (%p323) target = $region52
      $region51: #{_lambda_.1} parent=11 // pred_region
        _
      $region52: #{_lambda_.1} parent=11 // pred_fallthru
        _
    $region12: #{_lambda_.1} parent=5 // pred_fallthru
      _
    %p326 = scmp.lt.s32.totalorder %s19, 2
    // Predicated region
    $region53: #{_lambda_.1} parent=5 // pred_check
      %p327 = pneg %p326
    $region54: #{_lambda_.1} parent=5 // pred_check_branch
      %329 = sbr.rel (%p327) target = $region56
    $region55: #{_lambda_.1} parent=5 // pred_region
      // Predicated region
      $region57: #{_lambda_.1} parent=55 // pred_check
        %p330 = pneg %p39
      $region58: #{_lambda_.1} parent=55 // pred_check_branch
        %332 = sbr.rel (%p330) target = $region60
      $region59: #{_lambda_.1} parent=55 // pred_region
        %p333 = scmp.lt.s32.totalorder %s19, 1
        %s334 = scalar_select %p333, %s19, 1
        %s335 = smul.addr %s334, 32
        %s336 = smul.addr %s335, 4
        %s337 = scalar_lea.vmem %s0, %s336
      $region60: #{_lambda_.1} parent=55 // pred_fallthru
        _
    $region56: #{_lambda_.1} parent=5 // pred_fallthru
      _
    %p338 = scmp.le.s32.totalorder 1, %s19
    %p339 = scmp.lt.s32.totalorder %s19, 3
    %p340 = pnand %p338, %p339
    %p341 = pneg %p340
    // Predicated region
    $region61: #{_lambda_.1} parent=5 // pred_check
      _
    $region62: #{_lambda_.1} parent=5 // pred_check_branch
      %343 = sbr.rel (%p340) target = $region64
    $region63: #{_lambda_.1} parent=5 // pred_region
      %s344 = ssub.s32 %s19, 1
      %p345 = scmp.lt.s32.totalorder %s24, 1
      %s346 = scalar_select %p345, %s24, 1
      %s347 = smul.addr %s346, 32
      %s348 = smul.addr %s347, 4
      %s349 = scalar_lea.vmem %s0, %s348
      %p350 = pneg %p45
      %p351 = pneg %p42
      %p352 = pneg %p66
      %p353 = pneg %p63
      %p354 = pneg %p87
      %p355 = pneg %p84
      %p356 = pneg %p108
      %p357 = pneg %p105
      %p358 = pneg %p129
      %p359 = pneg %p126
      %p360 = pneg %p150
      %p361 = pneg %p147
      %p362 = pneg %p171
      %p363 = pneg %p168
      %p364 = pneg %p192
      %p365 = pneg %p189
      %p366 = pneg %p213
      %p367 = pneg %p210
      %p368 = pneg %p234
      %p369 = pneg %p231
      %p370 = pneg %p255
      %p371 = pneg %p252
      %p372 = pneg %p281
      %p373 = pneg %p278
      %p374 = scmp.lt.s32.totalorder %s24, 1
      %s375 = scalar_select %p374, %s24, 1
      %s376 = scalar_lea.vmem %s11, %s375
      %p377 = scmp.lt.s32.totalorder %s24, 1
      %s378 = scalar_select %p377, %s24, 1
      %s379 = smul.addr %s378, 32
      %s380 = smul.addr %s379, 4
      %s381 = scalar_lea.vmem %s0, %s380
      %p382 = scmp.lt.s32.totalorder %s24, 1
      %s383 = scalar_select %p382, %s24, 1
      %s384 = scalar_lea.vmem %s11, %s383
      %v386 = vld [vmem:[%s381] sm:$0xf]
      %v387 = vld [vmem:[%s381 + $0x4] sm:$0xf]
      %v388 = vld [vmem:[%s381 + $0x8] sm:$0xf]
      %v389 = vld [vmem:[%s381 + $0xc] sm:$0xf]
      %v390 = vld [vmem:[%s381 + $0x10] sm:$0xf]
      %v391 = vld [vmem:[%s381 + $0x14] sm:$0xf]
      %v392 = vld [vmem:[%s381 + $0x18] sm:$0xf]
      %v393 = vld [vmem:[%s381 + $0x1c] sm:$0xf]
      %v394 = vld [vmem:[%s381 + $0x20] sm:$0xf]
      %v395 = vld [vmem:[%s381 + $0x24] sm:$0xf]
      %v396 = vld [vmem:[%s381 + $0x28] sm:$0xf]
      %v397 = vld [vmem:[%s381 + $0x2c] sm:$0xf]
      %v398 = vld [vmem:[%s381 + $0x30] sm:$0xf]
      %v399 = vld [vmem:[%s381 + $0x34] sm:$0xf]
      %v400 = vld [vmem:[%s381 + $0x38] sm:$0xf]
      %v401 = vld [vmem:[%s381 + $0x3c] sm:$0xf]
      %v402 = vld [vmem:[%s381 + $0x40] sm:$0xf]
      %v403 = vld [vmem:[%s381 + $0x44] sm:$0xf]
      %v404 = vld [vmem:[%s381 + $0x48] sm:$0xf]
      %v405 = vld [vmem:[%s381 + $0x4c] sm:$0xf]
      %v406 = vld [vmem:[%s381 + $0x50] sm:$0xf]
      %v407 = vld [vmem:[%s381 + $0x54] sm:$0xf]
      %v408 = vld [vmem:[%s381 + $0x58] sm:$0xf]
      %v409 = vld [vmem:[%s381 + $0x5c] sm:$0xf]
      %v410 = vld [vmem:[%s381 + $0x60] sm:$0xf]
      %v411 = vld [vmem:[%s381 + $0x64] sm:$0xf]
      %v412 = vld [vmem:[%s381 + $0x68] sm:$0xf]
      %v413 = vld [vmem:[%s381 + $0x6c] sm:$0xf]
      %v414 = vld [vmem:[%s381 + $0x70] sm:$0xf]
      %v415 = vld [vmem:[%s381 + $0x74] sm:$0xf]
      %v416 = vld [vmem:[%s381 + $0x78] sm:$0xf]
      %v417 = vld [vmem:[%s381 + $0x7c] sm:$0xf]
      %v418 = vld [vmem:[%s1] sm:$0xf]
      %v419 = vld [vmem:[%s1 + $0x4] sm:$0xf]
      %v420 = vld [vmem:[%s1 + $0x8] sm:$0xf]
      %v421 = vld [vmem:[%s1 + $0xc] sm:$0xf]
      %v422 = vld [vmem:[%s1 + $0x10] sm:$0xf]
      %v423 = vld [vmem:[%s1 + $0x14] sm:$0xf]
      %v424 = vld [vmem:[%s2] sm:$0xff]
      %v425 = vld [vmem:[%s2 + $0x8] sm:$0xff]
      %v426 = vld [vmem:[%s2 + $0x10] sm:$0xff]
      %v427 = vld [vmem:[%s2 + $0x18] sm:$0xff]
      %v428 = vld [vmem:[%s2 + $0x20] sm:$0xff]
      %v429 = vld [vmem:[%s2 + $0x28] sm:$0xff]
      %v430 = vld [vmem:[%s2 + $0x30] sm:$0xff]
      %v431 = vld [vmem:[%s2 + $0x38] sm:$0xff]
      %v432 = vld [vmem:[%s2 + $0x40] sm:$0xff]
      %v433 = vld [vmem:[%s2 + $0x48] sm:$0xff]
      %v434 = vld [vmem:[%s2 + $0x50] sm:$0xff]
      %v435 = vld [vmem:[%s2 + $0x58] sm:$0xff]
      %v436 = vld [vmem:[%s2 + $0x60] sm:$0xff]
      %v437 = vld [vmem:[%s2 + $0x68] sm:$0xff]
      %v438 = vld [vmem:[%s2 + $0x70] sm:$0xff]
      %v439 = vld [vmem:[%s2 + $0x78] sm:$0xff]
      %v440 = vld [vmem:[%s2 + $0x80] sm:$0xff]
      %v441 = vld [vmem:[%s2 + $0x88] sm:$0xff]
      %v442 = vld [vmem:[%s2 + $0x90] sm:$0xff]
      %v443 = vld [vmem:[%s2 + $0x98] sm:$0xff]
      %v444 = vld [vmem:[%s2 + $0xa0] sm:$0xff]
      %v445 = vld [vmem:[%s2 + $0xa8] sm:$0xff]
      %v446 = vld [vmem:[%s2 + $0xb0] sm:$0xff]
      %v447 = vld [vmem:[%s2 + $0xb8] sm:$0xff]
      %v448 = vld [vmem:[%s2 + $0xc0] sm:$0xff]
      %v449 = vld [vmem:[%s2 + $0xc8] sm:$0xff]
      %v450 = vld [vmem:[%s2 + $0xd0] sm:$0xff]
      %v451 = vld [vmem:[%s2 + $0xd8] sm:$0xff]
      %v452 = vld [vmem:[%s2 + $0xe0] sm:$0xff]
      %v453 = vld [vmem:[%s2 + $0xe8] sm:$0xff]
      %v454 = vld [vmem:[%s2 + $0xf0] sm:$0xff]
      %v455 = vld [vmem:[%s2 + $0xf8] sm:$0xff]
      %v488 = vunpack.c.l.b16 %v386
      %v489 = vunpack.c.l.b16 %v387
      %v490 = vunpack.c.l.b16 %v388
      %v491 = vunpack.c.l.b16 %v389
      %v492 = vunpack.c.l.b16 %v390
      %v493 = vunpack.c.l.b16 %v391
      %v494 = vunpack.c.l.b16 %v392
      %v495 = vunpack.c.l.b16 %v393
      %v496 = vunpack.c.l.b16 %v394
      %v497 = vunpack.c.l.b16 %v395
      %v498 = vunpack.c.l.b16 %v396
      %v499 = vunpack.c.l.b16 %v397
      %v500 = vunpack.c.l.b16 %v398
      %v501 = vunpack.c.l.b16 %v399
      %v502 = vunpack.c.l.b16 %v400
      %v503 = vunpack.c.l.b16 %v401
      %v504 = vunpack.c.l.b16 %v402
      %v505 = vunpack.c.l.b16 %v403
      %v506 = vunpack.c.l.b16 %v404
      %v507 = vunpack.c.l.b16 %v405
      %v508 = vunpack.c.l.b16 %v406
      %v509 = vunpack.c.l.b16 %v407
      %v510 = vunpack.c.l.b16 %v408
      %v511 = vunpack.c.l.b16 %v409
      %v512 = vunpack.c.l.b16 %v410
      %v513 = vunpack.c.l.b16 %v411
      %v514 = vunpack.c.l.b16 %v412
      %v515 = vunpack.c.l.b16 %v413
      %v516 = vunpack.c.l.b16 %v414
      %v517 = vunpack.c.l.b16 %v415
      %v518 = vunpack.c.l.b16 %v416
      %v519 = vunpack.c.l.b16 %v417
      %v520 = vpack.c.b16 %v489, %v488
      %v521 = vpack.c.b16 %v491, %v490
      %v522 = vpack.c.b16 %v493, %v492
      %v523 = vpack.c.b16 %v495, %v494
      %v524 = vpack.c.b16 %v497, %v496
      %v525 = vpack.c.b16 %v499, %v498
      %v526 = vpack.c.b16 %v501, %v500
      %v527 = vpack.c.b16 %v503, %v502
      %v528 = vpack.c.b16 %v505, %v504
      %v529 = vpack.c.b16 %v507, %v506
      %v530 = vpack.c.b16 %v509, %v508
      %v531 = vpack.c.b16 %v511, %v510
      %v532 = vpack.c.b16 %v513, %v512
      %v533 = vpack.c.b16 %v515, %v514
      %v534 = vpack.c.b16 %v517, %v516
      %v535 = vpack.c.b16 %v519, %v518
      %v542 = vunpack.c.l.b16 %v418
      %v543 = vunpack.c.l.b16 %v419
      %v544 = vunpack.c.l.b16 %v420
      %v545 = vunpack.c.l.b16 %v421
      %v546 = vunpack.c.l.b16 %v422
      %v547 = vunpack.c.l.b16 %v423
      %v548 = vpack.c.b16 %v543, %v542
      %v549 = vpack.c.b16 %v545, %v544
      %v550 = vpack.c.b16 %v547, %v546
      %vm554 = vcmask 392192
      %v556 = vsel %vm554, %v520, 0
      %v559 = vsel %vm554, %v521, 0
      %v562 = vsel %vm554, %v522, 0
      %v565 = vsel %vm554, %v523, 0
      %v568 = vsel %vm554, %v524, 0
      %v571 = vsel %vm554, %v525, 0
      %v574 = vsel %vm554, %v526, 0
      %v577 = vsel %vm554, %v527, 0
      %v580 = vsel %vm554, %v528, 0
      %v583 = vsel %vm554, %v529, 0
      %v586 = vsel %vm554, %v530, 0
      %v589 = vsel %vm554, %v531, 0
      %v592 = vsel %vm554, %v532, 0
      %v595 = vsel %vm554, %v533, 0
      %v598 = vsel %vm554, %v534, 0
      %v601 = vsel %vm554, %v535, 0
      %603 = vmatprep.subr.bf16.mxu0 0
      %604 = vmatpush1.bf16.msra.mxu0 %v548
      %605 = vmatprep.subr.bf16.mxu0 0
      %606 = vmatpush1.bf16.msra.mxu0 %v549
      %607 = vmatprep.subr.bf16.mxu0 0
      %608 = vmatpush1.bf16.msra.mxu0 %v550
      %609 = vmatprep.subr.bf16.mxu0 0
      %610 = vmatpush1.bf16.msra.mxu0 0
      %611 = vmatprep.subr.bf16.mxu0 0
      %612 = vmatpush1.bf16.msra.mxu0 0
      %613 = vmatprep.subr.bf16.mxu0 0
      %614 = vmatpush1.bf16.msra.mxu0 0
      %615 = vmatprep.subr.bf16.mxu0 0
      %616 = vmatpush1.bf16.msra.mxu0 0
      %617 = vmatprep.subr.bf16.mxu0 0
      %618 = vmatpush1.bf16.msra.mxu0 0
      %619 = vmatprep.subr.bf16.mxu0 0
      %620 = vmatpush1.bf16.msra.mxu0 0
      %621 = vmatprep.subr.bf16.mxu0 0
      %622 = vmatpush1.bf16.msra.mxu0 0
      %623 = vmatprep.subr.bf16.mxu0 0
      %624 = vmatpush1.bf16.msra.mxu0 0
      %625 = vmatprep.subr.bf16.mxu0 0
      %626 = vmatpush1.bf16.msra.mxu0 0
      %627 = vmatprep.subr.bf16.mxu0 0
      %628 = vmatpush1.bf16.msra.mxu0 0
      %629 = vmatprep.subr.bf16.mxu0 0
      %630 = vmatpush1.bf16.msra.mxu0 0
      %631 = vmatprep.subr.bf16.mxu0 0
      %632 = vmatpush1.bf16.msra.mxu0 0
      %633 = vmatprep.subr.bf16.mxu0 0
      %634 = vmatpush1.bf16.msra.mxu0 0
      %635 = vmatprep.mubr.bf16.mxu0 0
      %636 = vmatmul.mubr.bf16.gmra.mrb[0].mxu0 %v556
      %v637 = vpop.f32.mrb[0].mxu0
      %v638 = vadd.f32 %v424, %v637
      %v639 = vpop.f32.mrb[0].mxu0
      %v640 = vpop.f32.mrb[0].mxu0
      %v641 = vadd.f32 %v425, %v640
      %v642 = vpop.f32.mrb[0].mxu0
      %643 = vmatprep.mubr.bf16.mxu0 0
      %644 = vmatmul.mubr.bf16.gmra.mrb[0].mxu0 %v559
      %v645 = vpop.f32.mrb[0].mxu0
      %v646 = vadd.f32 %v426, %v645
      %v647 = vpop.f32.mrb[0].mxu0
      %v648 = vpop.f32.mrb[0].mxu0
      %v649 = vadd.f32 %v427, %v648
      %v650 = vpop.f32.mrb[0].mxu0
      %651 = vmatprep.mubr.bf16.mxu0 0
      %652 = vmatmul.mubr.bf16.gmra.mrb[0].mxu0 %v562
      %v653 = vpop.f32.mrb[0].mxu0
      %v654 = vadd.f32 %v428, %v653
      %v655 = vpop.f32.mrb[0].mxu0
      %v656 = vpop.f32.mrb[0].mxu0
      %v657 = vadd.f32 %v429, %v656
      %v658 = vpop.f32.mrb[0].mxu0
      %659 = vmatprep.mubr.bf16.mxu0 0
      %660 = vmatmul.mubr.bf16.gmra.mrb[0].mxu0 %v565
      %v661 = vpop.f32.mrb[0].mxu0
      %v662 = vadd.f32 %v430, %v661
      %v663 = vpop.f32.mrb[0].mxu0
      %v664 = vpop.f32.mrb[0].mxu0
      %v665 = vadd.f32 %v431, %v664
      %v666 = vpop.f32.mrb[0].mxu0
      %667 = vmatprep.mubr.bf16.mxu0 0
      %668 = vmatmul.mubr.bf16.gmra.mrb[0].mxu0 %v568
      %v669 = vpop.f32.mrb[0].mxu0
      %v670 = vadd.f32 %v432, %v669
      %v671 = vpop.f32.mrb[0].mxu0
      %v672 = vpop.f32.mrb[0].mxu0
      %v673 = vadd.f32 %v433, %v672
      %v674 = vpop.f32.mrb[0].mxu0
      %675 = vmatprep.mubr.bf16.mxu0 0
      %676 = vmatmul.mubr.bf16.gmra.mrb[0].mxu0 %v571
      %v677 = vpop.f32.mrb[0].mxu0
      %v678 = vadd.f32 %v434, %v677
      %v679 = vpop.f32.mrb[0].mxu0
      %v680 = vpop.f32.mrb[0].mxu0
      %v681 = vadd.f32 %v435, %v680
      %v682 = vpop.f32.mrb[0].mxu0
      %683 = vmatprep.mubr.bf16.mxu0 0
      %684 = vmatmul.mubr.bf16.gmra.mrb[0].mxu0 %v574
      %v685 = vpop.f32.mrb[0].mxu0
      %v686 = vadd.f32 %v436, %v685
      %v687 = vpop.f32.mrb[0].mxu0
      %v688 = vpop.f32.mrb[0].mxu0
      %v689 = vadd.f32 %v437, %v688
      %v690 = vpop.f32.mrb[0].mxu0
      %691 = vmatprep.mubr.bf16.mxu0 0
      %692 = vmatmul.mubr.bf16.gmra.mrb[0].mxu0 %v577
      %v693 = vpop.f32.mrb[0].mxu0
      %v694 = vadd.f32 %v438, %v693
      %v695 = vpop.f32.mrb[0].mxu0
      %v696 = vpop.f32.mrb[0].mxu0
      %v697 = vadd.f32 %v439, %v696
      %v698 = vpop.f32.mrb[0].mxu0
      %699 = vmatprep.mubr.bf16.mxu0 0
      %700 = vmatmul.mubr.bf16.gmra.mrb[0].mxu0 %v580
      %v701 = vpop.f32.mrb[0].mxu0
      %v702 = vadd.f32 %v440, %v701
      %v703 = vpop.f32.mrb[0].mxu0
      %v704 = vpop.f32.mrb[0].mxu0
      %v705 = vadd.f32 %v441, %v704
      %v706 = vpop.f32.mrb[0].mxu0
      %707 = vmatprep.mubr.bf16.mxu0 0
      %708 = vmatmul.mubr.bf16.gmra.mrb[0].mxu0 %v583
      %v709 = vpop.f32.mrb[0].mxu0
      %v710 = vadd.f32 %v442, %v709
      %v711 = vpop.f32.mrb[0].mxu0
      %v712 = vpop.f32.mrb[0].mxu0
      %v713 = vadd.f32 %v443, %v712
      %v714 = vpop.f32.mrb[0].mxu0
      %715 = vmatprep.mubr.bf16.mxu0 0
      %716 = vmatmul.mubr.bf16.gmra.mrb[0].mxu0 %v586
      %v717 = vpop.f32.mrb[0].mxu0
      %v718 = vadd.f32 %v444, %v717
      %v719 = vpop.f32.mrb[0].mxu0
      %v720 = vpop.f32.mrb[0].mxu0
      %v721 = vadd.f32 %v445, %v720
      %v722 = vpop.f32.mrb[0].mxu0
      %723 = vmatprep.mubr.bf16.mxu0 0
      %724 = vmatmul.mubr.bf16.gmra.mrb[0].mxu0 %v589
      %v725 = vpop.f32.mrb[0].mxu0
      %v726 = vadd.f32 %v446, %v725
      %v727 = vpop.f32.mrb[0].mxu0
      %v728 = vpop.f32.mrb[0].mxu0
      %v729 = vadd.f32 %v447, %v728
      %v730 = vpop.f32.mrb[0].mxu0
      %731 = vmatprep.mubr.bf16.mxu0 0
      %732 = vmatmul.mubr.bf16.gmra.mrb[0].mxu0 %v592
      %v733 = vpop.f32.mrb[0].mxu0
      %v734 = vadd.f32 %v448, %v733
      %v735 = vpop.f32.mrb[0].mxu0
      %v736 = vpop.f32.mrb[0].mxu0
      %v737 = vadd.f32 %v449, %v736
      %v738 = vpop.f32.mrb[0].mxu0
      %739 = vmatprep.mubr.bf16.mxu0 0
      %740 = vmatmul.mubr.bf16.gmra.mrb[0].mxu0 %v595
      %v741 = vpop.f32.mrb[0].mxu0
      %v742 = vadd.f32 %v450, %v741
      %v743 = vpop.f32.mrb[0].mxu0
      %v744 = vpop.f32.mrb[0].mxu0
      %v745 = vadd.f32 %v451, %v744
      %v746 = vpop.f32.mrb[0].mxu0
      %747 = vmatprep.mubr.bf16.mxu0 0
      %748 = vmatmul.mubr.bf16.gmra.mrb[0].mxu0 %v598
      %v749 = vpop.f32.mrb[0].mxu0
      %v750 = vadd.f32 %v452, %v749
      %v751 = vpop.f32.mrb[0].mxu0
      %v752 = vpop.f32.mrb[0].mxu0
      %v753 = vadd.f32 %v453, %v752
      %v754 = vpop.f32.mrb[0].mxu0
      %755 = vmatprep.mubr.bf16.mxu0 0
      %756 = vmatmul.mubr.bf16.gmra.mrb[0].mxu0 %v601
      %v757 = vpop.f32.mrb[0].mxu0
      %v758 = vadd.f32 %v454, %v757
      %v759 = vpop.f32.mrb[0].mxu0
      %v760 = vpop.f32.mrb[0].mxu0
      %v761 = vadd.f32 %v455, %v760
      %v762 = vpop.f32.mrb[0].mxu0
      %763 = vdwg.mxu0
      %vm764 = vcmask 130048
      %v765 = vsel %vm764, %v638, 0.0
      %v766 = vsel %vm764, %v641, 0.0
      %v767 = vadd.f32 %v765, %v766
      %v768 = vsel %vm764, %v646, 0.0
      %v769 = vadd.f32 %v767, %v768
      %v770 = vsel %vm764, %v649, 0.0
      %v771 = vadd.f32 %v769, %v770
      %v772 = vsel %vm764, %v654, 0.0
      %v773 = vadd.f32 %v771, %v772
      %v774 = vsel %vm764, %v657, 0.0
      %v775 = vadd.f32 %v773, %v774
      %v776 = vsel %vm764, %v662, 0.0
      %v777 = vadd.f32 %v775, %v776
      %v778 = vsel %vm764, %v665, 0.0
      %v779 = vadd.f32 %v777, %v778
      %v780 = vsel %vm764, %v670, 0.0
      %v781 = vadd.f32 %v779, %v780
      %v782 = vsel %vm764, %v673, 0.0
      %v783 = vadd.f32 %v781, %v782
      %v784 = vsel %vm764, %v678, 0.0
      %v785 = vadd.f32 %v783, %v784
      %v786 = vsel %vm764, %v681, 0.0
      %v787 = vadd.f32 %v785, %v786
      %v788 = vsel %vm764, %v686, 0.0
      %v789 = vadd.f32 %v787, %v788
      %v790 = vsel %vm764, %v689, 0.0
      %v791 = vadd.f32 %v789, %v790
      %v792 = vsel %vm764, %v694, 0.0
      %v793 = vadd.f32 %v791, %v792
      %v794 = vsel %vm764, %v697, 0.0
      %v795 = vadd.f32 %v793, %v794
      %v796 = vsel %vm764, %v702, 0.0
      %v797 = vadd.f32 %v795, %v796
      %v798 = vsel %vm764, %v705, 0.0
      %v799 = vadd.f32 %v797, %v798
      %v800 = vsel %vm764, %v710, 0.0
      %v801 = vadd.f32 %v799, %v800
      %v802 = vsel %vm764, %v713, 0.0
      %v803 = vadd.f32 %v801, %v802
      %v804 = vsel %vm764, %v718, 0.0
      %v805 = vadd.f32 %v803, %v804
      %v806 = vsel %vm764, %v721, 0.0
      %v807 = vadd.f32 %v805, %v806
      %v808 = vsel %vm764, %v726, 0.0
      %v809 = vadd.f32 %v807, %v808
      %v810 = vsel %vm764, %v729, 0.0
      %v811 = vadd.f32 %v809, %v810
      %v812 = vsel %vm764, %v734, 0.0
      %v813 = vadd.f32 %v811, %v812
      %v814 = vsel %vm764, %v737, 0.0
      %v815 = vadd.f32 %v813, %v814
      %v816 = vsel %vm764, %v742, 0.0
      %v817 = vadd.f32 %v815, %v816
      %v818 = vsel %vm764, %v745, 0.0
      %v819 = vadd.f32 %v817, %v818
      %v820 = vsel %vm764, %v750, 0.0
      %v821 = vadd.f32 %v819, %v820
      %v822 = vsel %vm764, %v753, 0.0
      %v823 = vadd.f32 %v821, %v822
      %v824 = vsel %vm764, %v758, 0.0
      %v825 = vadd.f32 %v823, %v824
      %v826 = vsel %vm764, %v761, 0.0
      %v827 = vadd.f32 %v825, %v826
      %v828 = vrot.slane %v827, 4
      %v829 = vadd.f32 %v827, %v828
      %v830 = vrot.slane %v829, 2
      %v831 = vadd.f32 %v829, %v830
      %v832 = vrot.slane %v831, 1
      %v833 = vadd.f32 %v831, %v832
      %v834 = vrcp.pop 256.0
      %v835 = vmul.f32 %v833, %v834
      %v836 = vmul.f32 %v638, %v638
      %v837 = vmul.f32 %v641, %v641
      %v838 = vmul.f32 %v646, %v646
      %v839 = vmul.f32 %v649, %v649
      %v840 = vmul.f32 %v654, %v654
      %v841 = vmul.f32 %v657, %v657
      %v842 = vmul.f32 %v662, %v662
      %v843 = vmul.f32 %v665, %v665
      %v844 = vmul.f32 %v670, %v670
      %v845 = vmul.f32 %v673, %v673
      %v846 = vmul.f32 %v678, %v678
      %v847 = vmul.f32 %v681, %v681
      %v848 = vmul.f32 %v686, %v686
      %v849 = vmul.f32 %v689, %v689
      %v850 = vmul.f32 %v694, %v694
      %v851 = vmul.f32 %v697, %v697
      %v852 = vmul.f32 %v702, %v702
      %v853 = vmul.f32 %v705, %v705
      %v854 = vmul.f32 %v710, %v710
      %v855 = vmul.f32 %v713, %v713
      %v856 = vmul.f32 %v718, %v718
      %v857 = vmul.f32 %v721, %v721
      %v858 = vmul.f32 %v726, %v726
      %v859 = vmul.f32 %v729, %v729
      %v860 = vmul.f32 %v734, %v734
      %v861 = vmul.f32 %v737, %v737
      %v862 = vmul.f32 %v742, %v742
      %v863 = vmul.f32 %v745, %v745
      %v864 = vmul.f32 %v750, %v750
      %v865 = vmul.f32 %v753, %v753
      %v866 = vmul.f32 %v758, %v758
      %v867 = vmul.f32 %v761, %v761
      %v868 = vsel %vm764, %v836, 0.0
      %v869 = vsel %vm764, %v837, 0.0
      %v870 = vadd.f32 %v868, %v869
      %v871 = vsel %vm764, %v838, 0.0
      %v872 = vadd.f32 %v870, %v871
      %v873 = vsel %vm764, %v839, 0.0
      %v874 = vadd.f32 %v872, %v873
      %v875 = vsel %vm764, %v840, 0.0
      %v876 = vadd.f32 %v874, %v875
      %v877 = vsel %vm764, %v841, 0.0
      %v878 = vadd.f32 %v876, %v877
      %v879 = vsel %vm764, %v842, 0.0
      %v880 = vadd.f32 %v878, %v879
      %v881 = vsel %vm764, %v843, 0.0
      %v882 = vadd.f32 %v880, %v881
      %v883 = vsel %vm764, %v844, 0.0
      %v884 = vadd.f32 %v882, %v883
      %v885 = vsel %vm764, %v845, 0.0
      %v886 = vadd.f32 %v884, %v885
      %v887 = vsel %vm764, %v846, 0.0
      %v888 = vadd.f32 %v886, %v887
      %v889 = vsel %vm764, %v847, 0.0
      %v890 = vadd.f32 %v888, %v889
      %v891 = vsel %vm764, %v848, 0.0
      %v892 = vadd.f32 %v890, %v891
      %v893 = vsel %vm764, %v849, 0.0
      %v894 = vadd.f32 %v892, %v893
      %v895 = vsel %vm764, %v850, 0.0
      %v896 = vadd.f32 %v894, %v895
      %v897 = vsel %vm764, %v851, 0.0
      %v898 = vadd.f32 %v896, %v897
      %v899 = vsel %vm764, %v852, 0.0
      %v900 = vadd.f32 %v898, %v899
      %v901 = vsel %vm764, %v853, 0.0
      %v902 = vadd.f32 %v900, %v901
      %v903 = vsel %vm764, %v854, 0.0
      %v904 = vadd.f32 %v902, %v903
      %v905 = vsel %vm764, %v855, 0.0
      %v906 = vadd.f32 %v904, %v905
      %v907 = vsel %vm764, %v856, 0.0
      %v908 = vadd.f32 %v906, %v907
      %v909 = vsel %vm764, %v857, 0.0
      %v910 = vadd.f32 %v908, %v909
      %v911 = vsel %vm764, %v858, 0.0
      %v912 = vadd.f32 %v910, %v911
      %v913 = vsel %vm764, %v859, 0.0
      %v914 = vadd.f32 %v912, %v913
      %v915 = vsel %vm764, %v860, 0.0
      %v916 = vadd.f32 %v914, %v915
      %v917 = vsel %vm764, %v861, 0.0
      %v918 = vadd.f32 %v916, %v917
      %v919 = vsel %vm764, %v862, 0.0
      %v920 = vadd.f32 %v918, %v919
      %v921 = vsel %vm764, %v863, 0.0
      %v922 = vadd.f32 %v920, %v921
      %v923 = vsel %vm764, %v864, 0.0
      %v924 = vadd.f32 %v922, %v923
      %v925 = vsel %vm764, %v865, 0.0
      %v926 = vadd.f32 %v924, %v925
      %v927 = vsel %vm764, %v866, 0.0
      %v928 = vadd.f32 %v926, %v927
      %v929 = vsel %vm764, %v867, 0.0
      %v930 = vadd.f32 %v928, %v929
      %v931 = vrot.slane %v930, 4
      %v932 = vadd.f32 %v930, %v931
      %v933 = vrot.slane %v932, 2
      %v934 = vadd.f32 %v932, %v933
      %v935 = vrot.slane %v934, 1
      %v936 = vadd.f32 %v934, %v935
      %v937 = vmul.f32 %v936, %v834
      %v938 = vmul.f32 %v835, %v835
      %v939 = vsub.f32 %v937, %v938
      %v940 = vsub.f32 %v638, %v835
      %v941 = vsub.f32 %v641, %v835
      %v942 = vsub.f32 %v646, %v835
      %v943 = vsub.f32 %v649, %v835
      %v944 = vsub.f32 %v654, %v835
      %v945 = vsub.f32 %v657, %v835
      %v946 = vsub.f32 %v662, %v835
      %v947 = vsub.f32 %v665, %v835
      %v948 = vsub.f32 %v670, %v835
      %v949 = vsub.f32 %v673, %v835
      %v950 = vsub.f32 %v678, %v835
      %v951 = vsub.f32 %v681, %v835
      %v952 = vsub.f32 %v686, %v835
      %v953 = vsub.f32 %v689, %v835
      %v954 = vsub.f32 %v694, %v835
      %v955 = vsub.f32 %v697, %v835
      %v956 = vsub.f32 %v702, %v835
      %v957 = vsub.f32 %v705, %v835
      %v958 = vsub.f32 %v710, %v835
      %v959 = vsub.f32 %v713, %v835
      %v960 = vsub.f32 %v718, %v835
      %v961 = vsub.f32 %v721, %v835
      %v962 = vsub.f32 %v726, %v835
      %v963 = vsub.f32 %v729, %v835
      %v964 = vsub.f32 %v734, %v835
      %v965 = vsub.f32 %v737, %v835
      %v966 = vsub.f32 %v742, %v835
      %v967 = vsub.f32 %v745, %v835
      %v968 = vsub.f32 %v750, %v835
      %v969 = vsub.f32 %v753, %v835
      %v970 = vsub.f32 %v758, %v835
      %v971 = vsub.f32 %v761, %v835
      %v972 = vadd.f32 %v939, 1e-05
      %v973 = vrsqrt.pop %v972
      %v974 = vmul.f32 %v940, %v973
      %v975 = vmul.f32 %v941, %v973
      %v976 = vmul.f32 %v942, %v973
      %v977 = vmul.f32 %v943, %v973
      %v978 = vmul.f32 %v944, %v973
      %v979 = vmul.f32 %v945, %v973
      %v980 = vmul.f32 %v946, %v973
      %v981 = vmul.f32 %v947, %v973
      %v982 = vmul.f32 %v948, %v973
      %v983 = vmul.f32 %v949, %v973
      %v984 = vmul.f32 %v950, %v973
      %v985 = vmul.f32 %v951, %v973
      %v986 = vmul.f32 %v952, %v973
      %v987 = vmul.f32 %v953, %v973
      %v988 = vmul.f32 %v954, %v973
      %v989 = vmul.f32 %v955, %v973
      %v990 = vmul.f32 %v956, %v973
      %v991 = vmul.f32 %v957, %v973
      %v992 = vmul.f32 %v958, %v973
      %v993 = vmul.f32 %v959, %v973
      %v994 = vmul.f32 %v960, %v973
      %v995 = vmul.f32 %v961, %v973
      %v996 = vmul.f32 %v962, %v973
      %v997 = vmul.f32 %v963, %v973
      %v998 = vmul.f32 %v964, %v973
      %v999 = vmul.f32 %v965, %v973
      %v1000 = vmul.f32 %v966, %v973
      %v1001 = vmul.f32 %v967, %v973
      %v1002 = vmul.f32 %v968, %v973
      %v1003 = vmul.f32 %v969, %v973
      %v1004 = vmul.f32 %v970, %v973
      %v1005 = vmul.f32 %v971, %v973
      %vm1006 = vcmp.gt.f32.partialorder %v974, 0.0
      %vm1007 = vcmp.gt.f32.partialorder %v975, 0.0
      %vm1008 = vcmp.gt.f32.partialorder %v976, 0.0
      %vm1009 = vcmp.gt.f32.partialorder %v977, 0.0
      %vm1010 = vcmp.gt.f32.partialorder %v978, 0.0
      %vm1011 = vcmp.gt.f32.partialorder %v979, 0.0
      %vm1012 = vcmp.gt.f32.partialorder %v980, 0.0
      %vm1013 = vcmp.gt.f32.partialorder %v981, 0.0
      %vm1014 = vcmp.gt.f32.partialorder %v982, 0.0
      %vm1015 = vcmp.gt.f32.partialorder %v983, 0.0
      %vm1016 = vcmp.gt.f32.partialorder %v984, 0.0
      %vm1017 = vcmp.gt.f32.partialorder %v985, 0.0
      %vm1018 = vcmp.gt.f32.partialorder %v986, 0.0
      %vm1019 = vcmp.gt.f32.partialorder %v987, 0.0
      %vm1020 = vcmp.gt.f32.partialorder %v988, 0.0
      %vm1021 = vcmp.gt.f32.partialorder %v989, 0.0
      %vm1022 = vcmp.gt.f32.partialorder %v990, 0.0
      %vm1023 = vcmp.gt.f32.partialorder %v991, 0.0
      %vm1024 = vcmp.gt.f32.partialorder %v992, 0.0
      %vm1025 = vcmp.gt.f32.partialorder %v993, 0.0
      %vm1026 = vcmp.gt.f32.partialorder %v994, 0.0
      %vm1027 = vcmp.gt.f32.partialorder %v995, 0.0
      %vm1028 = vcmp.gt.f32.partialorder %v996, 0.0
      %vm1029 = vcmp.gt.f32.partialorder %v997, 0.0
      %vm1030 = vcmp.gt.f32.partialorder %v998, 0.0
      %vm1031 = vcmp.gt.f32.partialorder %v999, 0.0
      %vm1032 = vcmp.gt.f32.partialorder %v1000, 0.0
      %vm1033 = vcmp.gt.f32.partialorder %v1001, 0.0
      %vm1034 = vcmp.gt.f32.partialorder %v1002, 0.0
      %vm1035 = vcmp.gt.f32.partialorder %v1003, 0.0
      %vm1036 = vcmp.gt.f32.partialorder %v1004, 0.0
      %vm1037 = vcmp.gt.f32.partialorder %v1005, 0.0
      %v1038 = vmul.f32 %v974, 0.2
      %v1039 = vmul.f32 %v975, 0.2
      %v1040 = vmul.f32 %v976, 0.2
      %v1041 = vmul.f32 %v977, 0.2
      %v1042 = vmul.f32 %v978, 0.2
      %v1043 = vmul.f32 %v979, 0.2
      %v1044 = vmul.f32 %v980, 0.2
      %v1045 = vmul.f32 %v981, 0.2
      %v1046 = vmul.f32 %v982, 0.2
      %v1047 = vmul.f32 %v983, 0.2
      %v1048 = vmul.f32 %v984, 0.2
      %v1049 = vmul.f32 %v985, 0.2
      %v1050 = vmul.f32 %v986, 0.2
      %v1051 = vmul.f32 %v987, 0.2
      %v1052 = vmul.f32 %v988, 0.2
      %v1053 = vmul.f32 %v989, 0.2
      %v1054 = vmul.f32 %v990, 0.2
      %v1055 = vmul.f32 %v991, 0.2
      %v1056 = vmul.f32 %v992, 0.2
      %v1057 = vmul.f32 %v993, 0.2
      %v1058 = vmul.f32 %v994, 0.2
      %v1059 = vmul.f32 %v995, 0.2
      %v1060 = vmul.f32 %v996, 0.2
      %v1061 = vmul.f32 %v997, 0.2
      %v1062 = vmul.f32 %v998, 0.2
      %v1063 = vmul.f32 %v999, 0.2
      %v1064 = vmul.f32 %v1000, 0.2
      %v1065 = vmul.f32 %v1001, 0.2
      %v1066 = vmul.f32 %v1002, 0.2
      %v1067 = vmul.f32 %v1003, 0.2
      %v1068 = vmul.f32 %v1004, 0.2
      %v1069 = vmul.f32 %v1005, 0.2
      %v1070 = vsel %vm1006, %v974, %v1038
      %v1071 = vsel %vm1007, %v975, %v1039
      %v1072 = vsel %vm1008, %v976, %v1040
      %v1073 = vsel %vm1009, %v977, %v1041
      %v1074 = vsel %vm1010, %v978, %v1042
      %v1075 = vsel %vm1011, %v979, %v1043
      %v1076 = vsel %vm1012, %v980, %v1044
      %v1077 = vsel %vm1013, %v981, %v1045
      %v1078 = vsel %vm1014, %v982, %v1046
      %v1079 = vsel %vm1015, %v983, %v1047
      %v1080 = vsel %vm1016, %v984, %v1048
      %v1081 = vsel %vm1017, %v985, %v1049
      %v1082 = vsel %vm1018, %v986, %v1050
      %v1083 = vsel %vm1019, %v987, %v1051
      %v1084 = vsel %vm1020, %v988, %v1052
      %v1085 = vsel %vm1021, %v989, %v1053
      %v1086 = vsel %vm1022, %v990, %v1054
      %v1087 = vsel %vm1023, %v991, %v1055
      %v1088 = vsel %vm1024, %v992, %v1056
      %v1089 = vsel %vm1025, %v993, %v1057
      %v1090 = vsel %vm1026, %v994, %v1058
      %v1091 = vsel %vm1027, %v995, %v1059
      %v1092 = vsel %vm1028, %v996, %v1060
      %v1093 = vsel %vm1029, %v997, %v1061
      %v1094 = vsel %vm1030, %v998, %v1062
      %v1095 = vsel %vm1031, %v999, %v1063
      %v1096 = vsel %vm1032, %v1000, %v1064
      %v1097 = vsel %vm1033, %v1001, %v1065
      %v1098 = vsel %vm1034, %v1002, %v1066
      %v1099 = vsel %vm1035, %v1003, %v1067
      %v1100 = vsel %vm1036, %v1004, %v1068
      %v1101 = vsel %vm1037, %v1005, %v1069
      %v1102 = vpack.c.bf16 %v1071, %v1070
      %v1103 = vpack.c.bf16 %v1073, %v1072
      %v1104 = vpack.c.bf16 %v1075, %v1074
      %v1105 = vpack.c.bf16 %v1077, %v1076
      %v1106 = vpack.c.bf16 %v1079, %v1078
      %v1107 = vpack.c.bf16 %v1081, %v1080
      %v1108 = vpack.c.bf16 %v1083, %v1082
      %v1109 = vpack.c.bf16 %v1085, %v1084
      %v1110 = vpack.c.bf16 %v1087, %v1086
      %v1111 = vpack.c.bf16 %v1089, %v1088
      %v1112 = vpack.c.bf16 %v1091, %v1090
      %v1113 = vpack.c.bf16 %v1093, %v1092
      %v1114 = vpack.c.bf16 %v1095, %v1094
      %v1115 = vpack.c.bf16 %v1097, %v1096
      %v1116 = vpack.c.bf16 %v1099, %v1098
      %v1117 = vpack.c.bf16 %v1101, %v1100
      %v1118 = vld [vmem:[%s3] sm:$0xff]
      %v1119 = vld [vmem:[%s3 + $0x8] sm:$0xff]
      %v1120 = vld [vmem:[%s3 + $0x10] sm:$0xff]
      %v1121 = vld [vmem:[%s3 + $0x18] sm:$0xff]
      %v1122 = vld [vmem:[%s3 + $0x20] sm:$0xff]
      %v1123 = vld [vmem:[%s3 + $0x28] sm:$0xff]
      %v1124 = vld [vmem:[%s3 + $0x30] sm:$0xff]
      %v1125 = vld [vmem:[%s3 + $0x38] sm:$0xff]
      %v1126 = vld [vmem:[%s3 + $0x40] sm:$0xff]
      %v1127 = vld [vmem:[%s3 + $0x48] sm:$0xff]
      %v1128 = vld [vmem:[%s3 + $0x50] sm:$0xff]
      %v1129 = vld [vmem:[%s3 + $0x58] sm:$0xff]
      %v1130 = vld [vmem:[%s3 + $0x60] sm:$0xff]
      %v1131 = vld [vmem:[%s3 + $0x68] sm:$0xff]
      %v1132 = vld [vmem:[%s3 + $0x70] sm:$0xff]
      %v1133 = vld [vmem:[%s3 + $0x78] sm:$0xff]
      %v1134 = vld [vmem:[%s3 + $0x80] sm:$0xff]
      %v1135 = vld [vmem:[%s3 + $0x88] sm:$0xff]
      %v1136 = vld [vmem:[%s3 + $0x90] sm:$0xff]
      %v1137 = vld [vmem:[%s3 + $0x98] sm:$0xff]
      %v1138 = vld [vmem:[%s3 + $0xa0] sm:$0xff]
      %v1139 = vld [vmem:[%s3 + $0xa8] sm:$0xff]
      %v1140 = vld [vmem:[%s3 + $0xb0] sm:$0xff]
      %v1141 = vld [vmem:[%s3 + $0xb8] sm:$0xff]
      %v1142 = vld [vmem:[%s3 + $0xc0] sm:$0xff]
      %v1143 = vld [vmem:[%s3 + $0xc8] sm:$0xff]
      %v1144 = vld [vmem:[%s3 + $0xd0] sm:$0xff]
      %v1145 = vld [vmem:[%s3 + $0xd8] sm:$0xff]
      %v1146 = vld [vmem:[%s3 + $0xe0] sm:$0xff]
      %v1147 = vld [vmem:[%s3 + $0xe8] sm:$0xff]
      %v1148 = vld [vmem:[%s3 + $0xf0] sm:$0xff]
      %v1149 = vld [vmem:[%s3 + $0xf8] sm:$0xff]
      %v1150 = vld [vmem:[%s3 + $0x100] sm:$0xff]
      %v1151 = vld [vmem:[%s3 + $0x108] sm:$0xff]
      %v1152 = vld [vmem:[%s3 + $0x110] sm:$0xff]
      %v1153 = vld [vmem:[%s3 + $0x118] sm:$0xff]
      %v1154 = vld [vmem:[%s3 + $0x120] sm:$0xff]
      %v1155 = vld [vmem:[%s3 + $0x128] sm:$0xff]
      %v1156 = vld [vmem:[%s3 + $0x130] sm:$0xff]
      %v1157 = vld [vmem:[%s3 + $0x138] sm:$0xff]
      %v1158 = vld [vmem:[%s3 + $0x140] sm:$0xff]
      %v1159 = vld [vmem:[%s3 + $0x148] sm:$0xff]
      %v1160 = vld [vmem:[%s3 + $0x150] sm:$0xff]
      %v1161 = vld [vmem:[%s3 + $0x158] sm:$0xff]
      %v1162 = vld [vmem:[%s3 + $0x160] sm:$0xff]
      %v1163 = vld [vmem:[%s3 + $0x168] sm:$0xff]
      %v1164 = vld [vmem:[%s3 + $0x170] sm:$0xff]
      %v1165 = vld [vmem:[%s3 + $0x178] sm:$0xff]
      %v1166 = vld [vmem:[%s3 + $0x180] sm:$0xff]
      %v1167 = vld [vmem:[%s3 + $0x188] sm:$0xff]
      %v1168 = vld [vmem:[%s3 + $0x190] sm:$0xff]
      %v1169 = vld [vmem:[%s3 + $0x198] sm:$0xff]
      %v1170 = vld [vmem:[%s3 + $0x1a0] sm:$0xff]
      %v1171 = vld [vmem:[%s3 + $0x1a8] sm:$0xff]
      %v1172 = vld [vmem:[%s3 + $0x1b0] sm:$0xff]
      %v1173 = vld [vmem:[%s3 + $0x1b8] sm:$0xff]
      %v1174 = vld [vmem:[%s3 + $0x1c0] sm:$0xff]
      %v1175 = vld [vmem:[%s3 + $0x1c8] sm:$0xff]
      %v1176 = vld [vmem:[%s3 + $0x1d0] sm:$0xff]
      %v1177 = vld [vmem:[%s3 + $0x1d8] sm:$0xff]
      %v1178 = vld [vmem:[%s3 + $0x1e0] sm:$0xff]
      %v1179 = vld [vmem:[%s3 + $0x1e8] sm:$0xff]
      %v1180 = vld [vmem:[%s3 + $0x1f0] sm:$0xff]
      %v1181 = vld [vmem:[%s3 + $0x1f8] sm:$0xff]
      %v1182 = vld [vmem:[%s3 + $0x200] sm:$0xff]
      %v1183 = vld [vmem:[%s3 + $0x208] sm:$0xff]
      %v1184 = vld [vmem:[%s3 + $0x210] sm:$0xff]
      %v1185 = vld [vmem:[%s3 + $0x218] sm:$0xff]
      %v1186 = vld [vmem:[%s3 + $0x220] sm:$0xff]
      %v1187 = vld [vmem:[%s3 + $0x228] sm:$0xff]
      %v1188 = vld [vmem:[%s3 + $0x230] sm:$0xff]
      %v1189 = vld [vmem:[%s3 + $0x238] sm:$0xff]
      %v1190 = vld [vmem:[%s3 + $0x240] sm:$0xff]
      %v1191 = vld [vmem:[%s3 + $0x248] sm:$0xff]
      %v1192 = vld [vmem:[%s3 + $0x250] sm:$0xff]
      %v1193 = vld [vmem:[%s3 + $0x258] sm:$0xff]
      %v1194 = vld [vmem:[%s3 + $0x260] sm:$0xff]
      %v1195 = vld [vmem:[%s3 + $0x268] sm:$0xff]
      %v1196 = vld [vmem:[%s3 + $0x270] sm:$0xff]
      %v1197 = vld [vmem:[%s3 + $0x278] sm:$0xff]
      %v1198 = vld [vmem:[%s3 + $0x280] sm:$0xff]
      %v1199 = vld [vmem:[%s3 + $0x288] sm:$0xff]
      %v1200 = vld [vmem:[%s3 + $0x290] sm:$0xff]
      %v1201 = vld [vmem:[%s3 + $0x298] sm:$0xff]
      %v1202 = vld [vmem:[%s3 + $0x2a0] sm:$0xff]
      %v1203 = vld [vmem:[%s3 + $0x2a8] sm:$0xff]
      %v1204 = vld [vmem:[%s3 + $0x2b0] sm:$0xff]
      %v1205 = vld [vmem:[%s3 + $0x2b8] sm:$0xff]
      %v1206 = vld [vmem:[%s3 + $0x2c0] sm:$0xff]
      %v1207 = vld [vmem:[%s3 + $0x2c8] sm:$0xff]
      %v1208 = vld [vmem:[%s3 + $0x2d0] sm:$0xff]
      %v1209 = vld [vmem:[%s3 + $0x2d8] sm:$0xff]
      %v1210 = vld [vmem:[%s3 + $0x2e0] sm:$0xff]
      %v1211 = vld [vmem:[%s3 + $0x2e8] sm:$0xff]
      %v1212 = vld [vmem:[%s3 + $0x2f0] sm:$0xff]
      %v1213 = vld [vmem:[%s3 + $0x2f8] sm:$0xff]
      %v1214 = vld [vmem:[%s3 + $0x300] sm:$0xff]
      %v1215 = vld [vmem:[%s3 + $0x308] sm:$0xff]
      %v1216 = vld [vmem:[%s3 + $0x310] sm:$0xff]
      %v1217 = vld [vmem:[%s3 + $0x318] sm:$0xff]
      %v1218 = vld [vmem:[%s3 + $0x320] sm:$0xff]
      %v1219 = vld [vmem:[%s3 + $0x328] sm:$0xff]
      %v1220 = vld [vmem:[%s3 + $0x330] sm:$0xff]
      %v1221 = vld [vmem:[%s3 + $0x338] sm:$0xff]
      %v1222 = vld [vmem:[%s3 + $0x340] sm:$0xff]
      %v1223 = vld [vmem:[%s3 + $0x348] sm:$0xff]
      %v1224 = vld [vmem:[%s3 + $0x350] sm:$0xff]
      %v1225 = vld [vmem:[%s3 + $0x358] sm:$0xff]
      %v1226 = vld [vmem:[%s3 + $0x360] sm:$0xff]
      %v1227 = vld [vmem:[%s3 + $0x368] sm:$0xff]
      %v1228 = vld [vmem:[%s3 + $0x370] sm:$0xff]
      %v1229 = vld [vmem:[%s3 + $0x378] sm:$0xff]
      %v1230 = vld [vmem:[%s3 + $0x380] sm:$0xff]
      %v1231 = vld [vmem:[%s3 + $0x388] sm:$0xff]
      %v1232 = vld [vmem:[%s3 + $0x390] sm:$0xff]
      %v1233 = vld [vmem:[%s3 + $0x398] sm:$0xff]
      %v1234 = vld [vmem:[%s3 + $0x3a0] sm:$0xff]
      %v1235 = vld [vmem:[%s3 + $0x3a8] sm:$0xff]
      %v1236 = vld [vmem:[%s3 + $0x3b0] sm:$0xff]
      %v1237 = vld [vmem:[%s3 + $0x3b8] sm:$0xff]
      %v1238 = vld [vmem:[%s3 + $0x3c0] sm:$0xff]
      %v1239 = vld [vmem:[%s3 + $0x3c8] sm:$0xff]
      %v1240 = vld [vmem:[%s3 + $0x3d0] sm:$0xff]
      %v1241 = vld [vmem:[%s3 + $0x3d8] sm:$0xff]
      %v1242 = vld [vmem:[%s3 + $0x3e0] sm:$0xff]
      %v1243 = vld [vmem:[%s3 + $0x3e8] sm:$0xff]
      %v1244 = vld [vmem:[%s3 + $0x3f0] sm:$0xff]
      %v1245 = vld [vmem:[%s3 + $0x3f8] sm:$0xff]
      %v1374 = vunpack.c.l.b16 %v1118
      %v1375 = vunpack.c.h.b16 %v1118
      %v1376 = vunpack.c.l.b16 %v1119
      %v1377 = vunpack.c.h.b16 %v1119
      %v1378 = vunpack.c.l.b16 %v1120
      %v1379 = vunpack.c.h.b16 %v1120
      %v1380 = vunpack.c.l.b16 %v1121
      %v1381 = vunpack.c.h.b16 %v1121
      %v1382 = vunpack.c.l.b16 %v1122
      %v1383 = vunpack.c.h.b16 %v1122
      %v1384 = vunpack.c.l.b16 %v1123
      %v1385 = vunpack.c.h.b16 %v1123
      %v1386 = vunpack.c.l.b16 %v1124
      %v1387 = vunpack.c.h.b16 %v1124
      %v1388 = vunpack.c.l.b16 %v1125
      %v1389 = vunpack.c.h.b16 %v1125
      %v1390 = vunpack.c.l.b16 %v1126
      %v1391 = vunpack.c.h.b16 %v1126
      %v1392 = vunpack.c.l.b16 %v1127
      %v1393 = vunpack.c.h.b16 %v1127
      %v1394 = vunpack.c.l.b16 %v1128
      %v1395 = vunpack.c.h.b16 %v1128
      %v1396 = vunpack.c.l.b16 %v1129
      %v1397 = vunpack.c.h.b16 %v1129
      %v1398 = vunpack.c.l.b16 %v1130
      %v1399 = vunpack.c.h.b16 %v1130
      %v1400 = vunpack.c.l.b16 %v1131
      %v1401 = vunpack.c.h.b16 %v1131
      %v1402 = vunpack.c.l.b16 %v1132
      %v1403 = vunpack.c.h.b16 %v1132
      %v1404 = vunpack.c.l.b16 %v1133
      %v1405 = vunpack.c.h.b16 %v1133
      %v1406 = vunpack.c.l.b16 %v1134
      %v1407 = vunpack.c.h.b16 %v1134
      %v1408 = vunpack.c.l.b16 %v1135
      %v1409 = vunpack.c.h.b16 %v1135
      %v1410 = vunpack.c.l.b16 %v1136
      %v1411 = vunpack.c.h.b16 %v1136
      %v1412 = vunpack.c.l.b16 %v1137
      %v1413 = vunpack.c.h.b16 %v1137
      %v1414 = vunpack.c.l.b16 %v1138
      %v1415 = vunpack.c.h.b16 %v1138
      %v1416 = vunpack.c.l.b16 %v1139
      %v1417 = vunpack.c.h.b16 %v1139
      %v1418 = vunpack.c.l.b16 %v1140
      %v1419 = vunpack.c.h.b16 %v1140
      %v1420 = vunpack.c.l.b16 %v1141
      %v1421 = vunpack.c.h.b16 %v1141
      %v1422 = vunpack.c.l.b16 %v1142
      %v1423 = vunpack.c.h.b16 %v1142
      %v1424 = vunpack.c.l.b16 %v1143
      %v1425 = vunpack.c.h.b16 %v1143
      %v1426 = vunpack.c.l.b16 %v1144
      %v1427 = vunpack.c.h.b16 %v1144
      %v1428 = vunpack.c.l.b16 %v1145
      %v1429 = vunpack.c.h.b16 %v1145
      %v1430 = vunpack.c.l.b16 %v1146
      %v1431 = vunpack.c.h.b16 %v1146
      %v1432 = vunpack.c.l.b16 %v1147
      %v1433 = vunpack.c.h.b16 %v1147
      %v1434 = vunpack.c.l.b16 %v1148
      %v1435 = vunpack.c.h.b16 %v1148
      %v1436 = vunpack.c.l.b16 %v1149
      %v1437 = vunpack.c.h.b16 %v1149
      %v1438 = vunpack.c.l.b16 %v1150
      %v1439 = vunpack.c.h.b16 %v1150
      %v1440 = vunpack.c.l.b16 %v1151
      %v1441 = vunpack.c.h.b16 %v1151
      %v1442 = vunpack.c.l.b16 %v1152
      %v1443 = vunpack.c.h.b16 %v1152
      %v1444 = vunpack.c.l.b16 %v1153
      %v1445 = vunpack.c.h.b16 %v1153
      %v1446 = vunpack.c.l.b16 %v1154
      %v1447 = vunpack.c.h.b16 %v1154
      %v1448 = vunpack.c.l.b16 %v1155
      %v1449 = vunpack.c.h.b16 %v1155
      %v1450 = vunpack.c.l.b16 %v1156
      %v1451 = vunpack.c.h.b16 %v1156
      %v1452 = vunpack.c.l.b16 %v1157
      %v1453 = vunpack.c.h.b16 %v1157
      %v1454 = vunpack.c.l.b16 %v1158
      %v1455 = vunpack.c.h.b16 %v1158
      %v1456 = vunpack.c.l.b16 %v1159
      %v1457 = vunpack.c.h.b16 %v1159
      %v1458 = vunpack.c.l.b16 %v1160
      %v1459 = vunpack.c.h.b16 %v1160
      %v1460 = vunpack.c.l.b16 %v1161
      %v1461 = vunpack.c.h.b16 %v1161
      %v1462 = vunpack.c.l.b16 %v1162
      %v1463 = vunpack.c.h.b16 %v1162
      %v1464 = vunpack.c.l.b16 %v1163
      %v1465 = vunpack.c.h.b16 %v1163
      %v1466 = vunpack.c.l.b16 %v1164
      %v1467 = vunpack.c.h.b16 %v1164
      %v1468 = vunpack.c.l.b16 %v1165
      %v1469 = vunpack.c.h.b16 %v1165
      %v1470 = vunpack.c.l.b16 %v1166
      %v1471 = vunpack.c.h.b16 %v1166
      %v1472 = vunpack.c.l.b16 %v1167
      %v1473 = vunpack.c.h.b16 %v1167
      %v1474 = vunpack.c.l.b16 %v1168
      %v1475 = vunpack.c.h.b16 %v1168
      %v1476 = vunpack.c.l.b16 %v1169
      %v1477 = vunpack.c.h.b16 %v1169
      %v1478 = vunpack.c.l.b16 %v1170
      %v1479 = vunpack.c.h.b16 %v1170
      %v1480 = vunpack.c.l.b16 %v1171
      %v1481 = vunpack.c.h.b16 %v1171
      %v1482 = vunpack.c.l.b16 %v1172
      %v1483 = vunpack.c.h.b16 %v1172
      %v1484 = vunpack.c.l.b16 %v1173
      %v1485 = vunpack.c.h.b16 %v1173
      %v1486 = vunpack.c.l.b16 %v1174
      %v1487 = vunpack.c.h.b16 %v1174
      %v1488 = vunpack.c.l.b16 %v1175
      %v1489 = vunpack.c.h.b16 %v1175
      %v1490 = vunpack.c.l.b16 %v1176
      %v1491 = vunpack.c.h.b16 %v1176
      %v1492 = vunpack.c.l.b16 %v1177
      %v1493 = vunpack.c.h.b16 %v1177
      %v1494 = vunpack.c.l.b16 %v1178
      %v1495 = vunpack.c.h.b16 %v1178
      %v1496 = vunpack.c.l.b16 %v1179
      %v1497 = vunpack.c.h.b16 %v1179
      %v1498 = vunpack.c.l.b16 %v1180
      %v1499 = vunpack.c.h.b16 %v1180
      %v1500 = vunpack.c.l.b16 %v1181
      %v1501 = vunpack.c.h.b16 %v1181
      %v1502 = vunpack.c.l.b16 %v1182
      %v1503 = vunpack.c.h.b16 %v1182
      %v1504 = vunpack.c.l.b16 %v1183
      %v1505 = vunpack.c.h.b16 %v1183
      %v1506 = vunpack.c.l.b16 %v1184
      %v1507 = vunpack.c.h.b16 %v1184
      %v1508 = vunpack.c.l.b16 %v1185
      %v1509 = vunpack.c.h.b16 %v1185
      %v1510 = vunpack.c.l.b16 %v1186
      %v1511 = vunpack.c.h.b16 %v1186
      %v1512 = vunpack.c.l.b16 %v1187
      %v1513 = vunpack.c.h.b16 %v1187
      %v1514 = vunpack.c.l.b16 %v1188
      %v1515 = vunpack.c.h.b16 %v1188
      %v1516 = vunpack.c.l.b16 %v1189
      %v1517 = vunpack.c.h.b16 %v1189
      %v1518 = vunpack.c.l.b16 %v1190
      %v1519 = vunpack.c.h.b16 %v1190
      %v1520 = vunpack.c.l.b16 %v1191
      %v1521 = vunpack.c.h.b16 %v1191
      %v1522 = vunpack.c.l.b16 %v1192
      %v1523 = vunpack.c.h.b16 %v1192
      %v1524 = vunpack.c.l.b16 %v1193
      %v1525 = vunpack.c.h.b16 %v1193
      %v1526 = vunpack.c.l.b16 %v1194
      %v1527 = vunpack.c.h.b16 %v1194
      %v1528 = vunpack.c.l.b16 %v1195
      %v1529 = vunpack.c.h.b16 %v1195
      %v1530 = vunpack.c.l.b16 %v1196
      %v1531 = vunpack.c.h.b16 %v1196
      %v1532 = vunpack.c.l.b16 %v1197
      %v1533 = vunpack.c.h.b16 %v1197
      %v1534 = vunpack.c.l.b16 %v1198
      %v1535 = vunpack.c.h.b16 %v1198
      %v1536 = vunpack.c.l.b16 %v1199
      %v1537 = vunpack.c.h.b16 %v1199
      %v1538 = vunpack.c.l.b16 %v1200
      %v1539 = vunpack.c.h.b16 %v1200
      %v1540 = vunpack.c.l.b16 %v1201
      %v1541 = vunpack.c.h.b16 %v1201
      %v1542 = vunpack.c.l.b16 %v1202
      %v1543 = vunpack.c.h.b16 %v1202
      %v1544 = vunpack.c.l.b16 %v1203
      %v1545 = vunpack.c.h.b16 %v1203
      %v1546 = vunpack.c.l.b16 %v1204
      %v1547 = vunpack.c.h.b16 %v1204
      %v1548 = vunpack.c.l.b16 %v1205
      %v1549 = vunpack.c.h.b16 %v1205
      %v1550 = vunpack.c.l.b16 %v1206
      %v1551 = vunpack.c.h.b16 %v1206
      %v1552 = vunpack.c.l.b16 %v1207
      %v1553 = vunpack.c.h.b16 %v1207
      %v1554 = vunpack.c.l.b16 %v1208
      %v1555 = vunpack.c.h.b16 %v1208
      %v1556 = vunpack.c.l.b16 %v1209
      %v1557 = vunpack.c.h.b16 %v1209
      %v1558 = vunpack.c.l.b16 %v1210
      %v1559 = vunpack.c.h.b16 %v1210
      %v1560 = vunpack.c.l.b16 %v1211
      %v1561 = vunpack.c.h.b16 %v1211
      %v1562 = vunpack.c.l.b16 %v1212
      %v1563 = vunpack.c.h.b16 %v1212
      %v1564 = vunpack.c.l.b16 %v1213
      %v1565 = vunpack.c.h.b16 %v1213
      %v1566 = vunpack.c.l.b16 %v1214
      %v1567 = vunpack.c.h.b16 %v1214
      %v1568 = vunpack.c.l.b16 %v1215
      %v1569 = vunpack.c.h.b16 %v1215
      %v1570 = vunpack.c.l.b16 %v1216
      %v1571 = vunpack.c.h.b16 %v1216
      %v1572 = vunpack.c.l.b16 %v1217
      %v1573 = vunpack.c.h.b16 %v1217
      %v1574 = vunpack.c.l.b16 %v1218
      %v1575 = vunpack.c.h.b16 %v1218
      %v1576 = vunpack.c.l.b16 %v1219
      %v1577 = vunpack.c.h.b16 %v1219
      %v1578 = vunpack.c.l.b16 %v1220
      %v1579 = vunpack.c.h.b16 %v1220
      %v1580 = vunpack.c.l.b16 %v1221
      %v1581 = vunpack.c.h.b16 %v1221
      %v1582 = vunpack.c.l.b16 %v1222
      %v1583 = vunpack.c.h.b16 %v1222
      %v1584 = vunpack.c.l.b16 %v1223
      %v1585 = vunpack.c.h.b16 %v1223
      %v1586 = vunpack.c.l.b16 %v1224
      %v1587 = vunpack.c.h.b16 %v1224
      %v1588 = vunpack.c.l.b16 %v1225
      %v1589 = vunpack.c.h.b16 %v1225
      %v1590 = vunpack.c.l.b16 %v1226
      %v1591 = vunpack.c.h.b16 %v1226
      %v1592 = vunpack.c.l.b16 %v1227
      %v1593 = vunpack.c.h.b16 %v1227
      %v1594 = vunpack.c.l.b16 %v1228
      %v1595 = vunpack.c.h.b16 %v1228
      %v1596 = vunpack.c.l.b16 %v1229
      %v1597 = vunpack.c.h.b16 %v1229
      %v1598 = vunpack.c.l.b16 %v1230
      %v1599 = vunpack.c.h.b16 %v1230
      %v1600 = vunpack.c.l.b16 %v1231
      %v1601 = vunpack.c.h.b16 %v1231
      %v1602 = vunpack.c.l.b16 %v1232
      %v1603 = vunpack.c.h.b16 %v1232
      %v1604 = vunpack.c.l.b16 %v1233
      %v1605 = vunpack.c.h.b16 %v1233
      %v1606 = vunpack.c.l.b16 %v1234
      %v1607 = vunpack.c.h.b16 %v1234
      %v1608 = vunpack.c.l.b16 %v1235
      %v1609 = vunpack.c.h.b16 %v1235
      %v1610 = vunpack.c.l.b16 %v1236
      %v1611 = vunpack.c.h.b16 %v1236
      %v1612 = vunpack.c.l.b16 %v1237
      %v1613 = vunpack.c.h.b16 %v1237
      %v1614 = vunpack.c.l.b16 %v1238
      %v1615 = vunpack.c.h.b16 %v1238
      %v1616 = vunpack.c.l.b16 %v1239
      %v1617 = vunpack.c.h.b16 %v1239
      %v1618 = vunpack.c.l.b16 %v1240
      %v1619 = vunpack.c.h.b16 %v1240
      %v1620 = vunpack.c.l.b16 %v1241
      %v1621 = vunpack.c.h.b16 %v1241
      %v1622 = vunpack.c.l.b16 %v1242
      %v1623 = vunpack.c.h.b16 %v1242
      %v1624 = vunpack.c.l.b16 %v1243
      %v1625 = vunpack.c.h.b16 %v1243
      %v1626 = vunpack.c.l.b16 %v1244
      %v1627 = vunpack.c.h.b16 %v1244
      %v1628 = vunpack.c.l.b16 %v1245
      %v1629 = vunpack.c.h.b16 %v1245
      %v1630 = vpack.c.b16 %v1376, %v1374
      %v1631 = vpack.c.b16 %v1377, %v1375
      %v1632 = vpack.c.b16 %v1380, %v1378
      %v1633 = vpack.c.b16 %v1381, %v1379
      %v1634 = vpack.c.b16 %v1384, %v1382
      %v1635 = vpack.c.b16 %v1385, %v1383
      %v1636 = vpack.c.b16 %v1388, %v1386
      %v1637 = vpack.c.b16 %v1389, %v1387
      %v1638 = vpack.c.b16 %v1392, %v1390
      %v1639 = vpack.c.b16 %v1393, %v1391
      %v1640 = vpack.c.b16 %v1396, %v1394
      %v1641 = vpack.c.b16 %v1397, %v1395
      %v1642 = vpack.c.b16 %v1400, %v1398
      %v1643 = vpack.c.b16 %v1401, %v1399
      %v1644 = vpack.c.b16 %v1404, %v1402
      %v1645 = vpack.c.b16 %v1405, %v1403
      %v1646 = vpack.c.b16 %v1408, %v1406
      %v1647 = vpack.c.b16 %v1409, %v1407
      %v1648 = vpack.c.b16 %v1412, %v1410
      %v1649 = vpack.c.b16 %v1413, %v1411
      %v1650 = vpack.c.b16 %v1416, %v1414
      %v1651 = vpack.c.b16 %v1417, %v1415
      %v1652 = vpack.c.b16 %v1420, %v1418
      %v1653 = vpack.c.b16 %v1421, %v1419
      %v1654 = vpack.c.b16 %v1424, %v1422
      %v1655 = vpack.c.b16 %v1425, %v1423
      %v1656 = vpack.c.b16 %v1428, %v1426
      %v1657 = vpack.c.b16 %v1429, %v1427
      %v1658 = vpack.c.b16 %v1432, %v1430
      %v1659 = vpack.c.b16 %v1433, %v1431
      %v1660 = vpack.c.b16 %v1436, %v1434
      %v1661 = vpack.c.b16 %v1437, %v1435
      %v1662 = vpack.c.b16 %v1440, %v1438
      %v1663 = vpack.c.b16 %v1441, %v1439
      %v1664 = vpack.c.b16 %v1444, %v1442
      %v1665 = vpack.c.b16 %v1445, %v1443
      %v1666 = vpack.c.b16 %v1448, %v1446
      %v1667 = vpack.c.b16 %v1449, %v1447
      %v1668 = vpack.c.b16 %v1452, %v1450
      %v1669 = vpack.c.b16 %v1453, %v1451
      %v1670 = vpack.c.b16 %v1456, %v1454
      %v1671 = vpack.c.b16 %v1457, %v1455
      %v1672 = vpack.c.b16 %v1460, %v1458
      %v1673 = vpack.c.b16 %v1461, %v1459
      %v1674 = vpack.c.b16 %v1464, %v1462
      %v1675 = vpack.c.b16 %v1465, %v1463
      %v1676 = vpack.c.b16 %v1468, %v1466
      %v1677 = vpack.c.b16 %v1469, %v1467
      %v1678 = vpack.c.b16 %v1472, %v1470
      %v1679 = vpack.c.b16 %v1473, %v1471
      %v1680 = vpack.c.b16 %v1476, %v1474
      %v1681 = vpack.c.b16 %v1477, %v1475
      %v1682 = vpack.c.b16 %v1480, %v1478
      %v1683 = vpack.c.b16 %v1481, %v1479
      %v1684 = vpack.c.b16 %v1484, %v1482
      %v1685 = vpack.c.b16 %v1485, %v1483
      %v1686 = vpack.c.b16 %v1488, %v1486
      %v1687 = vpack.c.b16 %v1489, %v1487
      %v1688 = vpack.c.b16 %v1492, %v1490
      %v1689 = vpack.c.b16 %v1493, %v1491
      %v1690 = vpack.c.b16 %v1496, %v1494
      %v1691 = vpack.c.b16 %v1497, %v1495
      %v1692 = vpack.c.b16 %v1500, %v1498
      %v1693 = vpack.c.b16 %v1501, %v1499
      %v1694 = vpack.c.b16 %v1504, %v1502
      %v1695 = vpack.c.b16 %v1505, %v1503
      %v1696 = vpack.c.b16 %v1508, %v1506
      %v1697 = vpack.c.b16 %v1509, %v1507
      %v1698 = vpack.c.b16 %v1512, %v1510
      %v1699 = vpack.c.b16 %v1513, %v1511
      %v1700 = vpack.c.b16 %v1516, %v1514
      %v1701 = vpack.c.b16 %v1517, %v1515
      %v1702 = vpack.c.b16 %v1520, %v1518
      %v1703 = vpack.c.b16 %v1521, %v1519
      %v1704 = vpack.c.b16 %v1524, %v1522
      %v1705 = vpack.c.b16 %v1525, %v1523
      %v1706 = vpack.c.b16 %v1528, %v1526
      %v1707 = vpack.c.b16 %v1529, %v1527
      %v1708 = vpack.c.b16 %v1532, %v1530
      %v1709 = vpack.c.b16 %v1533, %v1531
      %v1710 = vpack.c.b16 %v1536, %v1534
      %v1711 = vpack.c.b16 %v1537, %v1535
      %v1712 = vpack.c.b16 %v1540, %v1538
      %v1713 = vpack.c.b16 %v1541, %v1539
      %v1714 = vpack.c.b16 %v1544, %v1542
      %v1715 = vpack.c.b16 %v1545, %v1543
      %v1716 = vpack.c.b16 %v1548, %v1546
      %v1717 = vpack.c.b16 %v1549, %v1547
      %v1718 = vpack.c.b16 %v1552, %v1550
      %v1719 = vpack.c.b16 %v1553, %v1551
      %v1720 = vpack.c.b16 %v1556, %v1554
      %v1721 = vpack.c.b16 %v1557, %v1555
      %v1722 = vpack.c.b16 %v1560, %v1558
      %v1723 = vpack.c.b16 %v1561, %v1559
      %v1724 = vpack.c.b16 %v1564, %v1562
      %v1725 = vpack.c.b16 %v1565, %v1563
      %v1726 = vpack.c.b16 %v1568, %v1566
      %v1727 = vpack.c.b16 %v1569, %v1567
      %v1728 = vpack.c.b16 %v1572, %v1570
      %v1729 = vpack.c.b16 %v1573, %v1571
      %v1730 = vpack.c.b16 %v1576, %v1574
      %v1731 = vpack.c.b16 %v1577, %v1575
      %v1732 = vpack.c.b16 %v1580, %v1578
      %v1733 = vpack.c.b16 %v1581, %v1579
      %v1734 = vpack.c.b16 %v1584, %v1582
      %v1735 = vpack.c.b16 %v1585, %v1583
      %v1736 = vpack.c.b16 %v1588, %v1586
      %v1737 = vpack.c.b16 %v1589, %v1587
      %v1738 = vpack.c.b16 %v1592, %v1590
      %v1739 = vpack.c.b16 %v1593, %v1591
      %v1740 = vpack.c.b16 %v1596, %v1594
      %v1741 = vpack.c.b16 %v1597, %v1595
      %v1742 = vpack.c.b16 %v1600, %v1598
      %v1743 = vpack.c.b16 %v1601, %v1599
      %v1744 = vpack.c.b16 %v1604, %v1602
      %v1745 = vpack.c.b16 %v1605, %v1603
      %v1746 = vpack.c.b16 %v1608, %v1606
      %v1747 = vpack.c.b16 %v1609, %v1607
      %v1748 = vpack.c.b16 %v1612, %v1610
      %v1749 = vpack.c.b16 %v1613, %v1611
      %v1750 = vpack.c.b16 %v1616, %v1614
      %v1751 = vpack.c.b16 %v1617, %v1615
      %v1752 = vpack.c.b16 %v1620, %v1618
      %v1753 = vpack.c.b16 %v1621, %v1619
      %v1754 = vpack.c.b16 %v1624, %v1622
      %v1755 = vpack.c.b16 %v1625, %v1623
      %v1756 = vpack.c.b16 %v1628, %v1626
      %v1757 = vpack.c.b16 %v1629, %v1627
      %1886 = vmatprep.subr.bf16.mxu0 0
      %1887 = vmatpush1.bf16.msra.mxu0 %v1102
      %1888 = vmatprep.subr.bf16.mxu0 0
      %1889 = vmatpush1.bf16.msra.mxu0 %v1103
      %1890 = vmatprep.subr.bf16.mxu0 0
      %1891 = vmatpush1.bf16.msra.mxu0 %v1104
      %1892 = vmatprep.subr.bf16.mxu0 0
      %1893 = vmatpush1.bf16.msra.mxu0 %v1105
      %1894 = vmatprep.subr.bf16.mxu0 0
      %1895 = vmatpush1.bf16.msra.mxu0 %v1106
      %1896 = vmatprep.subr.bf16.mxu0 0
      %1897 = vmatpush1.bf16.msra.mxu0 %v1107
      %1898 = vmatprep.subr.bf16.mxu0 0
      %1899 = vmatpush1.bf16.msra.mxu0 %v1108
      %1900 = vmatprep.subr.bf16.mxu0 0
      %1901 = vmatpush1.bf16.msra.mxu0 %v1109
      %1902 = vmatprep.subr.bf16.mxu0 0
      %1903 = vmatpush1.bf16.msra.mxu0 %v1110
      %1904 = vmatprep.subr.bf16.mxu0 0
      %1905 = vmatpush1.bf16.msra.mxu0 %v1111
      %1906 = vmatprep.subr.bf16.mxu0 0
      %1907 = vmatpush1.bf16.msra.mxu0 %v1112
      %1908 = vmatprep.subr.bf16.mxu0 0
      %1909 = vmatpush1.bf16.msra.mxu0 %v1113
      %1910 = vmatprep.subr.bf16.mxu0 0
      %1911 = vmatpush1.bf16.msra.mxu0 %v1114
      %1912 = vmatprep.subr.bf16.mxu0 0
      %1913 = vmatpush1.bf16.msra.mxu0 %v1115
      %1914 = vmatprep.subr.bf16.mxu0 0
      %1915 = vmatpush1.bf16.msra.mxu0 %v1116
      %1916 = vmatprep.subr.bf16.mxu0 0
      %1917 = vmatpush1.bf16.msra.mxu0 %v1117
      %1918 = vmatprep.mubr.bf16.mxu0 %v1631
      %1919 = vmatmul.mubr.bf16.gmra.mrb[0].mxu0 %v1630
      %v1920 = vpop.f32.mrb[0].mxu0
      %v1921 = vadd.f32 0.0, %v1920
      %v1922 = vpop.f32.mrb[0].mxu0
      %v1923 = vpop.f32.mrb[0].mxu0
      %v1924 = vadd.f32 0.0, %v1923
      %v1925 = vpop.f32.mrb[0].mxu0
      %1926 = vmatprep.mubr.bf16.mxu0 %v1633
      %1927 = vmatmul.mubr.bf16.gmra.mrb[0].mxu0 %v1632
      %v1928 = vpop.f32.mrb[0].mxu0
      %v1929 = vadd.f32 0.0, %v1928
      %v1930 = vpop.f32.mrb[0].mxu0
      %v1931 = vpop.f32.mrb[0].mxu0
      %v1932 = vadd.f32 0.0, %v1931
      %v1933 = vpop.f32.mrb[0].mxu0
      %1934 = vmatprep.mubr.bf16.mxu0 %v1635
      %1935 = vmatmul.mubr.bf16.gmra.mrb[0].mxu0 %v1634
      %v1936 = vpop.f32.mrb[0].mxu0
      %v1937 = vadd.f32 0.0, %v1936
      %v1938 = vpop.f32.mrb[0].mxu0
      %v1939 = vpop.f32.mrb[0].mxu0
      %v1940 = vadd.f32 0.0, %v1939
      %v1941 = vpop.f32.mrb[0].mxu0
      %1942 = vmatprep.mubr.bf16.mxu0 %v1637
      %1943 = vmatmul.mubr.bf16.gmra.mrb[0].mxu0 %v1636
      %v1944 = vpop.f32.mrb[0].mxu0
      %v1945 = vadd.f32 0.0, %v1944
      %v1946 = vpop.f32.mrb[0].mxu0
      %v1947 = vpop.f32.mrb[0].mxu0
      %v1948 = vadd.f32 0.0, %v1947
      %v1949 = vpop.f32.mrb[0].mxu0
      %1950 = vmatprep.mubr.bf16.mxu0 %v1639
      %1951 = vmatmul.mubr.bf16.gmra.mrb[0].mxu0 %v1638
      %v1952 = vpop.f32.mrb[0].mxu0
      %v1953 = vadd.f32 0.0, %v1952
      %v1954 = vpop.f32.mrb[0].mxu0
      %v1955 = vpop.f32.mrb[0].mxu0
      %v1956 = vadd.f32 0.0, %v1955
      %v1957 = vpop.f32.mrb[0].mxu0
      %1958 = vmatprep.mubr.bf16.mxu0 %v1641
      %1959 = vmatmul.mubr.bf16.gmra.mrb[0].mxu0 %v1640
      %v1960 = vpop.f32.mrb[0].mxu0
      %v1961 = vadd.f32 0.0, %v1960
      %v1962 = vpop.f32.mrb[0].mxu0
      %v1963 = vpop.f32.mrb[0].mxu0
      %v1964 = vadd.f32 0.0, %v1963
      %v1965 = vpop.f32.mrb[0].mxu0
      %1966 = vmatprep.mubr.bf16.mxu0 %v1643
      %1967 = vmatmul.mubr.bf16.gmra.mrb[0].mxu0 %v1642
      %v1968 = vpop.f32.mrb[0].mxu0
      %v1969 = vadd.f32 0.0, %v1968
      %v1970 = vpop.f32.mrb[0].mxu0
      %v1971 = vpop.f32.mrb[0].mxu0
      %v1972 = vadd.f32 0.0, %v1971
      %v1973 = vpop.f32.mrb[0].mxu0
      %1974 = vmatprep.mubr.bf16.mxu0 %v1645
      %1975 = vmatmul.mubr.bf16.gmra.mrb[0].mxu0 %v1644
      %v1976 = vpop.f32.mrb[0].mxu0
      %v1977 = vadd.f32 0.0, %v1976
      %v1978 = vpop.f32.mrb[0].mxu0
      %v1979 = vpop.f32.mrb[0].mxu0
      %v1980 = vadd.f32 0.0, %v1979
      %v1981 = vpop.f32.mrb[0].mxu0
      %1982 = vmatprep.mubr.bf16.mxu0 %v1647
      %1983 = vmatmul.mubr.bf16.gmra.mrb[0].mxu0 %v1646
      %v1984 = vpop.f32.mrb[0].mxu0
      %v1985 = vadd.f32 0.0, %v1984
      %v1986 = vpop.f32.mrb[0].mxu0
      %v1987 = vpop.f32.mrb[0].mxu0
      %v1988 = vadd.f32 0.0, %v1987
      %v1989 = vpop.f32.mrb[0].mxu0
      %1990 = vmatprep.mubr.bf16.mxu0 %v1649
      %1991 = vmatmul.mubr.bf16.gmra.mrb[0].mxu0 %v1648
      %v1992 = vpop.f32.mrb[0].mxu0
      %v1993 = vadd.f32 0.0, %v1992
      %v1994 = vpop.f32.mrb[0].mxu0
      %v1995 = vpop.f32.mrb[0].mxu0
      %v1996 = vadd.f32 0.0, %v1995
      %v1997 = vpop.f32.mrb[0].mxu0
      %1998 = vmatprep.mubr.bf16.mxu0 %v1651
      %1999 = vmatmul.mubr.bf16.gmra.mrb[0].mxu0 %v1650
      %v2000 = vpop.f32.mrb[0].mxu0
      %v2001 = vadd.f32 0.0, %v2000
      %v2002 = vpop.f32.mrb[0].mxu0
      %v2003 = vpop.f32.mrb[0].mxu0
      %v2004 = vadd.f32 0.0, %v2003
      %v2005 = vpop.f32.mrb[0].mxu0
      %2006 = vmatprep.mubr.bf16.mxu0 %v1653
      %2007 = vmatmul.mubr.bf16.gmra.mrb[0].mxu0 %v1652
      %v2008 = vpop.f32.mrb[0].mxu0
      %v2009 = vadd.f32 0.0, %v2008
      %v2010 = vpop.f32.mrb[0].mxu0
      %v2011 = vpop.f32.mrb[0].mxu0
      %v2012 = vadd.f32 0.0, %v2011
      %v2013 = vpop.f32.mrb[0].mxu0
      %2014 = vmatprep.mubr.bf16.mxu0 %v1655
      %2015 = vmatmul.mubr.bf16.gmra.mrb[0].mxu0 %v1654
      %v2016 = vpop.f32.mrb[0].mxu0
      %v2017 = vadd.f32 0.0, %v2016
      %v2018 = vpop.f32.mrb[0].mxu0
      %v2019 = vpop.f32.mrb[0].mxu0
      %v2020 = vadd.f32 0.0, %v2019
      %v2021 = vpop.f32.mrb[0].mxu0
      %2022 = vmatprep.mubr.bf16.mxu0 %v1657
      %2023 = vmatmul.mubr.bf16.gmra.mrb[0].mxu0 %v1656
      %v2024 = vpop.f32.mrb[0].mxu0
      %v2025 = vadd.f32 0.0, %v2024
      %v2026 = vpop.f32.mrb[0].mxu0
      %v2027 = vpop.f32.mrb[0].mxu0
      %v2028 = vadd.f32 0.0, %v2027
      %v2029 = vpop.f32.mrb[0].mxu0
      %2030 = vmatprep.mubr.bf16.mxu0 %v1659
      %2031 = vmatmul.mubr.bf16.gmra.mrb[0].mxu0 %v1658
      %v2032 = vpop.f32.mrb[0].mxu0
      %v2033 = vadd.f32 0.0, %v2032
      %v2034 = vpop.f32.mrb[0].mxu0
      %v2035 = vpop.f32.mrb[0].mxu0
      %v2036 = vadd.f32 0.0, %v2035
      %v2037 = vpop.f32.mrb[0].mxu0
      %2038 = vmatprep.mubr.bf16.mxu0 %v1661
      %2039 = vmatmul.mubr.bf16.gmra.mrb[0].mxu0 %v1660
      %v2040 = vpop.f32.mrb[0].mxu0
      %v2041 = vadd.f32 0.0, %v2040
      %v2042 = vpop.f32.mrb[0].mxu0
      %v2043 = vpop.f32.mrb[0].mxu0
      %v2044 = vadd.f32 0.0, %v2043
      %v2045 = vpop.f32.mrb[0].mxu0
      %2046 = vmatprep.mubr.bf16.mxu0 %v1663
      %2047 = vmatmul.mubr.bf16.gmra.mrb[0].mxu0 %v1662
      %v2048 = vpop.f32.mrb[0].mxu0
      %v2049 = vadd.f32 0.0, %v2048
      %v2050 = vpop.f32.mrb[0].mxu0
      %v2051 = vpop.f32.mrb[0].mxu0
      %v2052 = vadd.f32 0.0, %v2051
      %v2053 = vpop.f32.mrb[0].mxu0
      %2054 = vmatprep.mubr.bf16.mxu0 %v1665
      %2055 = vmatmul.mubr.bf16.gmra.mrb[0].mxu0 %v1664
      %v2056 = vpop.f32.mrb[0].mxu0
      %v2057 = vadd.f32 0.0, %v2056
      %v2058 = vpop.f32.mrb[0].mxu0
      %v2059 = vpop.f32.mrb[0].mxu0
      %v2060 = vadd.f32 0.0, %v2059
      %v2061 = vpop.f32.mrb[0].mxu0
      %2062 = vmatprep.mubr.bf16.mxu0 %v1667
      %2063 = vmatmul.mubr.bf16.gmra.mrb[0].mxu0 %v1666
      %v2064 = vpop.f32.mrb[0].mxu0
      %v2065 = vadd.f32 0.0, %v2064
      %v2066 = vpop.f32.mrb[0].mxu0
      %v2067 = vpop.f32.mrb[0].mxu0
      %v2068 = vadd.f32 0.0, %v2067
      %v2069 = vpop.f32.mrb[0].mxu0
      %2070 = vmatprep.mubr.bf16.mxu0 %v1669
      %2071 = vmatmul.mubr.bf16.gmra.mrb[0].mxu0 %v1668
      %v2072 = vpop.f32.mrb[0].mxu0
      %v2073 = vadd.f32 0.0, %v2072
      %v2074 = vpop.f32.mrb[0].mxu0
      %v2075 = vpop.f32.mrb[0].mxu0
      %v2076 = vadd.f32 0.0, %v2075
      %v2077 = vpop.f32.mrb[0].mxu0
      %2078 = vmatprep.mubr.bf16.mxu0 %v1671
      %2079 = vmatmul.mubr.bf16.gmra.mrb[0].mxu0 %v1670
      %v2080 = vpop.f32.mrb[0].mxu0
      %v2081 = vadd.f32 0.0, %v2080
      %v2082 = vpop.f32.mrb[0].mxu0
      %v2083 = vpop.f32.mrb[0].mxu0
      %v2084 = vadd.f32 0.0, %v2083
      %v2085 = vpop.f32.mrb[0].mxu0
      %2086 = vmatprep.mubr.bf16.mxu0 %v1673
      %2087 = vmatmul.mubr.bf16.gmra.mrb[0].mxu0 %v1672
      %v2088 = vpop.f32.mrb[0].mxu0
      %v2089 = vadd.f32 0.0, %v2088
      %v2090 = vpop.f32.mrb[0].mxu0
      %v2091 = vpop.f32.mrb[0].mxu0
      %v2092 = vadd.f32 0.0, %v2091
      %v2093 = vpop.f32.mrb[0].mxu0
      %2094 = vmatprep.mubr.bf16.mxu0 %v1675
      %2095 = vmatmul.mubr.bf16.gmra.mrb[0].mxu0 %v1674
      %v2096 = vpop.f32.mrb[0].mxu0
      %v2097 = vadd.f32 0.0, %v2096
      %v2098 = vpop.f32.mrb[0].mxu0
      %v2099 = vpop.f32.mrb[0].mxu0
      %v2100 = vadd.f32 0.0, %v2099
      %v2101 = vpop.f32.mrb[0].mxu0
      %2102 = vmatprep.mubr.bf16.mxu0 %v1677
      %2103 = vmatmul.mubr.bf16.gmra.mrb[0].mxu0 %v1676
      %v2104 = vpop.f32.mrb[0].mxu0
      %v2105 = vadd.f32 0.0, %v2104
      %v2106 = vpop.f32.mrb[0].mxu0
      %v2107 = vpop.f32.mrb[0].mxu0
      %v2108 = vadd.f32 0.0, %v2107
      %v2109 = vpop.f32.mrb[0].mxu0
      %2110 = vmatprep.mubr.bf16.mxu0 %v1679
      %2111 = vmatmul.mubr.bf16.gmra.mrb[0].mxu0 %v1678
      %v2112 = vpop.f32.mrb[0].mxu0
      %v2113 = vadd.f32 0.0, %v2112
      %v2114 = vpop.f32.mrb[0].mxu0
      %v2115 = vpop.f32.mrb[0].mxu0
      %v2116 = vadd.f32 0.0, %v2115
      %v2117 = vpop.f32.mrb[0].mxu0
      %2118 = vmatprep.mubr.bf16.mxu0 %v1681
      %2119 = vmatmul.mubr.bf16.gmra.mrb[0].mxu0 %v1680
      %v2120 = vpop.f32.mrb[0].mxu0
      %v2121 = vadd.f32 0.0, %v2120
      %v2122 = vpop.f32.mrb[0].mxu0
      %v2123 = vpop.f32.mrb[0].mxu0
      %v2124 = vadd.f32 0.0, %v2123
      %v2125 = vpop.f32.mrb[0].mxu0
      %2126 = vmatprep.mubr.bf16.mxu0 %v1683
      %2127 = vmatmul.mubr.bf16.gmra.mrb[0].mxu0 %v1682
      %v2128 = vpop.f32.mrb[0].mxu0
      %v2129 = vadd.f32 0.0, %v2128
      %v2130 = vpop.f32.mrb[0].mxu0
      %v2131 = vpop.f32.mrb[0].mxu0
      %v2132 = vadd.f32 0.0, %v2131
      %v2133 = vpop.f32.mrb[0].mxu0
      %2134 = vmatprep.mubr.bf16.mxu0 %v1685
      %2135 = vmatmul.mubr.bf16.gmra.mrb[0].mxu0 %v1684
      %v2136 = vpop.f32.mrb[0].mxu0
      %v2137 = vadd.f32 0.0, %v2136
      %v2138 = vpop.f32.mrb[0].mxu0
      %v2139 = vpop.f32.mrb[0].mxu0
      %v2140 = vadd.f32 0.0, %v2139
      %v2141 = vpop.f32.mrb[0].mxu0
      %2142 = vmatprep.mubr.bf16.mxu0 %v1687
      %2143 = vmatmul.mubr.bf16.gmra.mrb[0].mxu0 %v1686
      %v2144 = vpop.f32.mrb[0].mxu0
      %v2145 = vadd.f32 0.0, %v2144
      %v2146 = vpop.f32.mrb[0].mxu0
      %v2147 = vpop.f32.mrb[0].mxu0
      %v2148 = vadd.f32 0.0, %v2147
      %v2149 = vpop.f32.mrb[0].mxu0
      %2150 = vmatprep.mubr.bf16.mxu0 %v1689
      %2151 = vmatmul.mubr.bf16.gmra.mrb[0].mxu0 %v1688
      %v2152 = vpop.f32.mrb[0].mxu0
      %v2153 = vadd.f32 0.0, %v2152
      %v2154 = vpop.f32.mrb[0].mxu0
      %v2155 = vpop.f32.mrb[0].mxu0
      %v2156 = vadd.f32 0.0, %v2155
      %v2157 = vpop.f32.mrb[0].mxu0
      %2158 = vmatprep.mubr.bf16.mxu0 %v1691
      %2159 = vmatmul.mubr.bf16.gmra.mrb[0].mxu0 %v1690
      %v2160 = vpop.f32.mrb[0].mxu0
      %v2161 = vadd.f32 0.0, %v2160
      %v2162 = vpop.f32.mrb[0].mxu0
      %v2163 = vpop.f32.mrb[0].mxu0
      %v2164 = vadd.f32 0.0, %v2163
      %v2165 = vpop.f32.mrb[0].mxu0
      %2166 = vmatprep.mubr.bf16.mxu0 %v1693
      %2167 = vmatmul.mubr.bf16.gmra.mrb[0].mxu0 %v1692
      %v2168 = vpop.f32.mrb[0].mxu0
      %v2169 = vadd.f32 0.0, %v2168
      %v2170 = vpop.f32.mrb[0].mxu0
      %v2171 = vpop.f32.mrb[0].mxu0
      %v2172 = vadd.f32 0.0, %v2171
      %v2173 = vpop.f32.mrb[0].mxu0
      %2174 = vmatprep.mubr.bf16.mxu0 %v1695
      %2175 = vmatmul.mubr.bf16.gmra.mrb[0].mxu0 %v1694
      %v2176 = vpop.f32.mrb[0].mxu0
      %v2177 = vadd.f32 0.0, %v2176
      %v2178 = vpop.f32.mrb[0].mxu0
      %v2179 = vpop.f32.mrb[0].mxu0
      %v2180 = vadd.f32 0.0, %v2179
      %v2181 = vpop.f32.mrb[0].mxu0
      %2182 = vmatprep.mubr.bf16.mxu0 %v1697
      %2183 = vmatmul.mubr.bf16.gmra.mrb[0].mxu0 %v1696
      %v2184 = vpop.f32.mrb[0].mxu0
      %v2185 = vadd.f32 0.0, %v2184
      %v2186 = vpop.f32.mrb[0].mxu0
      %v2187 = vpop.f32.mrb[0].mxu0
      %v2188 = vadd.f32 0.0, %v2187
      %v2189 = vpop.f32.mrb[0].mxu0
      %2190 = vmatprep.mubr.bf16.mxu0 %v1699
      %2191 = vmatmul.mubr.bf16.gmra.mrb[0].mxu0 %v1698
      %v2192 = vpop.f32.mrb[0].mxu0
      %v2193 = vadd.f32 0.0, %v2192
      %v2194 = vpop.f32.mrb[0].mxu0
      %v2195 = vpop.f32.mrb[0].mxu0
      %v2196 = vadd.f32 0.0, %v2195
      %v2197 = vpop.f32.mrb[0].mxu0
      %2198 = vmatprep.mubr.bf16.mxu0 %v1701
      %2199 = vmatmul.mubr.bf16.gmra.mrb[0].mxu0 %v1700
      %v2200 = vpop.f32.mrb[0].mxu0
      %v2201 = vadd.f32 0.0, %v2200
      %v2202 = vpop.f32.mrb[0].mxu0
      %v2203 = vpop.f32.mrb[0].mxu0
      %v2204 = vadd.f32 0.0, %v2203
      %v2205 = vpop.f32.mrb[0].mxu0
      %2206 = vmatprep.mubr.bf16.mxu0 %v1703
      %2207 = vmatmul.mubr.bf16.gmra.mrb[0].mxu0 %v1702
      %v2208 = vpop.f32.mrb[0].mxu0
      %v2209 = vadd.f32 0.0, %v2208
      %v2210 = vpop.f32.mrb[0].mxu0
      %v2211 = vpop.f32.mrb[0].mxu0
      %v2212 = vadd.f32 0.0, %v2211
      %v2213 = vpop.f32.mrb[0].mxu0
      %2214 = vmatprep.mubr.bf16.mxu0 %v1705
      %2215 = vmatmul.mubr.bf16.gmra.mrb[0].mxu0 %v1704
      %v2216 = vpop.f32.mrb[0].mxu0
      %v2217 = vadd.f32 0.0, %v2216
      %v2218 = vpop.f32.mrb[0].mxu0
      %v2219 = vpop.f32.mrb[0].mxu0
      %v2220 = vadd.f32 0.0, %v2219
      %v2221 = vpop.f32.mrb[0].mxu0
      %2222 = vmatprep.mubr.bf16.mxu0 %v1707
      %2223 = vmatmul.mubr.bf16.gmra.mrb[0].mxu0 %v1706
      %v2224 = vpop.f32.mrb[0].mxu0
      %v2225 = vadd.f32 0.0, %v2224
      %v2226 = vpop.f32.mrb[0].mxu0
      %v2227 = vpop.f32.mrb[0].mxu0
      %v2228 = vadd.f32 0.0, %v2227
      %v2229 = vpop.f32.mrb[0].mxu0
      %2230 = vmatprep.mubr.bf16.mxu0 %v1709
      %2231 = vmatmul.mubr.bf16.gmra.mrb[0].mxu0 %v1708
      %v2232 = vpop.f32.mrb[0].mxu0
      %v2233 = vadd.f32 0.0, %v2232
      %v2234 = vpop.f32.mrb[0].mxu0
      %v2235 = vpop.f32.mrb[0].mxu0
      %v2236 = vadd.f32 0.0, %v2235
      %v2237 = vpop.f32.mrb[0].mxu0
      %2238 = vmatprep.mubr.bf16.mxu0 %v1711
      %2239 = vmatmul.mubr.bf16.gmra.mrb[0].mxu0 %v1710
      %v2240 = vpop.f32.mrb[0].mxu0
      %v2241 = vadd.f32 0.0, %v2240
      %v2242 = vpop.f32.mrb[0].mxu0
      %v2243 = vpop.f32.mrb[0].mxu0
      %v2244 = vadd.f32 0.0, %v2243
      %v2245 = vpop.f32.mrb[0].mxu0
      %2246 = vmatprep.mubr.bf16.mxu0 %v1713
      %2247 = vmatmul.mubr.bf16.gmra.mrb[0].mxu0 %v1712
      %v2248 = vpop.f32.mrb[0].mxu0
      %v2249 = vadd.f32 0.0, %v2248
      %v2250 = vpop.f32.mrb[0].mxu0
      %v2251 = vpop.f32.mrb[0].mxu0
      %v2252 = vadd.f32 0.0, %v2251
      %v2253 = vpop.f32.mrb[0].mxu0
      %2254 = vmatprep.mubr.bf16.mxu0 %v1715
      %2255 = vmatmul.mubr.bf16.gmra.mrb[0].mxu0 %v1714
      %v2256 = vpop.f32.mrb[0].mxu0
      %v2257 = vadd.f32 0.0, %v2256
      %v2258 = vpop.f32.mrb[0].mxu0
      %v2259 = vpop.f32.mrb[0].mxu0
      %v2260 = vadd.f32 0.0, %v2259
      %v2261 = vpop.f32.mrb[0].mxu0
      %2262 = vmatprep.mubr.bf16.mxu0 %v1717
      %2263 = vmatmul.mubr.bf16.gmra.mrb[0].mxu0 %v1716
      %v2264 = vpop.f32.mrb[0].mxu0
      %v2265 = vadd.f32 0.0, %v2264
      %v2266 = vpop.f32.mrb[0].mxu0
      %v2267 = vpop.f32.mrb[0].mxu0
      %v2268 = vadd.f32 0.0, %v2267
      %v2269 = vpop.f32.mrb[0].mxu0
      %2270 = vmatprep.mubr.bf16.mxu0 %v1719
      %2271 = vmatmul.mubr.bf16.gmra.mrb[0].mxu0 %v1718
      %v2272 = vpop.f32.mrb[0].mxu0
      %v2273 = vadd.f32 0.0, %v2272
      %v2274 = vpop.f32.mrb[0].mxu0
      %v2275 = vpop.f32.mrb[0].mxu0
      %v2276 = vadd.f32 0.0, %v2275
      %v2277 = vpop.f32.mrb[0].mxu0
      %2278 = vmatprep.mubr.bf16.mxu0 %v1721
      %2279 = vmatmul.mubr.bf16.gmra.mrb[0].mxu0 %v1720
      %v2280 = vpop.f32.mrb[0].mxu0
      %v2281 = vadd.f32 0.0, %v2280
      %v2282 = vpop.f32.mrb[0].mxu0
      %v2283 = vpop.f32.mrb[0].mxu0
      %v2284 = vadd.f32 0.0, %v2283
      %v2285 = vpop.f32.mrb[0].mxu0
      %2286 = vmatprep.mubr.bf16.mxu0 %v1723
      %2287 = vmatmul.mubr.bf16.gmra.mrb[0].mxu0 %v1722
      %v2288 = vpop.f32.mrb[0].mxu0
      %v2289 = vadd.f32 0.0, %v2288
      %v2290 = vpop.f32.mrb[0].mxu0
      %v2291 = vpop.f32.mrb[0].mxu0
      %v2292 = vadd.f32 0.0, %v2291
      %v2293 = vpop.f32.mrb[0].mxu0
      %2294 = vmatprep.mubr.bf16.mxu0 %v1725
      %2295 = vmatmul.mubr.bf16.gmra.mrb[0].mxu0 %v1724
      %v2296 = vpop.f32.mrb[0].mxu0
      %v2297 = vadd.f32 0.0, %v2296
      %v2298 = vpop.f32.mrb[0].mxu0
      %v2299 = vpop.f32.mrb[0].mxu0
      %v2300 = vadd.f32 0.0, %v2299
      %v2301 = vpop.f32.mrb[0].mxu0
      %2302 = vmatprep.mubr.bf16.mxu0 %v1727
      %2303 = vmatmul.mubr.bf16.gmra.mrb[0].mxu0 %v1726
      %v2304 = vpop.f32.mrb[0].mxu0
      %v2305 = vadd.f32 0.0, %v2304
      %v2306 = vpop.f32.mrb[0].mxu0
      %v2307 = vpop.f32.mrb[0].mxu0
      %v2308 = vadd.f32 0.0, %v2307
      %v2309 = vpop.f32.mrb[0].mxu0
      %2310 = vmatprep.mubr.bf16.mxu0 %v1729
      %2311 = vmatmul.mubr.bf16.gmra.mrb[0].mxu0 %v1728
      %v2312 = vpop.f32.mrb[0].mxu0
      %v2313 = vadd.f32 0.0, %v2312
      %v2314 = vpop.f32.mrb[0].mxu0
      %v2315 = vpop.f32.mrb[0].mxu0
      %v2316 = vadd.f32 0.0, %v2315
      %v2317 = vpop.f32.mrb[0].mxu0
      %2318 = vmatprep.mubr.bf16.mxu0 %v1731
      %2319 = vmatmul.mubr.bf16.gmra.mrb[0].mxu0 %v1730
      %v2320 = vpop.f32.mrb[0].mxu0
      %v2321 = vadd.f32 0.0, %v2320
      %v2322 = vpop.f32.mrb[0].mxu0
      %v2323 = vpop.f32.mrb[0].mxu0
      %v2324 = vadd.f32 0.0, %v2323
      %v2325 = vpop.f32.mrb[0].mxu0
      %2326 = vmatprep.mubr.bf16.mxu0 %v1733
      %2327 = vmatmul.mubr.bf16.gmra.mrb[0].mxu0 %v1732
      %v2328 = vpop.f32.mrb[0].mxu0
      %v2329 = vadd.f32 0.0, %v2328
      %v2330 = vpop.f32.mrb[0].mxu0
      %v2331 = vpop.f32.mrb[0].mxu0
      %v2332 = vadd.f32 0.0, %v2331
      %v2333 = vpop.f32.mrb[0].mxu0
      %2334 = vmatprep.mubr.bf16.mxu0 %v1735
      %2335 = vmatmul.mubr.bf16.gmra.mrb[0].mxu0 %v1734
      %v2336 = vpop.f32.mrb[0].mxu0
      %v2337 = vadd.f32 0.0, %v2336
      %v2338 = vpop.f32.mrb[0].mxu0
      %v2339 = vpop.f32.mrb[0].mxu0
      %v2340 = vadd.f32 0.0, %v2339
      %v2341 = vpop.f32.mrb[0].mxu0
      %2342 = vmatprep.mubr.bf16.mxu0 %v1737
      %2343 = vmatmul.mubr.bf16.gmra.mrb[0].mxu0 %v1736
      %v2344 = vpop.f32.mrb[0].mxu0
      %v2345 = vadd.f32 0.0, %v2344
      %v2346 = vpop.f32.mrb[0].mxu0
      %v2347 = vpop.f32.mrb[0].mxu0
      %v2348 = vadd.f32 0.0, %v2347
      %v2349 = vpop.f32.mrb[0].mxu0
      %2350 = vmatprep.mubr.bf16.mxu0 %v1739
      %2351 = vmatmul.mubr.bf16.gmra.mrb[0].mxu0 %v1738
      %v2352 = vpop.f32.mrb[0].mxu0
      %v2353 = vadd.f32 0.0, %v2352
      %v2354 = vpop.f32.mrb[0].mxu0
      %v2355 = vpop.f32.mrb[0].mxu0
      %v2356 = vadd.f32 0.0, %v2355
      %v2357 = vpop.f32.mrb[0].mxu0
      %2358 = vmatprep.mubr.bf16.mxu0 %v1741
      %2359 = vmatmul.mubr.bf16.gmra.mrb[0].mxu0 %v1740
      %v2360 = vpop.f32.mrb[0].mxu0
      %v2361 = vadd.f32 0.0, %v2360
      %v2362 = vpop.f32.mrb[0].mxu0
      %v2363 = vpop.f32.mrb[0].mxu0
      %v2364 = vadd.f32 0.0, %v2363
      %v2365 = vpop.f32.mrb[0].mxu0
      %2366 = vmatprep.mubr.bf16.mxu0 %v1743
      %2367 = vmatmul.mubr.bf16.gmra.mrb[0].mxu0 %v1742
      %v2368 = vpop.f32.mrb[0].mxu0
      %v2369 = vadd.f32 0.0, %v2368
      %v2370 = vpop.f32.mrb[0].mxu0
      %v2371 = vpop.f32.mrb[0].mxu0
      %v2372 = vadd.f32 0.0, %v2371
      %v2373 = vpop.f32.mrb[0].mxu0
      %2374 = vmatprep.mubr.bf16.mxu0 %v1745
      %2375 = vmatmul.mubr.bf16.gmra.mrb[0].mxu0 %v1744
      %v2376 = vpop.f32.mrb[0].mxu0
      %v2377 = vadd.f32 0.0, %v2376
      %v2378 = vpop.f32.mrb[0].mxu0
      %v2379 = vpop.f32.mrb[0].mxu0
      %v2380 = vadd.f32 0.0, %v2379
      %v2381 = vpop.f32.mrb[0].mxu0
      %2382 = vmatprep.mubr.bf16.mxu0 %v1747
      %2383 = vmatmul.mubr.bf16.gmra.mrb[0].mxu0 %v1746
      %v2384 = vpop.f32.mrb[0].mxu0
      %v2385 = vadd.f32 0.0, %v2384
      %v2386 = vpop.f32.mrb[0].mxu0
      %v2387 = vpop.f32.mrb[0].mxu0
      %v2388 = vadd.f32 0.0, %v2387
      %v2389 = vpop.f32.mrb[0].mxu0
      %2390 = vmatprep.mubr.bf16.mxu0 %v1749
      %2391 = vmatmul.mubr.bf16.gmra.mrb[0].mxu0 %v1748
      %v2392 = vpop.f32.mrb[0].mxu0
      %v2393 = vadd.f32 0.0, %v2392
      %v2394 = vpop.f32.mrb[0].mxu0
      %v2395 = vpop.f32.mrb[0].mxu0
      %v2396 = vadd.f32 0.0, %v2395
      %v2397 = vpop.f32.mrb[0].mxu0
      %2398 = vmatprep.mubr.bf16.mxu0 %v1751
      %2399 = vmatmul.mubr.bf16.gmra.mrb[0].mxu0 %v1750
      %v2400 = vpop.f32.mrb[0].mxu0
      %v2401 = vadd.f32 0.0, %v2400
      %v2402 = vpop.f32.mrb[0].mxu0
      %v2403 = vpop.f32.mrb[0].mxu0
      %v2404 = vadd.f32 0.0, %v2403
      %v2405 = vpop.f32.mrb[0].mxu0
      %2406 = vmatprep.mubr.bf16.mxu0 %v1753
      %2407 = vmatmul.mubr.bf16.gmra.mrb[0].mxu0 %v1752
      %v2408 = vpop.f32.mrb[0].mxu0
      %v2409 = vadd.f32 0.0, %v2408
      %v2410 = vpop.f32.mrb[0].mxu0
      %v2411 = vpop.f32.mrb[0].mxu0
      %v2412 = vadd.f32 0.0, %v2411
      %v2413 = vpop.f32.mrb[0].mxu0
      %2414 = vmatprep.mubr.bf16.mxu0 %v1755
      %2415 = vmatmul.mubr.bf16.gmra.mrb[0].mxu0 %v1754
      %v2416 = vpop.f32.mrb[0].mxu0
      %v2417 = vadd.f32 0.0, %v2416
      %v2418 = vpop.f32.mrb[0].mxu0
      %v2419 = vpop.f32.mrb[0].mxu0
      %v2420 = vadd.f32 0.0, %v2419
      %v2421 = vpop.f32.mrb[0].mxu0
      %2422 = vmatprep.mubr.bf16.mxu0 %v1757
      %2423 = vmatmul.mubr.bf16.gmra.mrb[0].mxu0 %v1756
      %v2424 = vpop.f32.mrb[0].mxu0
      %v2425 = vadd.f32 0.0, %v2424
      %v2426 = vpop.f32.mrb[0].mxu0
      %v2427 = vpop.f32.mrb[0].mxu0
      %v2428 = vadd.f32 0.0, %v2427
      %v2429 = vpop.f32.mrb[0].mxu0
      %2430 = vdwg.mxu0
      %v2431 = vpack.c.bf16 %v1924, %v1921
      %v2432 = vpack.c.bf16 %v1932, %v1929
      %v2433 = vpack.c.bf16 %v1940, %v1937
      %v2434 = vpack.c.bf16 %v1948, %v1945
      %v2435 = vpack.c.bf16 %v1956, %v1953
      %v2436 = vpack.c.bf16 %v1964, %v1961
      %v2437 = vpack.c.bf16 %v1972, %v1969
      %v2438 = vpack.c.bf16 %v1980, %v1977
      %v2439 = vpack.c.bf16 %v1988, %v1985
      %v2440 = vpack.c.bf16 %v1996, %v1993
      %v2441 = vpack.c.bf16 %v2004, %v2001
      %v2442 = vpack.c.bf16 %v2012, %v2009
      %v2443 = vpack.c.bf16 %v2020, %v2017
      %v2444 = vpack.c.bf16 %v2028, %v2025
      %v2445 = vpack.c.bf16 %v2036, %v2033
      %v2446 = vpack.c.bf16 %v2044, %v2041
      %v2447 = vpack.c.bf16 %v2052, %v2049
      %v2448 = vpack.c.bf16 %v2060, %v2057
      %v2449 = vpack.c.bf16 %v2068, %v2065
      %v2450 = vpack.c.bf16 %v2076, %v2073
      %v2451 = vpack.c.bf16 %v2084, %v2081
      %v2452 = vpack.c.bf16 %v2092, %v2089
      %v2453 = vpack.c.bf16 %v2100, %v2097
      %v2454 = vpack.c.bf16 %v2108, %v2105
      %v2455 = vpack.c.bf16 %v2116, %v2113
      %v2456 = vpack.c.bf16 %v2124, %v2121
      %v2457 = vpack.c.bf16 %v2132, %v2129
      %v2458 = vpack.c.bf16 %v2140, %v2137
      %v2459 = vpack.c.bf16 %v2148, %v2145
      %v2460 = vpack.c.bf16 %v2156, %v2153
      %v2461 = vpack.c.bf16 %v2164, %v2161
      %v2462 = vpack.c.bf16 %v2172, %v2169
      %v2463 = vpack.c.bf16 %v2180, %v2177
      %v2464 = vpack.c.bf16 %v2188, %v2185
      %v2465 = vpack.c.bf16 %v2196, %v2193
      %v2466 = vpack.c.bf16 %v2204, %v2201
      %v2467 = vpack.c.bf16 %v2212, %v2209
      %v2468 = vpack.c.bf16 %v2220, %v2217
      %v2469 = vpack.c.bf16 %v2228, %v2225
      %v2470 = vpack.c.bf16 %v2236, %v2233
      %v2471 = vpack.c.bf16 %v2244, %v2241
      %v2472 = vpack.c.bf16 %v2252, %v2249
      %v2473 = vpack.c.bf16 %v2260, %v2257
      %v2474 = vpack.c.bf16 %v2268, %v2265
      %v2475 = vpack.c.bf16 %v2276, %v2273
      %v2476 = vpack.c.bf16 %v2284, %v2281
      %v2477 = vpack.c.bf16 %v2292, %v2289
      %v2478 = vpack.c.bf16 %v2300, %v2297
      %v2479 = vpack.c.bf16 %v2308, %v2305
      %v2480 = vpack.c.bf16 %v2316, %v2313
      %v2481 = vpack.c.bf16 %v2324, %v2321
      %v2482 = vpack.c.bf16 %v2332, %v2329
      %v2483 = vpack.c.bf16 %v2340, %v2337
      %v2484 = vpack.c.bf16 %v2348, %v2345
      %v2485 = vpack.c.bf16 %v2356, %v2353
      %v2486 = vpack.c.bf16 %v2364, %v2361
      %v2487 = vpack.c.bf16 %v2372, %v2369
      %v2488 = vpack.c.bf16 %v2380, %v2377
      %v2489 = vpack.c.bf16 %v2388, %v2385
      %v2490 = vpack.c.bf16 %v2396, %v2393
      %v2491 = vpack.c.bf16 %v2404, %v2401
      %v2492 = vpack.c.bf16 %v2412, %v2409
      %v2493 = vpack.c.bf16 %v2420, %v2417
      %v2494 = vpack.c.bf16 %v2428, %v2425
      %v2495 = vld [vmem:[%s5] sm:$0xff]
      %v2496 = vld [vmem:[%s5 + $0x8] sm:$0xff]
      %v2497 = vld [vmem:[%s5 + $0x10] sm:$0xff]
      %v2498 = vld [vmem:[%s5 + $0x18] sm:$0xff]
      %v2499 = vld [vmem:[%s5 + $0x20] sm:$0xff]
      %v2500 = vld [vmem:[%s5 + $0x28] sm:$0xff]
      %v2501 = vld [vmem:[%s5 + $0x30] sm:$0xff]
      %v2502 = vld [vmem:[%s5 + $0x38] sm:$0xff]
      %v2503 = vld [vmem:[%s4] sm:$0xf]
      %v2504 = vld [vmem:[%s4 + $0x4] sm:$0xf]
      %v2507 = vunpack.c.l.b16 %v2503
      %v2508 = vunpack.c.l.b16 %v2504
      %v2509 = vpack.c.b16 %v2508, %v2507
      %v2512 = vsel %vm764, %v2431, 0
      %v2515 = vsel %vm764, %v2432, 0
      %v2518 = vsel %vm764, %v2433, 0
      %v2521 = vsel %vm764, %v2434, 0
      %2523 = vmatprep.subr.bf16.mxu0 0
      %2524 = vmatpush1.bf16.msra.mxu0 %v2509
      %2525 = vmatprep.subr.bf16.mxu0 0
      %2526 = vmatpush1.bf16.msra.mxu0 0
      %2527 = vmatprep.subr.bf16.mxu0 0
      %2528 = vmatpush1.bf16.msra.mxu0 0
      %2529 = vmatprep.subr.bf16.mxu0 0
      %2530 = vmatpush1.bf16.msra.mxu0 0
      %2531 = vmatprep.subr.bf16.mxu0 0
      %2532 = vmatpush1.bf16.msra.mxu0 0
      %2533 = vmatprep.subr.bf16.mxu0 0
      %2534 = vmatpush1.bf16.msra.mxu0 0
      %2535 = vmatprep.subr.bf16.mxu0 0
      %2536 = vmatpush1.bf16.msra.mxu0 0
      %2537 = vmatprep.subr.bf16.mxu0 0
      %2538 = vmatpush1.bf16.msra.mxu0 0
      %2539 = vmatprep.subr.bf16.mxu0 0
      %2540 = vmatpush1.bf16.msra.mxu0 0
      %2541 = vmatprep.subr.bf16.mxu0 0
      %2542 = vmatpush1.bf16.msra.mxu0 0
      %2543 = vmatprep.subr.bf16.mxu0 0
      %2544 = vmatpush1.bf16.msra.mxu0 0
      %2545 = vmatprep.subr.bf16.mxu0 0
      %2546 = vmatpush1.bf16.msra.mxu0 0
      %2547 = vmatprep.subr.bf16.mxu0 0
      %2548 = vmatpush1.bf16.msra.mxu0 0
      %2549 = vmatprep.subr.bf16.mxu0 0
      %2550 = vmatpush1.bf16.msra.mxu0 0
      %2551 = vmatprep.subr.bf16.mxu0 0
      %2552 = vmatpush1.bf16.msra.mxu0 0
      %2553 = vmatprep.subr.bf16.mxu0 0
      %2554 = vmatpush1.bf16.msra.mxu0 0
      %2555 = vmatprep.mubr.bf16.mxu0 0
      %2556 = vmatmul.mubr.bf16.gmra.mrb[0].mxu0 %v2512
      %v2557 = vpop.f32.mrb[0].mxu0
      %v2558 = vadd.f32 0.0, %v2557
      %v2559 = vpop.f32.mrb[0].mxu0
      %v2560 = vpop.f32.mrb[0].mxu0
      %v2561 = vadd.f32 0.0, %v2560
      %v2562 = vpop.f32.mrb[0].mxu0
      %2563 = vmatprep.mubr.bf16.mxu0 0
      %2564 = vmatmul.mubr.bf16.gmra.mrb[0].mxu0 %v2515
      %v2565 = vpop.f32.mrb[0].mxu0
      %v2566 = vadd.f32 0.0, %v2565
      %v2567 = vpop.f32.mrb[0].mxu0
      %v2568 = vpop.f32.mrb[0].mxu0
      %v2569 = vadd.f32 0.0, %v2568
      %v2570 = vpop.f32.mrb[0].mxu0
      %2571 = vmatprep.mubr.bf16.mxu0 0
      %2572 = vmatmul.mubr.bf16.gmra.mrb[0].mxu0 %v2518
      %v2573 = vpop.f32.mrb[0].mxu0
      %v2574 = vadd.f32 0.0, %v2573
      %v2575 = vpop.f32.mrb[0].mxu0
      %v2576 = vpop.f32.mrb[0].mxu0
      %v2577 = vadd.f32 0.0, %v2576
      %v2578 = vpop.f32.mrb[0].mxu0
      %2579 = vmatprep.mubr.bf16.mxu0 0
      %2580 = vmatmul.mubr.bf16.gmra.mrb[0].mxu0 %v2521
      %v2581 = vpop.f32.mrb[0].mxu0
      %v2582 = vadd.f32 0.0, %v2581
      %v2583 = vpop.f32.mrb[0].mxu0
      %v2584 = vpop.f32.mrb[0].mxu0
      %v2585 = vadd.f32 0.0, %v2584
      %v2586 = vpop.f32.mrb[0].mxu0
      %2587 = vdwg.mxu0
      %v2588 = vadd.f32 %v2495, %v2558
      %v2589 = vadd.f32 %v2496, %v2561
      %v2590 = vadd.f32 %v2497, %v2566
      %v2591 = vadd.f32 %v2498, %v2569
      %v2592 = vadd.f32 %v2499, %v2574
      %v2593 = vadd.f32 %v2500, %v2577
      %v2594 = vadd.f32 %v2501, %v2582
      %v2595 = vadd.f32 %v2502, %v2585
      %s2596 = scalar_lea.vmem %s4, 8
      %v2597 = vld [vmem:[%s2596] sm:$0xf]
      %v2598 = vld [vmem:[%s2596 + $0x4] sm:$0xf]
      %v2601 = vunpack.c.l.b16 %v2597
      %v2602 = vunpack.c.l.b16 %v2598
      %v2603 = vpack.c.b16 %v2602, %v2601
      %v2606 = vsel %vm764, %v2435, 0
      %v2609 = vsel %vm764, %v2436, 0
      %v2612 = vsel %vm764, %v2437, 0
      %v2615 = vsel %vm764, %v2438, 0
      %2617 = vmatprep.subr.bf16.mxu0 0
      %2618 = vmatpush1.bf16.msra.mxu0 %v2603
      %2619 = vmatprep.subr.bf16.mxu0 0
      %2620 = vmatpush1.bf16.msra.mxu0 0
      %2621 = vmatprep.subr.bf16.mxu0 0
      %2622 = vmatpush1.bf16.msra.mxu0 0
      %2623 = vmatprep.subr.bf16.mxu0 0
      %2624 = vmatpush1.bf16.msra.mxu0 0
      %2625 = vmatprep.subr.bf16.mxu0 0
      %2626 = vmatpush1.bf16.msra.mxu0 0
      %2627 = vmatprep.subr.bf16.mxu0 0
      %2628 = vmatpush1.bf16.msra.mxu0 0
      %2629 = vmatprep.subr.bf16.mxu0 0
      %2630 = vmatpush1.bf16.msra.mxu0 0
      %2631 = vmatprep.subr.bf16.mxu0 0
      %2632 = vmatpush1.bf16.msra.mxu0 0
      %2633 = vmatprep.subr.bf16.mxu0 0
      %2634 = vmatpush1.bf16.msra.mxu0 0
      %2635 = vmatprep.subr.bf16.mxu0 0
      %2636 = vmatpush1.bf16.msra.mxu0 0
      %2637 = vmatprep.subr.bf16.mxu0 0
      %2638 = vmatpush1.bf16.msra.mxu0 0
      %2639 = vmatprep.subr.bf16.mxu0 0
      %2640 = vmatpush1.bf16.msra.mxu0 0
      %2641 = vmatprep.subr.bf16.mxu0 0
      %2642 = vmatpush1.bf16.msra.mxu0 0
      %2643 = vmatprep.subr.bf16.mxu0 0
      %2644 = vmatpush1.bf16.msra.mxu0 0
      %2645 = vmatprep.subr.bf16.mxu0 0
      %2646 = vmatpush1.bf16.msra.mxu0 0
      %2647 = vmatprep.subr.bf16.mxu0 0
      %2648 = vmatpush1.bf16.msra.mxu0 0
      %2649 = vmatprep.mubr.bf16.mxu0 0
      %2650 = vmatmul.mubr.bf16.gmra.mrb[0].mxu0 %v2606
      %v2651 = vpop.f32.mrb[0].mxu0
      %v2652 = vadd.f32 0.0, %v2651
      %v2653 = vpop.f32.mrb[0].mxu0
      %v2654 = vpop.f32.mrb[0].mxu0
      %v2655 = vadd.f32 0.0, %v2654
      %v2656 = vpop.f32.mrb[0].mxu0
      %2657 = vmatprep.mubr.bf16.mxu0 0
      %2658 = vmatmul.mubr.bf16.gmra.mrb[0].mxu0 %v2609
      %v2659 = vpop.f32.mrb[0].mxu0
      %v2660 = vadd.f32 0.0, %v2659
      %v2661 = vpop.f32.mrb[0].mxu0
      %v2662 = vpop.f32.mrb[0].mxu0
      %v2663 = vadd.f32 0.0, %v2662
      %v2664 = vpop.f32.mrb[0].mxu0
      %2665 = vmatprep.mubr.bf16.mxu0 0
      %2666 = vmatmul.mubr.bf16.gmra.mrb[0].mxu0 %v2612
      %v2667 = vpop.f32.mrb[0].mxu0
      %v2668 = vadd.f32 0.0, %v2667
      %v2669 = vpop.f32.mrb[0].mxu0
      %v2670 = vpop.f32.mrb[0].mxu0
      %v2671 = vadd.f32 0.0, %v2670
      %v2672 = vpop.f32.mrb[0].mxu0
      %2673 = vmatprep.mubr.bf16.mxu0 0
      %2674 = vmatmul.mubr.bf16.gmra.mrb[0].mxu0 %v2615
      %v2675 = vpop.f32.mrb[0].mxu0
      %v2676 = vadd.f32 0.0, %v2675
      %v2677 = vpop.f32.mrb[0].mxu0
      %v2678 = vpop.f32.mrb[0].mxu0
      %v2679 = vadd.f32 0.0, %v2678
      %v2680 = vpop.f32.mrb[0].mxu0
      %2681 = vdwg.mxu0
      %v2682 = vadd.f32 %v2588, %v2652
      %v2683 = vadd.f32 %v2589, %v2655
      %v2684 = vadd.f32 %v2590, %v2660
      %v2685 = vadd.f32 %v2591, %v2663
      %v2686 = vadd.f32 %v2592, %v2668
      %v2687 = vadd.f32 %v2593, %v2671
      %v2688 = vadd.f32 %v2594, %v2676
      %v2689 = vadd.f32 %v2595, %v2679
      %s2690 = scalar_lea.vmem %s4, 16
      %v2691 = vld [vmem:[%s2690] sm:$0xf]
      %v2692 = vld [vmem:[%s2690 + $0x4] sm:$0xf]
      %v2695 = vunpack.c.l.b16 %v2691
      %v2696 = vunpack.c.l.b16 %v2692
      %v2697 = vpack.c.b16 %v2696, %v2695
      %v2700 = vsel %vm764, %v2439, 0
      %v2703 = vsel %vm764, %v2440, 0
      %v2706 = vsel %vm764, %v2441, 0
      %v2709 = vsel %vm764, %v2442, 0
      %2711 = vmatprep.subr.bf16.mxu0 0
      %2712 = vmatpush1.bf16.msra.mxu0 %v2697
      %2713 = vmatprep.subr.bf16.mxu0 0
      %2714 = vmatpush1.bf16.msra.mxu0 0
      %2715 = vmatprep.subr.bf16.mxu0 0
      %2716 = vmatpush1.bf16.msra.mxu0 0
      %2717 = vmatprep.subr.bf16.mxu0 0
      %2718 = vmatpush1.bf16.msra.mxu0 0
      %2719 = vmatprep.subr.bf16.mxu0 0
      %2720 = vmatpush1.bf16.msra.mxu0 0
      %2721 = vmatprep.subr.bf16.mxu0 0
      %2722 = vmatpush1.bf16.msra.mxu0 0
      %2723 = vmatprep.subr.bf16.mxu0 0
      %2724 = vmatpush1.bf16.msra.mxu0 0
      %2725 = vmatprep.subr.bf16.mxu0 0
      %2726 = vmatpush1.bf16.msra.mxu0 0
      %2727 = vmatprep.subr.bf16.mxu0 0
      %2728 = vmatpush1.bf16.msra.mxu0 0
      %2729 = vmatprep.subr.bf16.mxu0 0
      %2730 = vmatpush1.bf16.msra.mxu0 0
      %2731 = vmatprep.subr.bf16.mxu0 0
      %2732 = vmatpush1.bf16.msra.mxu0 0
      %2733 = vmatprep.subr.bf16.mxu0 0
      %2734 = vmatpush1.bf16.msra.mxu0 0
      %2735 = vmatprep.subr.bf16.mxu0 0
      %2736 = vmatpush1.bf16.msra.mxu0 0
      %2737 = vmatprep.subr.bf16.mxu0 0
      %2738 = vmatpush1.bf16.msra.mxu0 0
      %2739 = vmatprep.subr.bf16.mxu0 0
      %2740 = vmatpush1.bf16.msra.mxu0 0
      %2741 = vmatprep.subr.bf16.mxu0 0
      %2742 = vmatpush1.bf16.msra.mxu0 0
      %2743 = vmatprep.mubr.bf16.mxu0 0
      %2744 = vmatmul.mubr.bf16.gmra.mrb[0].mxu0 %v2700
      %v2745 = vpop.f32.mrb[0].mxu0
      %v2746 = vadd.f32 0.0, %v2745
      %v2747 = vpop.f32.mrb[0].mxu0
      %v2748 = vpop.f32.mrb[0].mxu0
      %v2749 = vadd.f32 0.0, %v2748
      %v2750 = vpop.f32.mrb[0].mxu0
      %2751 = vmatprep.mubr.bf16.mxu0 0
      %2752 = vmatmul.mubr.bf16.gmra.mrb[0].mxu0 %v2703
      %v2753 = vpop.f32.mrb[0].mxu0
      %v2754 = vadd.f32 0.0, %v2753
      %v2755 = vpop.f32.mrb[0].mxu0
      %v2756 = vpop.f32.mrb[0].mxu0
      %v2757 = vadd.f32 0.0, %v2756
      %v2758 = vpop.f32.mrb[0].mxu0
      %2759 = vmatprep.mubr.bf16.mxu0 0
      %2760 = vmatmul.mubr.bf16.gmra.mrb[0].mxu0 %v2706
      %v2761 = vpop.f32.mrb[0].mxu0
      %v2762 = vadd.f32 0.0, %v2761
      %v2763 = vpop.f32.mrb[0].mxu0
      %v2764 = vpop.f32.mrb[0].mxu0
      %v2765 = vadd.f32 0.0, %v2764
      %v2766 = vpop.f32.mrb[0].mxu0
      %2767 = vmatprep.mubr.bf16.mxu0 0
      %2768 = vmatmul.mubr.bf16.gmra.mrb[0].mxu0 %v2709
      %v2769 = vpop.f32.mrb[0].mxu0
      %v2770 = vadd.f32 0.0, %v2769
      %v2771 = vpop.f32.mrb[0].mxu0
      %v2772 = vpop.f32.mrb[0].mxu0
      %v2773 = vadd.f32 0.0, %v2772
      %v2774 = vpop.f32.mrb[0].mxu0
      %2775 = vdwg.mxu0
      %v2776 = vadd.f32 %v2682, %v2746
      %v2777 = vadd.f32 %v2683, %v2749
      %v2778 = vadd.f32 %v2684, %v2754
      %v2779 = vadd.f32 %v2685, %v2757
      %v2780 = vadd.f32 %v2686, %v2762
      %v2781 = vadd.f32 %v2687, %v2765
      %v2782 = vadd.f32 %v2688, %v2770
      %v2783 = vadd.f32 %v2689, %v2773
      %s2784 = scalar_lea.vmem %s4, 24
      %v2785 = vld [vmem:[%s2784] sm:$0xf]
      %v2786 = vld [vmem:[%s2784 + $0x4] sm:$0xf]
      %v2789 = vunpack.c.l.b16 %v2785
      %v2790 = vunpack.c.l.b16 %v2786
      %v2791 = vpack.c.b16 %v2790, %v2789
      %v2794 = vsel %vm764, %v2443, 0
      %v2797 = vsel %vm764, %v2444, 0
      %v2800 = vsel %vm764, %v2445, 0
      %v2803 = vsel %vm764, %v2446, 0
      %2805 = vmatprep.subr.bf16.mxu0 0
      %2806 = vmatpush1.bf16.msra.mxu0 %v2791
      %2807 = vmatprep.subr.bf16.mxu0 0
      %2808 = vmatpush1.bf16.msra.mxu0 0
      %2809 = vmatprep.subr.bf16.mxu0 0
      %2810 = vmatpush1.bf16.msra.mxu0 0
      %2811 = vmatprep.subr.bf16.mxu0 0
      %2812 = vmatpush1.bf16.msra.mxu0 0
      %2813 = vmatprep.subr.bf16.mxu0 0
      %2814 = vmatpush1.bf16.msra.mxu0 0
      %2815 = vmatprep.subr.bf16.mxu0 0
      %2816 = vmatpush1.bf16.msra.mxu0 0
      %2817 = vmatprep.subr.bf16.mxu0 0
      %2818 = vmatpush1.bf16.msra.mxu0 0
      %2819 = vmatprep.subr.bf16.mxu0 0
      %2820 = vmatpush1.bf16.msra.mxu0 0
      %2821 = vmatprep.subr.bf16.mxu0 0
      %2822 = vmatpush1.bf16.msra.mxu0 0
      %2823 = vmatprep.subr.bf16.mxu0 0
      %2824 = vmatpush1.bf16.msra.mxu0 0
      %2825 = vmatprep.subr.bf16.mxu0 0
      %2826 = vmatpush1.bf16.msra.mxu0 0
      %2827 = vmatprep.subr.bf16.mxu0 0
      %2828 = vmatpush1.bf16.msra.mxu0 0
      %2829 = vmatprep.subr.bf16.mxu0 0
      %2830 = vmatpush1.bf16.msra.mxu0 0
      %2831 = vmatprep.subr.bf16.mxu0 0
      %2832 = vmatpush1.bf16.msra.mxu0 0
      %2833 = vmatprep.subr.bf16.mxu0 0
      %2834 = vmatpush1.bf16.msra.mxu0 0
      %2835 = vmatprep.subr.bf16.mxu0 0
      %2836 = vmatpush1.bf16.msra.mxu0 0
      %2837 = vmatprep.mubr.bf16.mxu0 0
      %2838 = vmatmul.mubr.bf16.gmra.mrb[0].mxu0 %v2794
      %v2839 = vpop.f32.mrb[0].mxu0
      %v2840 = vadd.f32 0.0, %v2839
      %v2841 = vpop.f32.mrb[0].mxu0
      %v2842 = vpop.f32.mrb[0].mxu0
      %v2843 = vadd.f32 0.0, %v2842
      %v2844 = vpop.f32.mrb[0].mxu0
      %2845 = vmatprep.mubr.bf16.mxu0 0
      %2846 = vmatmul.mubr.bf16.gmra.mrb[0].mxu0 %v2797
      %v2847 = vpop.f32.mrb[0].mxu0
      %v2848 = vadd.f32 0.0, %v2847
      %v2849 = vpop.f32.mrb[0].mxu0
      %v2850 = vpop.f32.mrb[0].mxu0
      %v2851 = vadd.f32 0.0, %v2850
      %v2852 = vpop.f32.mrb[0].mxu0
      %2853 = vmatprep.mubr.bf16.mxu0 0
      %2854 = vmatmul.mubr.bf16.gmra.mrb[0].mxu0 %v2800
      %v2855 = vpop.f32.mrb[0].mxu0
      %v2856 = vadd.f32 0.0, %v2855
      %v2857 = vpop.f32.mrb[0].mxu0
      %v2858 = vpop.f32.mrb[0].mxu0
      %v2859 = vadd.f32 0.0, %v2858
      %v2860 = vpop.f32.mrb[0].mxu0
      %2861 = vmatprep.mubr.bf16.mxu0 0
      %2862 = vmatmul.mubr.bf16.gmra.mrb[0].mxu0 %v2803
      %v2863 = vpop.f32.mrb[0].mxu0
      %v2864 = vadd.f32 0.0, %v2863
      %v2865 = vpop.f32.mrb[0].mxu0
      %v2866 = vpop.f32.mrb[0].mxu0
      %v2867 = vadd.f32 0.0, %v2866
      %v2868 = vpop.f32.mrb[0].mxu0
      %2869 = vdwg.mxu0
      %v2870 = vadd.f32 %v2776, %v2840
      %v2871 = vadd.f32 %v2777, %v2843
      %v2872 = vadd.f32 %v2778, %v2848
      %v2873 = vadd.f32 %v2779, %v2851
      %v2874 = vadd.f32 %v2780, %v2856
      %v2875 = vadd.f32 %v2781, %v2859
      %v2876 = vadd.f32 %v2782, %v2864
      %v2877 = vadd.f32 %v2783, %v2867
      %s2878 = scalar_lea.vmem %s4, 32
      %v2879 = vld [vmem:[%s2878] sm:$0xf]
      %v2880 = vld [vmem:[%s2878 + $0x4] sm:$0xf]
      %v2883 = vunpack.c.l.b16 %v2879
      %v2884 = vunpack.c.l.b16 %v2880
      %v2885 = vpack.c.b16 %v2884, %v2883
      %v2888 = vsel %vm764, %v2447, 0
      %v2891 = vsel %vm764, %v2448, 0
      %v2894 = vsel %vm764, %v2449, 0
      %v2897 = vsel %vm764, %v2450, 0
      %2899 = vmatprep.subr.bf16.mxu0 0
      %2900 = vmatpush1.bf16.msra.mxu0 %v2885
      %2901 = vmatprep.subr.bf16.mxu0 0
      %2902 = vmatpush1.bf16.msra.mxu0 0
      %2903 = vmatprep.subr.bf16.mxu0 0
      %2904 = vmatpush1.bf16.msra.mxu0 0
      %2905 = vmatprep.subr.bf16.mxu0 0
      %2906 = vmatpush1.bf16.msra.mxu0 0
      %2907 = vmatprep.subr.bf16.mxu0 0
      %2908 = vmatpush1.bf16.msra.mxu0 0
      %2909 = vmatprep.subr.bf16.mxu0 0
      %2910 = vmatpush1.bf16.msra.mxu0 0
      %2911 = vmatprep.subr.bf16.mxu0 0
      %2912 = vmatpush1.bf16.msra.mxu0 0
      %2913 = vmatprep.subr.bf16.mxu0 0
      %2914 = vmatpush1.bf16.msra.mxu0 0
      %2915 = vmatprep.subr.bf16.mxu0 0
      %2916 = vmatpush1.bf16.msra.mxu0 0
      %2917 = vmatprep.subr.bf16.mxu0 0
      %2918 = vmatpush1.bf16.msra.mxu0 0
      %2919 = vmatprep.subr.bf16.mxu0 0
      %2920 = vmatpush1.bf16.msra.mxu0 0
      %2921 = vmatprep.subr.bf16.mxu0 0
      %2922 = vmatpush1.bf16.msra.mxu0 0
      %2923 = vmatprep.subr.bf16.mxu0 0
      %2924 = vmatpush1.bf16.msra.mxu0 0
      %2925 = vmatprep.subr.bf16.mxu0 0
      %2926 = vmatpush1.bf16.msra.mxu0 0
      %2927 = vmatprep.subr.bf16.mxu0 0
      %2928 = vmatpush1.bf16.msra.mxu0 0
      %2929 = vmatprep.subr.bf16.mxu0 0
      %2930 = vmatpush1.bf16.msra.mxu0 0
      %2931 = vmatprep.mubr.bf16.mxu0 0
      %2932 = vmatmul.mubr.bf16.gmra.mrb[0].mxu0 %v2888
      %v2933 = vpop.f32.mrb[0].mxu0
      %v2934 = vadd.f32 0.0, %v2933
      %v2935 = vpop.f32.mrb[0].mxu0
      %v2936 = vpop.f32.mrb[0].mxu0
      %v2937 = vadd.f32 0.0, %v2936
      %v2938 = vpop.f32.mrb[0].mxu0
      %2939 = vmatprep.mubr.bf16.mxu0 0
      %2940 = vmatmul.mubr.bf16.gmra.mrb[0].mxu0 %v2891
      %v2941 = vpop.f32.mrb[0].mxu0
      %v2942 = vadd.f32 0.0, %v2941
      %v2943 = vpop.f32.mrb[0].mxu0
      %v2944 = vpop.f32.mrb[0].mxu0
      %v2945 = vadd.f32 0.0, %v2944
      %v2946 = vpop.f32.mrb[0].mxu0
      %2947 = vmatprep.mubr.bf16.mxu0 0
      %2948 = vmatmul.mubr.bf16.gmra.mrb[0].mxu0 %v2894
      %v2949 = vpop.f32.mrb[0].mxu0
      %v2950 = vadd.f32 0.0, %v2949
      %v2951 = vpop.f32.mrb[0].mxu0
      %v2952 = vpop.f32.mrb[0].mxu0
      %v2953 = vadd.f32 0.0, %v2952
      %v2954 = vpop.f32.mrb[0].mxu0
      %2955 = vmatprep.mubr.bf16.mxu0 0
      %2956 = vmatmul.mubr.bf16.gmra.mrb[0].mxu0 %v2897
      %v2957 = vpop.f32.mrb[0].mxu0
      %v2958 = vadd.f32 0.0, %v2957
      %v2959 = vpop.f32.mrb[0].mxu0
      %v2960 = vpop.f32.mrb[0].mxu0
      %v2961 = vadd.f32 0.0, %v2960
      %v2962 = vpop.f32.mrb[0].mxu0
      %2963 = vdwg.mxu0
      %v2964 = vadd.f32 %v2870, %v2934
      %v2965 = vadd.f32 %v2871, %v2937
      %v2966 = vadd.f32 %v2872, %v2942
      %v2967 = vadd.f32 %v2873, %v2945
      %v2968 = vadd.f32 %v2874, %v2950
      %v2969 = vadd.f32 %v2875, %v2953
      %v2970 = vadd.f32 %v2876, %v2958
      %v2971 = vadd.f32 %v2877, %v2961
      %s2972 = scalar_lea.vmem %s4, 40
      %v2973 = vld [vmem:[%s2972] sm:$0xf]
      %v2974 = vld [vmem:[%s2972 + $0x4] sm:$0xf]
      %v2977 = vunpack.c.l.b16 %v2973
      %v2978 = vunpack.c.l.b16 %v2974
      %v2979 = vpack.c.b16 %v2978, %v2977
      %v2982 = vsel %vm764, %v2451, 0
      %v2985 = vsel %vm764, %v2452, 0
      %v2988 = vsel %vm764, %v2453, 0
      %v2991 = vsel %vm764, %v2454, 0
      %2993 = vmatprep.subr.bf16.mxu0 0
      %2994 = vmatpush1.bf16.msra.mxu0 %v2979
      %2995 = vmatprep.subr.bf16.mxu0 0
      %2996 = vmatpush1.bf16.msra.mxu0 0
      %2997 = vmatprep.subr.bf16.mxu0 0
      %2998 = vmatpush1.bf16.msra.mxu0 0
      %2999 = vmatprep.subr.bf16.mxu0 0
      %3000 = vmatpush1.bf16.msra.mxu0 0
      %3001 = vmatprep.subr.bf16.mxu0 0
      %3002 = vmatpush1.bf16.msra.mxu0 0
      %3003 = vmatprep.subr.bf16.mxu0 0
      %3004 = vmatpush1.bf16.msra.mxu0 0
      %3005 = vmatprep.subr.bf16.mxu0 0
      %3006 = vmatpush1.bf16.msra.mxu0 0
      %3007 = vmatprep.subr.bf16.mxu0 0
      %3008 = vmatpush1.bf16.msra.mxu0 0
      %3009 = vmatprep.subr.bf16.mxu0 0
      %3010 = vmatpush1.bf16.msra.mxu0 0
      %3011 = vmatprep.subr.bf16.mxu0 0
      %3012 = vmatpush1.bf16.msra.mxu0 0
      %3013 = vmatprep.subr.bf16.mxu0 0
      %3014 = vmatpush1.bf16.msra.mxu0 0
      %3015 = vmatprep.subr.bf16.mxu0 0
      %3016 = vmatpush1.bf16.msra.mxu0 0
      %3017 = vmatprep.subr.bf16.mxu0 0
      %3018 = vmatpush1.bf16.msra.mxu0 0
      %3019 = vmatprep.subr.bf16.mxu0 0
      %3020 = vmatpush1.bf16.msra.mxu0 0
      %3021 = vmatprep.subr.bf16.mxu0 0
      %3022 = vmatpush1.bf16.msra.mxu0 0
      %3023 = vmatprep.subr.bf16.mxu0 0
      %3024 = vmatpush1.bf16.msra.mxu0 0
      %3025 = vmatprep.mubr.bf16.mxu0 0
      %3026 = vmatmul.mubr.bf16.gmra.mrb[0].mxu0 %v2982
      %v3027 = vpop.f32.mrb[0].mxu0
      %v3028 = vadd.f32 0.0, %v3027
      %v3029 = vpop.f32.mrb[0].mxu0
      %v3030 = vpop.f32.mrb[0].mxu0
      %v3031 = vadd.f32 0.0, %v3030
      %v3032 = vpop.f32.mrb[0].mxu0
      %3033 = vmatprep.mubr.bf16.mxu0 0
      %3034 = vmatmul.mubr.bf16.gmra.mrb[0].mxu0 %v2985
      %v3035 = vpop.f32.mrb[0].mxu0
      %v3036 = vadd.f32 0.0, %v3035
      %v3037 = vpop.f32.mrb[0].mxu0
      %v3038 = vpop.f32.mrb[0].mxu0
      %v3039 = vadd.f32 0.0, %v3038
      %v3040 = vpop.f32.mrb[0].mxu0
      %3041 = vmatprep.mubr.bf16.mxu0 0
      %3042 = vmatmul.mubr.bf16.gmra.mrb[0].mxu0 %v2988
      %v3043 = vpop.f32.mrb[0].mxu0
      %v3044 = vadd.f32 0.0, %v3043
      %v3045 = vpop.f32.mrb[0].mxu0
      %v3046 = vpop.f32.mrb[0].mxu0
      %v3047 = vadd.f32 0.0, %v3046
      %v3048 = vpop.f32.mrb[0].mxu0
      %3049 = vmatprep.mubr.bf16.mxu0 0
      %3050 = vmatmul.mubr.bf16.gmra.mrb[0].mxu0 %v2991
      %v3051 = vpop.f32.mrb[0].mxu0
      %v3052 = vadd.f32 0.0, %v3051
      %v3053 = vpop.f32.mrb[0].mxu0
      %v3054 = vpop.f32.mrb[0].mxu0
      %v3055 = vadd.f32 0.0, %v3054
      %v3056 = vpop.f32.mrb[0].mxu0
      %3057 = vdwg.mxu0
      %v3058 = vadd.f32 %v2964, %v3028
      %v3059 = vadd.f32 %v2965, %v3031
      %v3060 = vadd.f32 %v2966, %v3036
      %v3061 = vadd.f32 %v2967, %v3039
      %v3062 = vadd.f32 %v2968, %v3044
      %v3063 = vadd.f32 %v2969, %v3047
      %v3064 = vadd.f32 %v2970, %v3052
      %v3065 = vadd.f32 %v2971, %v3055
      %s3066 = scalar_lea.vmem %s4, 48
      %v3067 = vld [vmem:[%s3066] sm:$0xf]
      %v3068 = vld [vmem:[%s3066 + $0x4] sm:$0xf]
      %v3071 = vunpack.c.l.b16 %v3067
      %v3072 = vunpack.c.l.b16 %v3068
      %v3073 = vpack.c.b16 %v3072, %v3071
      %v3076 = vsel %vm764, %v2455, 0
      %v3079 = vsel %vm764, %v2456, 0
      %v3082 = vsel %vm764, %v2457, 0
      %v3085 = vsel %vm764, %v2458, 0
      %3087 = vmatprep.subr.bf16.mxu0 0
      %3088 = vmatpush1.bf16.msra.mxu0 %v3073
      %3089 = vmatprep.subr.bf16.mxu0 0
      %3090 = vmatpush1.bf16.msra.mxu0 0
      %3091 = vmatprep.subr.bf16.mxu0 0
      %3092 = vmatpush1.bf16.msra.mxu0 0
      %3093 = vmatprep.subr.bf16.mxu0 0
      %3094 = vmatpush1.bf16.msra.mxu0 0
      %3095 = vmatprep.subr.bf16.mxu0 0
      %3096 = vmatpush1.bf16.msra.mxu0 0
      %3097 = vmatprep.subr.bf16.mxu0 0
      %3098 = vmatpush1.bf16.msra.mxu0 0
      %3099 = vmatprep.subr.bf16.mxu0 0
      %3100 = vmatpush1.bf16.msra.mxu0 0
      %3101 = vmatprep.subr.bf16.mxu0 0
      %3102 = vmatpush1.bf16.msra.mxu0 0
      %3103 = vmatprep.subr.bf16.mxu0 0
      %3104 = vmatpush1.bf16.msra.mxu0 0
      %3105 = vmatprep.subr.bf16.mxu0 0
      %3106 = vmatpush1.bf16.msra.mxu0 0
      %3107 = vmatprep.subr.bf16.mxu0 0
      %3108 = vmatpush1.bf16.msra.mxu0 0
      %3109 = vmatprep.subr.bf16.mxu0 0
      %3110 = vmatpush1.bf16.msra.mxu0 0
      %3111 = vmatprep.subr.bf16.mxu0 0
      %3112 = vmatpush1.bf16.msra.mxu0 0
      %3113 = vmatprep.subr.bf16.mxu0 0
      %3114 = vmatpush1.bf16.msra.mxu0 0
      %3115 = vmatprep.subr.bf16.mxu0 0
      %3116 = vmatpush1.bf16.msra.mxu0 0
      %3117 = vmatprep.subr.bf16.mxu0 0
      %3118 = vmatpush1.bf16.msra.mxu0 0
      %3119 = vmatprep.mubr.bf16.mxu0 0
      %3120 = vmatmul.mubr.bf16.gmra.mrb[0].mxu0 %v3076
      %v3121 = vpop.f32.mrb[0].mxu0
      %v3122 = vadd.f32 0.0, %v3121
      %v3123 = vpop.f32.mrb[0].mxu0
      %v3124 = vpop.f32.mrb[0].mxu0
      %v3125 = vadd.f32 0.0, %v3124
      %v3126 = vpop.f32.mrb[0].mxu0
      %3127 = vmatprep.mubr.bf16.mxu0 0
      %3128 = vmatmul.mubr.bf16.gmra.mrb[0].mxu0 %v3079
      %v3129 = vpop.f32.mrb[0].mxu0
      %v3130 = vadd.f32 0.0, %v3129
      %v3131 = vpop.f32.mrb[0].mxu0
      %v3132 = vpop.f32.mrb[0].mxu0
      %v3133 = vadd.f32 0.0, %v3132
      %v3134 = vpop.f32.mrb[0].mxu0
      %3135 = vmatprep.mubr.bf16.mxu0 0
      %3136 = vmatmul.mubr.bf16.gmra.mrb[0].mxu0 %v3082
      %v3137 = vpop.f32.mrb[0].mxu0
      %v3138 = vadd.f32 0.0, %v3137
      %v3139 = vpop.f32.mrb[0].mxu0
      %v3140 = vpop.f32.mrb[0].mxu0
      %v3141 = vadd.f32 0.0, %v3140
      %v3142 = vpop.f32.mrb[0].mxu0
      %3143 = vmatprep.mubr.bf16.mxu0 0
      %3144 = vmatmul.mubr.bf16.gmra.mrb[0].mxu0 %v3085
      %v3145 = vpop.f32.mrb[0].mxu0
      %v3146 = vadd.f32 0.0, %v3145
      %v3147 = vpop.f32.mrb[0].mxu0
      %v3148 = vpop.f32.mrb[0].mxu0
      %v3149 = vadd.f32 0.0, %v3148
      %v3150 = vpop.f32.mrb[0].mxu0
      %3151 = vdwg.mxu0
      %v3152 = vadd.f32 %v3058, %v3122
      %v3153 = vadd.f32 %v3059, %v3125
      %v3154 = vadd.f32 %v3060, %v3130
      %v3155 = vadd.f32 %v3061, %v3133
      %v3156 = vadd.f32 %v3062, %v3138
      %v3157 = vadd.f32 %v3063, %v3141
      %v3158 = vadd.f32 %v3064, %v3146
      %v3159 = vadd.f32 %v3065, %v3149
      %s3160 = scalar_lea.vmem %s4, 56
      %v3161 = vld [vmem:[%s3160] sm:$0xf]
      %v3162 = vld [vmem:[%s3160 + $0x4] sm:$0xf]
      %v3165 = vunpack.c.l.b16 %v3161
      %v3166 = vunpack.c.l.b16 %v3162
      %v3167 = vpack.c.b16 %v3166, %v3165
      %v3170 = vsel %vm764, %v2459, 0
      %v3173 = vsel %vm764, %v2460, 0
      %v3176 = vsel %vm764, %v2461, 0
      %v3179 = vsel %vm764, %v2462, 0
      %3181 = vmatprep.subr.bf16.mxu0 0
      %3182 = vmatpush1.bf16.msra.mxu0 %v3167
      %3183 = vmatprep.subr.bf16.mxu0 0
      %3184 = vmatpush1.bf16.msra.mxu0 0
      %3185 = vmatprep.subr.bf16.mxu0 0
      %3186 = vmatpush1.bf16.msra.mxu0 0
      %3187 = vmatprep.subr.bf16.mxu0 0
      %3188 = vmatpush1.bf16.msra.mxu0 0
      %3189 = vmatprep.subr.bf16.mxu0 0
      %3190 = vmatpush1.bf16.msra.mxu0 0
      %3191 = vmatprep.subr.bf16.mxu0 0
      %3192 = vmatpush1.bf16.msra.mxu0 0
      %3193 = vmatprep.subr.bf16.mxu0 0
      %3194 = vmatpush1.bf16.msra.mxu0 0
      %3195 = vmatprep.subr.bf16.mxu0 0
      %3196 = vmatpush1.bf16.msra.mxu0 0
      %3197 = vmatprep.subr.bf16.mxu0 0
      %3198 = vmatpush1.bf16.msra.mxu0 0
      %3199 = vmatprep.subr.bf16.mxu0 0
      %3200 = vmatpush1.bf16.msra.mxu0 0
      %3201 = vmatprep.subr.bf16.mxu0 0
      %3202 = vmatpush1.bf16.msra.mxu0 0
      %3203 = vmatprep.subr.bf16.mxu0 0
      %3204 = vmatpush1.bf16.msra.mxu0 0
      %3205 = vmatprep.subr.bf16.mxu0 0
      %3206 = vmatpush1.bf16.msra.mxu0 0
      %3207 = vmatprep.subr.bf16.mxu0 0
      %3208 = vmatpush1.bf16.msra.mxu0 0
      %3209 = vmatprep.subr.bf16.mxu0 0
      %3210 = vmatpush1.bf16.msra.mxu0 0
      %3211 = vmatprep.subr.bf16.mxu0 0
      %3212 = vmatpush1.bf16.msra.mxu0 0
      %3213 = vmatprep.mubr.bf16.mxu0 0
      %3214 = vmatmul.mubr.bf16.gmra.mrb[0].mxu0 %v3170
      %v3215 = vpop.f32.mrb[0].mxu0
      %v3216 = vadd.f32 0.0, %v3215
      %v3217 = vpop.f32.mrb[0].mxu0
      %v3218 = vpop.f32.mrb[0].mxu0
      %v3219 = vadd.f32 0.0, %v3218
      %v3220 = vpop.f32.mrb[0].mxu0
      %3221 = vmatprep.mubr.bf16.mxu0 0
      %3222 = vmatmul.mubr.bf16.gmra.mrb[0].mxu0 %v3173
      %v3223 = vpop.f32.mrb[0].mxu0
      %v3224 = vadd.f32 0.0, %v3223
      %v3225 = vpop.f32.mrb[0].mxu0
      %v3226 = vpop.f32.mrb[0].mxu0
      %v3227 = vadd.f32 0.0, %v3226
      %v3228 = vpop.f32.mrb[0].mxu0
      %3229 = vmatprep.mubr.bf16.mxu0 0
      %3230 = vmatmul.mubr.bf16.gmra.mrb[0].mxu0 %v3176
      %v3231 = vpop.f32.mrb[0].mxu0
      %v3232 = vadd.f32 0.0, %v3231
      %v3233 = vpop.f32.mrb[0].mxu0
      %v3234 = vpop.f32.mrb[0].mxu0
      %v3235 = vadd.f32 0.0, %v3234
      %v3236 = vpop.f32.mrb[0].mxu0
      %3237 = vmatprep.mubr.bf16.mxu0 0
      %3238 = vmatmul.mubr.bf16.gmra.mrb[0].mxu0 %v3179
      %v3239 = vpop.f32.mrb[0].mxu0
      %v3240 = vadd.f32 0.0, %v3239
      %v3241 = vpop.f32.mrb[0].mxu0
      %v3242 = vpop.f32.mrb[0].mxu0
      %v3243 = vadd.f32 0.0, %v3242
      %v3244 = vpop.f32.mrb[0].mxu0
      %3245 = vdwg.mxu0
      %v3246 = vadd.f32 %v3152, %v3216
      %v3247 = vadd.f32 %v3153, %v3219
      %v3248 = vadd.f32 %v3154, %v3224
      %v3249 = vadd.f32 %v3155, %v3227
      %v3250 = vadd.f32 %v3156, %v3232
      %v3251 = vadd.f32 %v3157, %v3235
      %v3252 = vadd.f32 %v3158, %v3240
      %v3253 = vadd.f32 %v3159, %v3243
      %s3254 = scalar_lea.vmem %s4, 64
      %v3255 = vld [vmem:[%s3254] sm:$0xf]
      %v3256 = vld [vmem:[%s3254 + $0x4] sm:$0xf]
      %v3259 = vunpack.c.l.b16 %v3255
      %v3260 = vunpack.c.l.b16 %v3256
      %v3261 = vpack.c.b16 %v3260, %v3259
      %v3264 = vsel %vm764, %v2463, 0
      %v3267 = vsel %vm764, %v2464, 0
      %v3270 = vsel %vm764, %v2465, 0
      %v3273 = vsel %vm764, %v2466, 0
      %3275 = vmatprep.subr.bf16.mxu0 0
      %3276 = vmatpush1.bf16.msra.mxu0 %v3261
      %3277 = vmatprep.subr.bf16.mxu0 0
      %3278 = vmatpush1.bf16.msra.mxu0 0
      %3279 = vmatprep.subr.bf16.mxu0 0
      %3280 = vmatpush1.bf16.msra.mxu0 0
      %3281 = vmatprep.subr.bf16.mxu0 0
      %3282 = vmatpush1.bf16.msra.mxu0 0
      %3283 = vmatprep.subr.bf16.mxu0 0
      %3284 = vmatpush1.bf16.msra.mxu0 0
      %3285 = vmatprep.subr.bf16.mxu0 0
      %3286 = vmatpush1.bf16.msra.mxu0 0
      %3287 = vmatprep.subr.bf16.mxu0 0
      %3288 = vmatpush1.bf16.msra.mxu0 0
      %3289 = vmatprep.subr.bf16.mxu0 0
      %3290 = vmatpush1.bf16.msra.mxu0 0
      %3291 = vmatprep.subr.bf16.mxu0 0
      %3292 = vmatpush1.bf16.msra.mxu0 0
      %3293 = vmatprep.subr.bf16.mxu0 0
      %3294 = vmatpush1.bf16.msra.mxu0 0
      %3295 = vmatprep.subr.bf16.mxu0 0
      %3296 = vmatpush1.bf16.msra.mxu0 0
      %3297 = vmatprep.subr.bf16.mxu0 0
      %3298 = vmatpush1.bf16.msra.mxu0 0
      %3299 = vmatprep.subr.bf16.mxu0 0
      %3300 = vmatpush1.bf16.msra.mxu0 0
      %3301 = vmatprep.subr.bf16.mxu0 0
      %3302 = vmatpush1.bf16.msra.mxu0 0
      %3303 = vmatprep.subr.bf16.mxu0 0
      %3304 = vmatpush1.bf16.msra.mxu0 0
      %3305 = vmatprep.subr.bf16.mxu0 0
      %3306 = vmatpush1.bf16.msra.mxu0 0
      %3307 = vmatprep.mubr.bf16.mxu0 0
      %3308 = vmatmul.mubr.bf16.gmra.mrb[0].mxu0 %v3264
      %v3309 = vpop.f32.mrb[0].mxu0
      %v3310 = vadd.f32 0.0, %v3309
      %v3311 = vpop.f32.mrb[0].mxu0
      %v3312 = vpop.f32.mrb[0].mxu0
      %v3313 = vadd.f32 0.0, %v3312
      %v3314 = vpop.f32.mrb[0].mxu0
      %3315 = vmatprep.mubr.bf16.mxu0 0
      %3316 = vmatmul.mubr.bf16.gmra.mrb[0].mxu0 %v3267
      %v3317 = vpop.f32.mrb[0].mxu0
      %v3318 = vadd.f32 0.0, %v3317
      %v3319 = vpop.f32.mrb[0].mxu0
      %v3320 = vpop.f32.mrb[0].mxu0
      %v3321 = vadd.f32 0.0, %v3320
      %v3322 = vpop.f32.mrb[0].mxu0
      %3323 = vmatprep.mubr.bf16.mxu0 0
      %3324 = vmatmul.mubr.bf16.gmra.mrb[0].mxu0 %v3270
      %v3325 = vpop.f32.mrb[0].mxu0
      %v3326 = vadd.f32 0.0, %v3325
      %v3327 = vpop.f32.mrb[0].mxu0
      %v3328 = vpop.f32.mrb[0].mxu0
      %v3329 = vadd.f32 0.0, %v3328
      %v3330 = vpop.f32.mrb[0].mxu0
      %3331 = vmatprep.mubr.bf16.mxu0 0
      %3332 = vmatmul.mubr.bf16.gmra.mrb[0].mxu0 %v3273
      %v3333 = vpop.f32.mrb[0].mxu0
      %v3334 = vadd.f32 0.0, %v3333
      %v3335 = vpop.f32.mrb[0].mxu0
      %v3336 = vpop.f32.mrb[0].mxu0
      %v3337 = vadd.f32 0.0, %v3336
      %v3338 = vpop.f32.mrb[0].mxu0
      %3339 = vdwg.mxu0
      %v3340 = vadd.f32 %v3246, %v3310
      %v3341 = vadd.f32 %v3247, %v3313
      %v3342 = vadd.f32 %v3248, %v3318
      %v3343 = vadd.f32 %v3249, %v3321
      %v3344 = vadd.f32 %v3250, %v3326
      %v3345 = vadd.f32 %v3251, %v3329
      %v3346 = vadd.f32 %v3252, %v3334
      %v3347 = vadd.f32 %v3253, %v3337
      %s3348 = scalar_lea.vmem %s4, 72
      %v3349 = vld [vmem:[%s3348] sm:$0xf]
      %v3350 = vld [vmem:[%s3348 + $0x4] sm:$0xf]
      %v3353 = vunpack.c.l.b16 %v3349
      %v3354 = vunpack.c.l.b16 %v3350
      %v3355 = vpack.c.b16 %v3354, %v3353
      %v3358 = vsel %vm764, %v2467, 0
      %v3361 = vsel %vm764, %v2468, 0
      %v3364 = vsel %vm764, %v2469, 0
      %v3367 = vsel %vm764, %v2470, 0
      %3369 = vmatprep.subr.bf16.mxu0 0
      %3370 = vmatpush1.bf16.msra.mxu0 %v3355
      %3371 = vmatprep.subr.bf16.mxu0 0
      %3372 = vmatpush1.bf16.msra.mxu0 0
      %3373 = vmatprep.subr.bf16.mxu0 0
      %3374 = vmatpush1.bf16.msra.mxu0 0
      %3375 = vmatprep.subr.bf16.mxu0 0
      %3376 = vmatpush1.bf16.msra.mxu0 0
      %3377 = vmatprep.subr.bf16.mxu0 0
      %3378 = vmatpush1.bf16.msra.mxu0 0
      %3379 = vmatprep.subr.bf16.mxu0 0
      %3380 = vmatpush1.bf16.msra.mxu0 0
      %3381 = vmatprep.subr.bf16.mxu0 0
      %3382 = vmatpush1.bf16.msra.mxu0 0
      %3383 = vmatprep.subr.bf16.mxu0 0
      %3384 = vmatpush1.bf16.msra.mxu0 0
      %3385 = vmatprep.subr.bf16.mxu0 0
      %3386 = vmatpush1.bf16.msra.mxu0 0
      %3387 = vmatprep.subr.bf16.mxu0 0
      %3388 = vmatpush1.bf16.msra.mxu0 0
      %3389 = vmatprep.subr.bf16.mxu0 0
      %3390 = vmatpush1.bf16.msra.mxu0 0
      %3391 = vmatprep.subr.bf16.mxu0 0
      %3392 = vmatpush1.bf16.msra.mxu0 0
      %3393 = vmatprep.subr.bf16.mxu0 0
      %3394 = vmatpush1.bf16.msra.mxu0 0
      %3395 = vmatprep.subr.bf16.mxu0 0
      %3396 = vmatpush1.bf16.msra.mxu0 0
      %3397 = vmatprep.subr.bf16.mxu0 0
      %3398 = vmatpush1.bf16.msra.mxu0 0
      %3399 = vmatprep.subr.bf16.mxu0 0
      %3400 = vmatpush1.bf16.msra.mxu0 0
      %3401 = vmatprep.mubr.bf16.mxu0 0
      %3402 = vmatmul.mubr.bf16.gmra.mrb[0].mxu0 %v3358
      %v3403 = vpop.f32.mrb[0].mxu0
      %v3404 = vadd.f32 0.0, %v3403
      %v3405 = vpop.f32.mrb[0].mxu0
      %v3406 = vpop.f32.mrb[0].mxu0
      %v3407 = vadd.f32 0.0, %v3406
      %v3408 = vpop.f32.mrb[0].mxu0
      %3409 = vmatprep.mubr.bf16.mxu0 0
      %3410 = vmatmul.mubr.bf16.gmra.mrb[0].mxu0 %v3361
      %v3411 = vpop.f32.mrb[0].mxu0
      %v3412 = vadd.f32 0.0, %v3411
      %v3413 = vpop.f32.mrb[0].mxu0
      %v3414 = vpop.f32.mrb[0].mxu0
      %v3415 = vadd.f32 0.0, %v3414
      %v3416 = vpop.f32.mrb[0].mxu0
      %3417 = vmatprep.mubr.bf16.mxu0 0
      %3418 = vmatmul.mubr.bf16.gmra.mrb[0].mxu0 %v3364
      %v3419 = vpop.f32.mrb[0].mxu0
      %v3420 = vadd.f32 0.0, %v3419
      %v3421 = vpop.f32.mrb[0].mxu0
      %v3422 = vpop.f32.mrb[0].mxu0
      %v3423 = vadd.f32 0.0, %v3422
      %v3424 = vpop.f32.mrb[0].mxu0
      %3425 = vmatprep.mubr.bf16.mxu0 0
      %3426 = vmatmul.mubr.bf16.gmra.mrb[0].mxu0 %v3367
      %v3427 = vpop.f32.mrb[0].mxu0
      %v3428 = vadd.f32 0.0, %v3427
      %v3429 = vpop.f32.mrb[0].mxu0
      %v3430 = vpop.f32.mrb[0].mxu0
      %v3431 = vadd.f32 0.0, %v3430
      %v3432 = vpop.f32.mrb[0].mxu0
      %3433 = vdwg.mxu0
      %v3434 = vadd.f32 %v3340, %v3404
      %v3435 = vadd.f32 %v3341, %v3407
      %v3436 = vadd.f32 %v3342, %v3412
      %v3437 = vadd.f32 %v3343, %v3415
      %v3438 = vadd.f32 %v3344, %v3420
      %v3439 = vadd.f32 %v3345, %v3423
      %v3440 = vadd.f32 %v3346, %v3428
      %v3441 = vadd.f32 %v3347, %v3431
      %s3442 = scalar_lea.vmem %s4, 80
      %v3443 = vld [vmem:[%s3442] sm:$0xf]
      %v3444 = vld [vmem:[%s3442 + $0x4] sm:$0xf]
      %v3447 = vunpack.c.l.b16 %v3443
      %v3448 = vunpack.c.l.b16 %v3444
      %v3449 = vpack.c.b16 %v3448, %v3447
      %v3452 = vsel %vm764, %v2471, 0
      %v3455 = vsel %vm764, %v2472, 0
      %v3458 = vsel %vm764, %v2473, 0
      %v3461 = vsel %vm764, %v2474, 0
      %3463 = vmatprep.subr.bf16.mxu0 0
      %3464 = vmatpush1.bf16.msra.mxu0 %v3449
      %3465 = vmatprep.subr.bf16.mxu0 0
      %3466 = vmatpush1.bf16.msra.mxu0 0
      %3467 = vmatprep.subr.bf16.mxu0 0
      %3468 = vmatpush1.bf16.msra.mxu0 0
      %3469 = vmatprep.subr.bf16.mxu0 0
      %3470 = vmatpush1.bf16.msra.mxu0 0
      %3471 = vmatprep.subr.bf16.mxu0 0
      %3472 = vmatpush1.bf16.msra.mxu0 0
      %3473 = vmatprep.subr.bf16.mxu0 0
      %3474 = vmatpush1.bf16.msra.mxu0 0
      %3475 = vmatprep.subr.bf16.mxu0 0
      %3476 = vmatpush1.bf16.msra.mxu0 0
      %3477 = vmatprep.subr.bf16.mxu0 0
      %3478 = vmatpush1.bf16.msra.mxu0 0
      %3479 = vmatprep.subr.bf16.mxu0 0
      %3480 = vmatpush1.bf16.msra.mxu0 0
      %3481 = vmatprep.subr.bf16.mxu0 0
      %3482 = vmatpush1.bf16.msra.mxu0 0
      %3483 = vmatprep.subr.bf16.mxu0 0
      %3484 = vmatpush1.bf16.msra.mxu0 0
      %3485 = vmatprep.subr.bf16.mxu0 0
      %3486 = vmatpush1.bf16.msra.mxu0 0
      %3487 = vmatprep.subr.bf16.mxu0 0
      %3488 = vmatpush1.bf16.msra.mxu0 0
      %3489 = vmatprep.subr.bf16.mxu0 0
      %3490 = vmatpush1.bf16.msra.mxu0 0
      %3491 = vmatprep.subr.bf16.mxu0 0
      %3492 = vmatpush1.bf16.msra.mxu0 0
      %3493 = vmatprep.subr.bf16.mxu0 0
      %3494 = vmatpush1.bf16.msra.mxu0 0
      %3495 = vmatprep.mubr.bf16.mxu0 0
      %3496 = vmatmul.mubr.bf16.gmra.mrb[0].mxu0 %v3452
      %v3497 = vpop.f32.mrb[0].mxu0
      %v3498 = vadd.f32 0.0, %v3497
      %v3499 = vpop.f32.mrb[0].mxu0
      %v3500 = vpop.f32.mrb[0].mxu0
      %v3501 = vadd.f32 0.0, %v3500
      %v3502 = vpop.f32.mrb[0].mxu0
      %3503 = vmatprep.mubr.bf16.mxu0 0
      %3504 = vmatmul.mubr.bf16.gmra.mrb[0].mxu0 %v3455
      %v3505 = vpop.f32.mrb[0].mxu0
      %v3506 = vadd.f32 0.0, %v3505
      %v3507 = vpop.f32.mrb[0].mxu0
      %v3508 = vpop.f32.mrb[0].mxu0
      %v3509 = vadd.f32 0.0, %v3508
      %v3510 = vpop.f32.mrb[0].mxu0
      %3511 = vmatprep.mubr.bf16.mxu0 0
      %3512 = vmatmul.mubr.bf16.gmra.mrb[0].mxu0 %v3458
      %v3513 = vpop.f32.mrb[0].mxu0
      %v3514 = vadd.f32 0.0, %v3513
      %v3515 = vpop.f32.mrb[0].mxu0
      %v3516 = vpop.f32.mrb[0].mxu0
      %v3517 = vadd.f32 0.0, %v3516
      %v3518 = vpop.f32.mrb[0].mxu0
      %3519 = vmatprep.mubr.bf16.mxu0 0
      %3520 = vmatmul.mubr.bf16.gmra.mrb[0].mxu0 %v3461
      %v3521 = vpop.f32.mrb[0].mxu0
      %v3522 = vadd.f32 0.0, %v3521
      %v3523 = vpop.f32.mrb[0].mxu0
      %v3524 = vpop.f32.mrb[0].mxu0
      %v3525 = vadd.f32 0.0, %v3524
      %v3526 = vpop.f32.mrb[0].mxu0
      %3527 = vdwg.mxu0
      %v3528 = vadd.f32 %v3434, %v3498
      %v3529 = vadd.f32 %v3435, %v3501
      %v3530 = vadd.f32 %v3436, %v3506
      %v3531 = vadd.f32 %v3437, %v3509
      %v3532 = vadd.f32 %v3438, %v3514
      %v3533 = vadd.f32 %v3439, %v3517
      %v3534 = vadd.f32 %v3440, %v3522
      %v3535 = vadd.f32 %v3441, %v3525
      %s3536 = scalar_lea.vmem %s4, 88
      %v3537 = vld [vmem:[%s3536] sm:$0xf]
      %v3538 = vld [vmem:[%s3536 + $0x4] sm:$0xf]
      %v3541 = vunpack.c.l.b16 %v3537
      %v3542 = vunpack.c.l.b16 %v3538
      %v3543 = vpack.c.b16 %v3542, %v3541
      %v3546 = vsel %vm764, %v2475, 0
      %v3549 = vsel %vm764, %v2476, 0
      %v3552 = vsel %vm764, %v2477, 0
      %v3555 = vsel %vm764, %v2478, 0
      %3557 = vmatprep.subr.bf16.mxu0 0
      %3558 = vmatpush1.bf16.msra.mxu0 %v3543
      %3559 = vmatprep.subr.bf16.mxu0 0
      %3560 = vmatpush1.bf16.msra.mxu0 0
      %3561 = vmatprep.subr.bf16.mxu0 0
      %3562 = vmatpush1.bf16.msra.mxu0 0
      %3563 = vmatprep.subr.bf16.mxu0 0
      %3564 = vmatpush1.bf16.msra.mxu0 0
      %3565 = vmatprep.subr.bf16.mxu0 0
      %3566 = vmatpush1.bf16.msra.mxu0 0
      %3567 = vmatprep.subr.bf16.mxu0 0
      %3568 = vmatpush1.bf16.msra.mxu0 0
      %3569 = vmatprep.subr.bf16.mxu0 0
      %3570 = vmatpush1.bf16.msra.mxu0 0
      %3571 = vmatprep.subr.bf16.mxu0 0
      %3572 = vmatpush1.bf16.msra.mxu0 0
      %3573 = vmatprep.subr.bf16.mxu0 0
      %3574 = vmatpush1.bf16.msra.mxu0 0
      %3575 = vmatprep.subr.bf16.mxu0 0
      %3576 = vmatpush1.bf16.msra.mxu0 0
      %3577 = vmatprep.subr.bf16.mxu0 0
      %3578 = vmatpush1.bf16.msra.mxu0 0
      %3579 = vmatprep.subr.bf16.mxu0 0
      %3580 = vmatpush1.bf16.msra.mxu0 0
      %3581 = vmatprep.subr.bf16.mxu0 0
      %3582 = vmatpush1.bf16.msra.mxu0 0
      %3583 = vmatprep.subr.bf16.mxu0 0
      %3584 = vmatpush1.bf16.msra.mxu0 0
      %3585 = vmatprep.subr.bf16.mxu0 0
      %3586 = vmatpush1.bf16.msra.mxu0 0
      %3587 = vmatprep.subr.bf16.mxu0 0
      %3588 = vmatpush1.bf16.msra.mxu0 0
      %3589 = vmatprep.mubr.bf16.mxu0 0
      %3590 = vmatmul.mubr.bf16.gmra.mrb[0].mxu0 %v3546
      %v3591 = vpop.f32.mrb[0].mxu0
      %v3592 = vadd.f32 0.0, %v3591
      %v3593 = vpop.f32.mrb[0].mxu0
      %v3594 = vpop.f32.mrb[0].mxu0
      %v3595 = vadd.f32 0.0, %v3594
      %v3596 = vpop.f32.mrb[0].mxu0
      %3597 = vmatprep.mubr.bf16.mxu0 0
      %3598 = vmatmul.mubr.bf16.gmra.mrb[0].mxu0 %v3549
      %v3599 = vpop.f32.mrb[0].mxu0
      %v3600 = vadd.f32 0.0, %v3599
      %v3601 = vpop.f32.mrb[0].mxu0
      %v3602 = vpop.f32.mrb[0].mxu0
      %v3603 = vadd.f32 0.0, %v3602
      %v3604 = vpop.f32.mrb[0].mxu0
      %3605 = vmatprep.mubr.bf16.mxu0 0
      %3606 = vmatmul.mubr.bf16.gmra.mrb[0].mxu0 %v3552
      %v3607 = vpop.f32.mrb[0].mxu0
      %v3608 = vadd.f32 0.0, %v3607
      %v3609 = vpop.f32.mrb[0].mxu0
      %v3610 = vpop.f32.mrb[0].mxu0
      %v3611 = vadd.f32 0.0, %v3610
      %v3612 = vpop.f32.mrb[0].mxu0
      %3613 = vmatprep.mubr.bf16.mxu0 0
      %3614 = vmatmul.mubr.bf16.gmra.mrb[0].mxu0 %v3555
      %v3615 = vpop.f32.mrb[0].mxu0
      %v3616 = vadd.f32 0.0, %v3615
      %v3617 = vpop.f32.mrb[0].mxu0
      %v3618 = vpop.f32.mrb[0].mxu0
      %v3619 = vadd.f32 0.0, %v3618
      %v3620 = vpop.f32.mrb[0].mxu0
      %3621 = vdwg.mxu0
      %v3622 = vadd.f32 %v3528, %v3592
      %v3623 = vadd.f32 %v3529, %v3595
      %v3624 = vadd.f32 %v3530, %v3600
      %v3625 = vadd.f32 %v3531, %v3603
      %v3626 = vadd.f32 %v3532, %v3608
      %v3627 = vadd.f32 %v3533, %v3611
      %v3628 = vadd.f32 %v3534, %v3616
      %v3629 = vadd.f32 %v3535, %v3619
      %s3630 = scalar_lea.vmem %s4, 96
      %v3631 = vld [vmem:[%s3630] sm:$0xf]
      %v3632 = vld [vmem:[%s3630 + $0x4] sm:$0xf]
      %v3635 = vunpack.c.l.b16 %v3631
      %v3636 = vunpack.c.l.b16 %v3632
      %v3637 = vpack.c.b16 %v3636, %v3635
      %v3640 = vsel %vm764, %v2479, 0
      %v3643 = vsel %vm764, %v2480, 0
      %v3646 = vsel %vm764, %v2481, 0
      %v3649 = vsel %vm764, %v2482, 0
      %3651 = vmatprep.subr.bf16.mxu0 0
      %3652 = vmatpush1.bf16.msra.mxu0 %v3637
      %3653 = vmatprep.subr.bf16.mxu0 0
      %3654 = vmatpush1.bf16.msra.mxu0 0
      %3655 = vmatprep.subr.bf16.mxu0 0
      %3656 = vmatpush1.bf16.msra.mxu0 0
      %3657 = vmatprep.subr.bf16.mxu0 0
      %3658 = vmatpush1.bf16.msra.mxu0 0
      %3659 = vmatprep.subr.bf16.mxu0 0
      %3660 = vmatpush1.bf16.msra.mxu0 0
      %3661 = vmatprep.subr.bf16.mxu0 0
      %3662 = vmatpush1.bf16.msra.mxu0 0
      %3663 = vmatprep.subr.bf16.mxu0 0
      %3664 = vmatpush1.bf16.msra.mxu0 0
      %3665 = vmatprep.subr.bf16.mxu0 0
      %3666 = vmatpush1.bf16.msra.mxu0 0
      %3667 = vmatprep.subr.bf16.mxu0 0
      %3668 = vmatpush1.bf16.msra.mxu0 0
      %3669 = vmatprep.subr.bf16.mxu0 0
      %3670 = vmatpush1.bf16.msra.mxu0 0
      %3671 = vmatprep.subr.bf16.mxu0 0
      %3672 = vmatpush1.bf16.msra.mxu0 0
      %3673 = vmatprep.subr.bf16.mxu0 0
      %3674 = vmatpush1.bf16.msra.mxu0 0
      %3675 = vmatprep.subr.bf16.mxu0 0
      %3676 = vmatpush1.bf16.msra.mxu0 0
      %3677 = vmatprep.subr.bf16.mxu0 0
      %3678 = vmatpush1.bf16.msra.mxu0 0
      %3679 = vmatprep.subr.bf16.mxu0 0
      %3680 = vmatpush1.bf16.msra.mxu0 0
      %3681 = vmatprep.subr.bf16.mxu0 0
      %3682 = vmatpush1.bf16.msra.mxu0 0
      %3683 = vmatprep.mubr.bf16.mxu0 0
      %3684 = vmatmul.mubr.bf16.gmra.mrb[0].mxu0 %v3640
      %v3685 = vpop.f32.mrb[0].mxu0
      %v3686 = vadd.f32 0.0, %v3685
      %v3687 = vpop.f32.mrb[0].mxu0
      %v3688 = vpop.f32.mrb[0].mxu0
      %v3689 = vadd.f32 0.0, %v3688
      %v3690 = vpop.f32.mrb[0].mxu0
      %3691 = vmatprep.mubr.bf16.mxu0 0
      %3692 = vmatmul.mubr.bf16.gmra.mrb[0].mxu0 %v3643
      %v3693 = vpop.f32.mrb[0].mxu0
      %v3694 = vadd.f32 0.0, %v3693
      %v3695 = vpop.f32.mrb[0].mxu0
      %v3696 = vpop.f32.mrb[0].mxu0
      %v3697 = vadd.f32 0.0, %v3696
      %v3698 = vpop.f32.mrb[0].mxu0
      %3699 = vmatprep.mubr.bf16.mxu0 0
      %3700 = vmatmul.mubr.bf16.gmra.mrb[0].mxu0 %v3646
      %v3701 = vpop.f32.mrb[0].mxu0
      %v3702 = vadd.f32 0.0, %v3701
      %v3703 = vpop.f32.mrb[0].mxu0
      %v3704 = vpop.f32.mrb[0].mxu0
      %v3705 = vadd.f32 0.0, %v3704
      %v3706 = vpop.f32.mrb[0].mxu0
      %3707 = vmatprep.mubr.bf16.mxu0 0
      %3708 = vmatmul.mubr.bf16.gmra.mrb[0].mxu0 %v3649
      %v3709 = vpop.f32.mrb[0].mxu0
      %v3710 = vadd.f32 0.0, %v3709
      %v3711 = vpop.f32.mrb[0].mxu0
      %v3712 = vpop.f32.mrb[0].mxu0
      %v3713 = vadd.f32 0.0, %v3712
      %v3714 = vpop.f32.mrb[0].mxu0
      %3715 = vdwg.mxu0
      %v3716 = vadd.f32 %v3622, %v3686
      %v3717 = vadd.f32 %v3623, %v3689
      %v3718 = vadd.f32 %v3624, %v3694
      %v3719 = vadd.f32 %v3625, %v3697
      %v3720 = vadd.f32 %v3626, %v3702
      %v3721 = vadd.f32 %v3627, %v3705
      %v3722 = vadd.f32 %v3628, %v3710
      %v3723 = vadd.f32 %v3629, %v3713
      %s3724 = scalar_lea.vmem %s4, 104
      %v3725 = vld [vmem:[%s3724] sm:$0xf]
      %v3726 = vld [vmem:[%s3724 + $0x4] sm:$0xf]
      %v3729 = vunpack.c.l.b16 %v3725
      %v3730 = vunpack.c.l.b16 %v3726
      %v3731 = vpack.c.b16 %v3730, %v3729
      %v3734 = vsel %vm764, %v2483, 0
      %v3737 = vsel %vm764, %v2484, 0
      %v3740 = vsel %vm764, %v2485, 0
      %v3743 = vsel %vm764, %v2486, 0
      %3745 = vmatprep.subr.bf16.mxu0 0
      %3746 = vmatpush1.bf16.msra.mxu0 %v3731
      %3747 = vmatprep.subr.bf16.mxu0 0
      %3748 = vmatpush1.bf16.msra.mxu0 0
      %3749 = vmatprep.subr.bf16.mxu0 0
      %3750 = vmatpush1.bf16.msra.mxu0 0
      %3751 = vmatprep.subr.bf16.mxu0 0
      %3752 = vmatpush1.bf16.msra.mxu0 0
      %3753 = vmatprep.subr.bf16.mxu0 0
      %3754 = vmatpush1.bf16.msra.mxu0 0
      %3755 = vmatprep.subr.bf16.mxu0 0
      %3756 = vmatpush1.bf16.msra.mxu0 0
      %3757 = vmatprep.subr.bf16.mxu0 0
      %3758 = vmatpush1.bf16.msra.mxu0 0
      %3759 = vmatprep.subr.bf16.mxu0 0
      %3760 = vmatpush1.bf16.msra.mxu0 0
      %3761 = vmatprep.subr.bf16.mxu0 0
      %3762 = vmatpush1.bf16.msra.mxu0 0
      %3763 = vmatprep.subr.bf16.mxu0 0
      %3764 = vmatpush1.bf16.msra.mxu0 0
      %3765 = vmatprep.subr.bf16.mxu0 0
      %3766 = vmatpush1.bf16.msra.mxu0 0
      %3767 = vmatprep.subr.bf16.mxu0 0
      %3768 = vmatpush1.bf16.msra.mxu0 0
      %3769 = vmatprep.subr.bf16.mxu0 0
      %3770 = vmatpush1.bf16.msra.mxu0 0
      %3771 = vmatprep.subr.bf16.mxu0 0
      %3772 = vmatpush1.bf16.msra.mxu0 0
      %3773 = vmatprep.subr.bf16.mxu0 0
      %3774 = vmatpush1.bf16.msra.mxu0 0
      %3775 = vmatprep.subr.bf16.mxu0 0
      %3776 = vmatpush1.bf16.msra.mxu0 0
      %3777 = vmatprep.mubr.bf16.mxu0 0
      %3778 = vmatmul.mubr.bf16.gmra.mrb[0].mxu0 %v3734
      %v3779 = vpop.f32.mrb[0].mxu0
      %v3780 = vadd.f32 0.0, %v3779
      %v3781 = vpop.f32.mrb[0].mxu0
      %v3782 = vpop.f32.mrb[0].mxu0
      %v3783 = vadd.f32 0.0, %v3782
      %v3784 = vpop.f32.mrb[0].mxu0
      %3785 = vmatprep.mubr.bf16.mxu0 0
      %3786 = vmatmul.mubr.bf16.gmra.mrb[0].mxu0 %v3737
      %v3787 = vpop.f32.mrb[0].mxu0
      %v3788 = vadd.f32 0.0, %v3787
      %v3789 = vpop.f32.mrb[0].mxu0
      %v3790 = vpop.f32.mrb[0].mxu0
      %v3791 = vadd.f32 0.0, %v3790
      %v3792 = vpop.f32.mrb[0].mxu0
      %3793 = vmatprep.mubr.bf16.mxu0 0
      %3794 = vmatmul.mubr.bf16.gmra.mrb[0].mxu0 %v3740
      %v3795 = vpop.f32.mrb[0].mxu0
      %v3796 = vadd.f32 0.0, %v3795
      %v3797 = vpop.f32.mrb[0].mxu0
      %v3798 = vpop.f32.mrb[0].mxu0
      %v3799 = vadd.f32 0.0, %v3798
      %v3800 = vpop.f32.mrb[0].mxu0
      %3801 = vmatprep.mubr.bf16.mxu0 0
      %3802 = vmatmul.mubr.bf16.gmra.mrb[0].mxu0 %v3743
      %v3803 = vpop.f32.mrb[0].mxu0
      %v3804 = vadd.f32 0.0, %v3803
      %v3805 = vpop.f32.mrb[0].mxu0
      %v3806 = vpop.f32.mrb[0].mxu0
      %v3807 = vadd.f32 0.0, %v3806
      %v3808 = vpop.f32.mrb[0].mxu0
      %3809 = vdwg.mxu0
      %v3810 = vadd.f32 %v3716, %v3780
      %v3811 = vadd.f32 %v3717, %v3783
      %v3812 = vadd.f32 %v3718, %v3788
      %v3813 = vadd.f32 %v3719, %v3791
      %v3814 = vadd.f32 %v3720, %v3796
      %v3815 = vadd.f32 %v3721, %v3799
      %v3816 = vadd.f32 %v3722, %v3804
      %v3817 = vadd.f32 %v3723, %v3807
      %s3818 = scalar_lea.vmem %s4, 112
      %v3819 = vld [vmem:[%s3818] sm:$0xf]
      %v3820 = vld [vmem:[%s3818 + $0x4] sm:$0xf]
      %v3823 = vunpack.c.l.b16 %v3819
      %v3824 = vunpack.c.l.b16 %v3820
      %v3825 = vpack.c.b16 %v3824, %v3823
      %v3828 = vsel %vm764, %v2487, 0
      %v3831 = vsel %vm764, %v2488, 0
      %v3834 = vsel %vm764, %v2489, 0
      %v3837 = vsel %vm764, %v2490, 0
      %3839 = vmatprep.subr.bf16.mxu0 0
      %3840 = vmatpush1.bf16.msra.mxu0 %v3825
      %3841 = vmatprep.subr.bf16.mxu0 0
      %3842 = vmatpush1.bf16.msra.mxu0 0
      %3843 = vmatprep.subr.bf16.mxu0 0
      %3844 = vmatpush1.bf16.msra.mxu0 0
      %3845 = vmatprep.subr.bf16.mxu0 0
      %3846 = vmatpush1.bf16.msra.mxu0 0
      %3847 = vmatprep.subr.bf16.mxu0 0
      %3848 = vmatpush1.bf16.msra.mxu0 0
      %3849 = vmatprep.subr.bf16.mxu0 0
      %3850 = vmatpush1.bf16.msra.mxu0 0
      %3851 = vmatprep.subr.bf16.mxu0 0
      %3852 = vmatpush1.bf16.msra.mxu0 0
      %3853 = vmatprep.subr.bf16.mxu0 0
      %3854 = vmatpush1.bf16.msra.mxu0 0
      %3855 = vmatprep.subr.bf16.mxu0 0
      %3856 = vmatpush1.bf16.msra.mxu0 0
      %3857 = vmatprep.subr.bf16.mxu0 0
      %3858 = vmatpush1.bf16.msra.mxu0 0
      %3859 = vmatprep.subr.bf16.mxu0 0
      %3860 = vmatpush1.bf16.msra.mxu0 0
      %3861 = vmatprep.subr.bf16.mxu0 0
      %3862 = vmatpush1.bf16.msra.mxu0 0
      %3863 = vmatprep.subr.bf16.mxu0 0
      %3864 = vmatpush1.bf16.msra.mxu0 0
      %3865 = vmatprep.subr.bf16.mxu0 0
      %3866 = vmatpush1.bf16.msra.mxu0 0
      %3867 = vmatprep.subr.bf16.mxu0 0
      %3868 = vmatpush1.bf16.msra.mxu0 0
      %3869 = vmatprep.subr.bf16.mxu0 0
      %3870 = vmatpush1.bf16.msra.mxu0 0
      %3871 = vmatprep.mubr.bf16.mxu0 0
      %3872 = vmatmul.mubr.bf16.gmra.mrb[0].mxu0 %v3828
      %v3873 = vpop.f32.mrb[0].mxu0
      %v3874 = vadd.f32 0.0, %v3873
      %v3875 = vpop.f32.mrb[0].mxu0
      %v3876 = vpop.f32.mrb[0].mxu0
      %v3877 = vadd.f32 0.0, %v3876
      %v3878 = vpop.f32.mrb[0].mxu0
      %3879 = vmatprep.mubr.bf16.mxu0 0
      %3880 = vmatmul.mubr.bf16.gmra.mrb[0].mxu0 %v3831
      %v3881 = vpop.f32.mrb[0].mxu0
      %v3882 = vadd.f32 0.0, %v3881
      %v3883 = vpop.f32.mrb[0].mxu0
      %v3884 = vpop.f32.mrb[0].mxu0
      %v3885 = vadd.f32 0.0, %v3884
      %v3886 = vpop.f32.mrb[0].mxu0
      %3887 = vmatprep.mubr.bf16.mxu0 0
      %3888 = vmatmul.mubr.bf16.gmra.mrb[0].mxu0 %v3834
      %v3889 = vpop.f32.mrb[0].mxu0
      %v3890 = vadd.f32 0.0, %v3889
      %v3891 = vpop.f32.mrb[0].mxu0
      %v3892 = vpop.f32.mrb[0].mxu0
      %v3893 = vadd.f32 0.0, %v3892
      %v3894 = vpop.f32.mrb[0].mxu0
      %3895 = vmatprep.mubr.bf16.mxu0 0
      %3896 = vmatmul.mubr.bf16.gmra.mrb[0].mxu0 %v3837
      %v3897 = vpop.f32.mrb[0].mxu0
      %v3898 = vadd.f32 0.0, %v3897
      %v3899 = vpop.f32.mrb[0].mxu0
      %v3900 = vpop.f32.mrb[0].mxu0
      %v3901 = vadd.f32 0.0, %v3900
      %v3902 = vpop.f32.mrb[0].mxu0
      %3903 = vdwg.mxu0
      %v3904 = vadd.f32 %v3810, %v3874
      %v3905 = vadd.f32 %v3811, %v3877
      %v3906 = vadd.f32 %v3812, %v3882
      %v3907 = vadd.f32 %v3813, %v3885
      %v3908 = vadd.f32 %v3814, %v3890
      %v3909 = vadd.f32 %v3815, %v3893
      %v3910 = vadd.f32 %v3816, %v3898
      %v3911 = vadd.f32 %v3817, %v3901
      %s3912 = scalar_lea.vmem %s4, 120
      %v3913 = vld [vmem:[%s3912] sm:$0xf]
      %v3914 = vld [vmem:[%s3912 + $0x4] sm:$0xf]
      %v3917 = vunpack.c.l.b16 %v3913
      %v3918 = vunpack.c.l.b16 %v3914
      %v3919 = vpack.c.b16 %v3918, %v3917
      %v3922 = vsel %vm764, %v2491, 0
      %v3925 = vsel %vm764, %v2492, 0
      %v3928 = vsel %vm764, %v2493, 0
      %v3931 = vsel %vm764, %v2494, 0
      %3933 = vmatprep.subr.bf16.mxu0 0
      %3934 = vmatpush1.bf16.msra.mxu0 %v3919
      %3935 = vmatprep.subr.bf16.mxu0 0
      %3936 = vmatpush1.bf16.msra.mxu0 0
      %3937 = vmatprep.subr.bf16.mxu0 0
      %3938 = vmatpush1.bf16.msra.mxu0 0
      %3939 = vmatprep.subr.bf16.mxu0 0
      %3940 = vmatpush1.bf16.msra.mxu0 0
      %3941 = vmatprep.subr.bf16.mxu0 0
      %3942 = vmatpush1.bf16.msra.mxu0 0
      %3943 = vmatprep.subr.bf16.mxu0 0
      %3944 = vmatpush1.bf16.msra.mxu0 0
      %3945 = vmatprep.subr.bf16.mxu0 0
      %3946 = vmatpush1.bf16.msra.mxu0 0
      %3947 = vmatprep.subr.bf16.mxu0 0
      %3948 = vmatpush1.bf16.msra.mxu0 0
      %3949 = vmatprep.subr.bf16.mxu0 0
      %3950 = vmatpush1.bf16.msra.mxu0 0
      %3951 = vmatprep.subr.bf16.mxu0 0
      %3952 = vmatpush1.bf16.msra.mxu0 0
      %3953 = vmatprep.subr.bf16.mxu0 0
      %3954 = vmatpush1.bf16.msra.mxu0 0
      %3955 = vmatprep.subr.bf16.mxu0 0
      %3956 = vmatpush1.bf16.msra.mxu0 0
      %3957 = vmatprep.subr.bf16.mxu0 0
      %3958 = vmatpush1.bf16.msra.mxu0 0
      %3959 = vmatprep.subr.bf16.mxu0 0
      %3960 = vmatpush1.bf16.msra.mxu0 0
      %3961 = vmatprep.subr.bf16.mxu0 0
      %3962 = vmatpush1.bf16.msra.mxu0 0
      %3963 = vmatprep.subr.bf16.mxu0 0
      %3964 = vmatpush1.bf16.msra.mxu0 0
      %3965 = vmatprep.mubr.bf16.mxu0 0
      %3966 = vmatmul.mubr.bf16.gmra.mrb[0].mxu0 %v3922
      %v3967 = vpop.f32.mrb[0].mxu0
      %v3968 = vadd.f32 0.0, %v3967
      %v3969 = vpop.f32.mrb[0].mxu0
      %v3970 = vpop.f32.mrb[0].mxu0
      %v3971 = vadd.f32 0.0, %v3970
      %v3972 = vpop.f32.mrb[0].mxu0
      %3973 = vmatprep.mubr.bf16.mxu0 0
      %3974 = vmatmul.mubr.bf16.gmra.mrb[0].mxu0 %v3925
      %v3975 = vpop.f32.mrb[0].mxu0
      %v3976 = vadd.f32 0.0, %v3975
      %v3977 = vpop.f32.mrb[0].mxu0
      %v3978 = vpop.f32.mrb[0].mxu0
      %v3979 = vadd.f32 0.0, %v3978
      %v3980 = vpop.f32.mrb[0].mxu0
      %3981 = vmatprep.mubr.bf16.mxu0 0
      %3982 = vmatmul.mubr.bf16.gmra.mrb[0].mxu0 %v3928
      %v3983 = vpop.f32.mrb[0].mxu0
      %v3984 = vadd.f32 0.0, %v3983
      %v3985 = vpop.f32.mrb[0].mxu0
      %v3986 = vpop.f32.mrb[0].mxu0
      %v3987 = vadd.f32 0.0, %v3986
      %v3988 = vpop.f32.mrb[0].mxu0
      %3989 = vmatprep.mubr.bf16.mxu0 0
      %3990 = vmatmul.mubr.bf16.gmra.mrb[0].mxu0 %v3931
      %v3991 = vpop.f32.mrb[0].mxu0
      %v3992 = vadd.f32 0.0, %v3991
      %v3993 = vpop.f32.mrb[0].mxu0
      %v3994 = vpop.f32.mrb[0].mxu0
      %v3995 = vadd.f32 0.0, %v3994
      %v3996 = vpop.f32.mrb[0].mxu0
      %3997 = vdwg.mxu0
      %v3998 = vadd.f32 %v3904, %v3968
      %v3999 = vadd.f32 %v3905, %v3971
      %v4000 = vadd.f32 %v3906, %v3976
      %v4001 = vadd.f32 %v3907, %v3979
      %v4002 = vadd.f32 %v3908, %v3984
      %v4003 = vadd.f32 %v3909, %v3987
      %v4004 = vadd.f32 %v3910, %v3992
      %v4005 = vadd.f32 %v3911, %v3995
      %vm4006 = vcmask 261120
      %v4007 = vsel %vm4006, %v3998, 0.0
      %v4008 = vsel %vm4006, %v3999, 0.0
      %v4009 = vadd.f32 %v4007, %v4008
      %v4010 = vsel %vm4006, %v4000, 0.0
      %v4011 = vadd.f32 %v4009, %v4010
      %v4012 = vsel %vm4006, %v4001, 0.0
      %v4013 = vadd.f32 %v4011, %v4012
      %v4014 = vsel %vm4006, %v4002, 0.0
      %v4015 = vadd.f32 %v4013, %v4014
      %v4016 = vsel %vm4006, %v4003, 0.0
      %v4017 = vadd.f32 %v4015, %v4016
      %v4018 = vsel %vm4006, %v4004, 0.0
      %v4019 = vadd.f32 %v4017, %v4018
      %v4020 = vsel %vm4006, %v4005, 0.0
      %v4021 = vadd.f32 %v4019, %v4020
      %v4022 = vrot.slane %v4021, 4
      %v4023 = vadd.f32 %v4021, %v4022
      %v4024 = vrot.slane %v4023, 2
      %v4025 = vadd.f32 %v4023, %v4024
      %v4026 = vrot.slane %v4025, 1
      %v4027 = vadd.f32 %v4025, %v4026
      %v4028 = vrcp.pop 64.0
      %v4029 = vmul.f32 %v4027, %v4028
      %v4030 = vmul.f32 %v3998, %v3998
      %v4031 = vmul.f32 %v3999, %v3999
      %v4032 = vmul.f32 %v4000, %v4000
      %v4033 = vmul.f32 %v4001, %v4001
      %v4034 = vmul.f32 %v4002, %v4002
      %v4035 = vmul.f32 %v4003, %v4003
      %v4036 = vmul.f32 %v4004, %v4004
      %v4037 = vmul.f32 %v4005, %v4005
      %v4038 = vsel %vm4006, %v4030, 0.0
      %v4039 = vsel %vm4006, %v4031, 0.0
      %v4040 = vadd.f32 %v4038, %v4039
      %v4041 = vsel %vm4006, %v4032, 0.0
      %v4042 = vadd.f32 %v4040, %v4041
      %v4043 = vsel %vm4006, %v4033, 0.0
      %v4044 = vadd.f32 %v4042, %v4043
      %v4045 = vsel %vm4006, %v4034, 0.0
      %v4046 = vadd.f32 %v4044, %v4045
      %v4047 = vsel %vm4006, %v4035, 0.0
      %v4048 = vadd.f32 %v4046, %v4047
      %v4049 = vsel %vm4006, %v4036, 0.0
      %v4050 = vadd.f32 %v4048, %v4049
      %v4051 = vsel %vm4006, %v4037, 0.0
      %v4052 = vadd.f32 %v4050, %v4051
      %v4053 = vrot.slane %v4052, 4
      %v4054 = vadd.f32 %v4052, %v4053
      %v4055 = vrot.slane %v4054, 2
      %v4056 = vadd.f32 %v4054, %v4055
      %v4057 = vrot.slane %v4056, 1
      %v4058 = vadd.f32 %v4056, %v4057
      %v4059 = vmul.f32 %v4058, %v4028
      %v4060 = vmul.f32 %v4029, %v4029
      %v4061 = vsub.f32 %v4059, %v4060
      %v4062 = vsub.f32 %v3998, %v4029
      %v4063 = vsub.f32 %v3999, %v4029
      %v4064 = vsub.f32 %v4000, %v4029
      %v4065 = vsub.f32 %v4001, %v4029
      %v4066 = vsub.f32 %v4002, %v4029
      %v4067 = vsub.f32 %v4003, %v4029
      %v4068 = vsub.f32 %v4004, %v4029
      %v4069 = vsub.f32 %v4005, %v4029
      %v4070 = vadd.f32 %v4061, 1e-05
      %v4071 = vrsqrt.pop %v4070
      %v4072 = vmul.f32 %v4062, %v4071
      %v4073 = vmul.f32 %v4063, %v4071
      %v4074 = vmul.f32 %v4064, %v4071
      %v4075 = vmul.f32 %v4065, %v4071
      %v4076 = vmul.f32 %v4066, %v4071
      %v4077 = vmul.f32 %v4067, %v4071
      %v4078 = vmul.f32 %v4068, %v4071
      %v4079 = vmul.f32 %v4069, %v4071
      %vm4080 = vcmp.gt.f32.partialorder %v4072, 0.0
      %vm4081 = vcmp.gt.f32.partialorder %v4073, 0.0
      %vm4082 = vcmp.gt.f32.partialorder %v4074, 0.0
      %vm4083 = vcmp.gt.f32.partialorder %v4075, 0.0
      %vm4084 = vcmp.gt.f32.partialorder %v4076, 0.0
      %vm4085 = vcmp.gt.f32.partialorder %v4077, 0.0
      %vm4086 = vcmp.gt.f32.partialorder %v4078, 0.0
      %vm4087 = vcmp.gt.f32.partialorder %v4079, 0.0
      %v4088 = vmul.f32 %v4072, 0.2
      %v4089 = vmul.f32 %v4073, 0.2
      %v4090 = vmul.f32 %v4074, 0.2
      %v4091 = vmul.f32 %v4075, 0.2
      %v4092 = vmul.f32 %v4076, 0.2
      %v4093 = vmul.f32 %v4077, 0.2
      %v4094 = vmul.f32 %v4078, 0.2
      %v4095 = vmul.f32 %v4079, 0.2
      %v4096 = vsel %vm4080, %v4072, %v4088
      %v4097 = vsel %vm4081, %v4073, %v4089
      %v4098 = vsel %vm4082, %v4074, %v4090
      %v4099 = vsel %vm4083, %v4075, %v4091
      %v4100 = vsel %vm4084, %v4076, %v4092
      %v4101 = vsel %vm4085, %v4077, %v4093
      %v4102 = vsel %vm4086, %v4078, %v4094
      %v4103 = vsel %vm4087, %v4079, %v4095
      %v4104 = vpack.c.bf16 %v4097, %v4096
      %v4105 = vpack.c.bf16 %v4099, %v4098
      %v4106 = vpack.c.bf16 %v4101, %v4100
      %v4107 = vpack.c.bf16 %v4103, %v4102
      %v4108 = vld [vmem:[%s6] sm:$0xf]
      %v4109 = vld [vmem:[%s6 + $0x4] sm:$0xf]
      %v4110 = vld [vmem:[%s6 + $0x8] sm:$0xf]
      %v4111 = vld [vmem:[%s6 + $0xc] sm:$0xf]
      %v4112 = vld [vmem:[%s6 + $0x10] sm:$0xf]
      %v4113 = vld [vmem:[%s6 + $0x14] sm:$0xf]
      %v4114 = vld [vmem:[%s6 + $0x18] sm:$0xf]
      %v4115 = vld [vmem:[%s6 + $0x1c] sm:$0xf]
      %v4116 = vld [vmem:[%s6 + $0x20] sm:$0xf]
      %v4117 = vld [vmem:[%s6 + $0x24] sm:$0xf]
      %v4118 = vld [vmem:[%s6 + $0x28] sm:$0xf]
      %v4119 = vld [vmem:[%s6 + $0x2c] sm:$0xf]
      %v4120 = vld [vmem:[%s6 + $0x30] sm:$0xf]
      %v4121 = vld [vmem:[%s6 + $0x34] sm:$0xf]
      %v4122 = vld [vmem:[%s6 + $0x38] sm:$0xf]
      %v4123 = vld [vmem:[%s6 + $0x3c] sm:$0xf]
      %v4124 = vld [vmem:[%s6 + $0x40] sm:$0xf]
      %v4125 = vld [vmem:[%s6 + $0x44] sm:$0xf]
      %v4126 = vld [vmem:[%s6 + $0x48] sm:$0xf]
      %v4127 = vld [vmem:[%s6 + $0x4c] sm:$0xf]
      %v4128 = vld [vmem:[%s6 + $0x50] sm:$0xf]
      %v4129 = vld [vmem:[%s6 + $0x54] sm:$0xf]
      %v4130 = vld [vmem:[%s6 + $0x58] sm:$0xf]
      %v4131 = vld [vmem:[%s6 + $0x5c] sm:$0xf]
      %v4132 = vld [vmem:[%s6 + $0x60] sm:$0xf]
      %v4133 = vld [vmem:[%s6 + $0x64] sm:$0xf]
      %v4134 = vld [vmem:[%s6 + $0x68] sm:$0xf]
      %v4135 = vld [vmem:[%s6 + $0x6c] sm:$0xf]
      %v4136 = vld [vmem:[%s6 + $0x70] sm:$0xf]
      %v4137 = vld [vmem:[%s6 + $0x74] sm:$0xf]
      %v4138 = vld [vmem:[%s6 + $0x78] sm:$0xf]
      %v4139 = vld [vmem:[%s6 + $0x7c] sm:$0xf]
      %v4172 = vunpack.c.l.b16 %v4108
      %v4173 = vunpack.c.l.b16 %v4109
      %v4174 = vunpack.c.l.b16 %v4110
      %v4175 = vunpack.c.l.b16 %v4111
      %v4176 = vunpack.c.l.b16 %v4112
      %v4177 = vunpack.c.l.b16 %v4113
      %v4178 = vunpack.c.l.b16 %v4114
      %v4179 = vunpack.c.l.b16 %v4115
      %v4180 = vunpack.c.l.b16 %v4116
      %v4181 = vunpack.c.l.b16 %v4117
      %v4182 = vunpack.c.l.b16 %v4118
      %v4183 = vunpack.c.l.b16 %v4119
      %v4184 = vunpack.c.l.b16 %v4120
      %v4185 = vunpack.c.l.b16 %v4121
      %v4186 = vunpack.c.l.b16 %v4122
      %v4187 = vunpack.c.l.b16 %v4123
      %v4188 = vunpack.c.l.b16 %v4124
      %v4189 = vunpack.c.l.b16 %v4125
      %v4190 = vunpack.c.l.b16 %v4126
      %v4191 = vunpack.c.l.b16 %v4127
      %v4192 = vunpack.c.l.b16 %v4128
      %v4193 = vunpack.c.l.b16 %v4129
      %v4194 = vunpack.c.l.b16 %v4130
      %v4195 = vunpack.c.l.b16 %v4131
      %v4196 = vunpack.c.l.b16 %v4132
      %v4197 = vunpack.c.l.b16 %v4133
      %v4198 = vunpack.c.l.b16 %v4134
      %v4199 = vunpack.c.l.b16 %v4135
      %v4200 = vunpack.c.l.b16 %v4136
      %v4201 = vunpack.c.l.b16 %v4137
      %v4202 = vunpack.c.l.b16 %v4138
      %v4203 = vunpack.c.l.b16 %v4139
      %v4204 = vpack.c.b16 %v4173, %v4172
      %v4205 = vpack.c.b16 %v4175, %v4174
      %v4206 = vpack.c.b16 %v4177, %v4176
      %v4207 = vpack.c.b16 %v4179, %v4178
      %v4208 = vpack.c.b16 %v4181, %v4180
      %v4209 = vpack.c.b16 %v4183, %v4182
      %v4210 = vpack.c.b16 %v4185, %v4184
      %v4211 = vpack.c.b16 %v4187, %v4186
      %v4212 = vpack.c.b16 %v4189, %v4188
      %v4213 = vpack.c.b16 %v4191, %v4190
      %v4214 = vpack.c.b16 %v4193, %v4192
      %v4215 = vpack.c.b16 %v4195, %v4194
      %v4216 = vpack.c.b16 %v4197, %v4196
      %v4217 = vpack.c.b16 %v4199, %v4198
      %v4218 = vpack.c.b16 %v4201, %v4200
      %v4219 = vpack.c.b16 %v4203, %v4202
      %vm4220 = vcmask 523264
      %v4222 = vsel %vm4220, %v4204, 0
      %v4225 = vsel %vm4220, %v4205, 0
      %v4228 = vsel %vm4220, %v4206, 0
      %v4231 = vsel %vm4220, %v4207, 0
      %v4234 = vsel %vm4220, %v4208, 0
      %v4237 = vsel %vm4220, %v4209, 0
      %v4240 = vsel %vm4220, %v4210, 0
      %v4243 = vsel %vm4220, %v4211, 0
      %v4246 = vsel %vm4220, %v4212, 0
      %v4249 = vsel %vm4220, %v4213, 0
      %v4252 = vsel %vm4220, %v4214, 0
      %v4255 = vsel %vm4220, %v4215, 0
      %v4258 = vsel %vm4220, %v4216, 0
      %v4261 = vsel %vm4220, %v4217, 0
      %v4264 = vsel %vm4220, %v4218, 0
      %v4267 = vsel %vm4220, %v4219, 0
      %4269 = vmatprep.subr.bf16.mxu0 0
      %4270 = vmatpush1.bf16.msra.mxu0 %v4104
      %4271 = vmatprep.subr.bf16.mxu0 0
      %4272 = vmatpush1.bf16.msra.mxu0 %v4105
      %4273 = vmatprep.subr.bf16.mxu0 0
      %4274 = vmatpush1.bf16.msra.mxu0 %v4106
      %4275 = vmatprep.subr.bf16.mxu0 0
      %4276 = vmatpush1.bf16.msra.mxu0 %v4107
      %4277 = vmatprep.subr.bf16.mxu0 0
      %4278 = vmatpush1.bf16.msra.mxu0 0
      %4279 = vmatprep.subr.bf16.mxu0 0
      %4280 = vmatpush1.bf16.msra.mxu0 0
      %4281 = vmatprep.subr.bf16.mxu0 0
      %4282 = vmatpush1.bf16.msra.mxu0 0
      %4283 = vmatprep.subr.bf16.mxu0 0
      %4284 = vmatpush1.bf16.msra.mxu0 0
      %4285 = vmatprep.subr.bf16.mxu0 0
      %4286 = vmatpush1.bf16.msra.mxu0 0
      %4287 = vmatprep.subr.bf16.mxu0 0
      %4288 = vmatpush1.bf16.msra.mxu0 0
      %4289 = vmatprep.subr.bf16.mxu0 0
      %4290 = vmatpush1.bf16.msra.mxu0 0
      %4291 = vmatprep.subr.bf16.mxu0 0
      %4292 = vmatpush1.bf16.msra.mxu0 0
      %4293 = vmatprep.subr.bf16.mxu0 0
      %4294 = vmatpush1.bf16.msra.mxu0 0
      %4295 = vmatprep.subr.bf16.mxu0 0
      %4296 = vmatpush1.bf16.msra.mxu0 0
      %4297 = vmatprep.subr.bf16.mxu0 0
      %4298 = vmatpush1.bf16.msra.mxu0 0
      %4299 = vmatprep.subr.bf16.mxu0 0
      %4300 = vmatpush1.bf16.msra.mxu0 0
      %4301 = vmatprep.mubr.bf16.mxu0 0
      %4302 = vmatmul.mubr.bf16.gmra.mrb[0].mxu0 %v4222
      %v4303 = vpop.f32.mrb[0].mxu0
      %v4304 = vadd.f32 0.0, %v4303
      %v4305 = vpop.f32.mrb[0].mxu0
      %v4306 = vpop.f32.mrb[0].mxu0
      %v4307 = vadd.f32 0.0, %v4306
      %v4308 = vpop.f32.mrb[0].mxu0
      %4309 = vmatprep.mubr.bf16.mxu0 0
      %4310 = vmatmul.mubr.bf16.gmra.mrb[0].mxu0 %v4225
      %v4311 = vpop.f32.mrb[0].mxu0
      %v4312 = vadd.f32 0.0, %v4311
      %v4313 = vpop.f32.mrb[0].mxu0
      %v4314 = vpop.f32.mrb[0].mxu0
      %v4315 = vadd.f32 0.0, %v4314
      %v4316 = vpop.f32.mrb[0].mxu0
      %4317 = vmatprep.mubr.bf16.mxu0 0
      %4318 = vmatmul.mubr.bf16.gmra.mrb[0].mxu0 %v4228
      %v4319 = vpop.f32.mrb[0].mxu0
      %v4320 = vadd.f32 0.0, %v4319
      %v4321 = vpop.f32.mrb[0].mxu0
      %v4322 = vpop.f32.mrb[0].mxu0
      %v4323 = vadd.f32 0.0, %v4322
      %v4324 = vpop.f32.mrb[0].mxu0
      %4325 = vmatprep.mubr.bf16.mxu0 0
      %4326 = vmatmul.mubr.bf16.gmra.mrb[0].mxu0 %v4231
      %v4327 = vpop.f32.mrb[0].mxu0
      %v4328 = vadd.f32 0.0, %v4327
      %v4329 = vpop.f32.mrb[0].mxu0
      %v4330 = vpop.f32.mrb[0].mxu0
      %v4331 = vadd.f32 0.0, %v4330
      %v4332 = vpop.f32.mrb[0].mxu0
      %4333 = vmatprep.mubr.bf16.mxu0 0
      %4334 = vmatmul.mubr.bf16.gmra.mrb[0].mxu0 %v4234
      %v4335 = vpop.f32.mrb[0].mxu0
      %v4336 = vadd.f32 0.0, %v4335
      %v4337 = vpop.f32.mrb[0].mxu0
      %v4338 = vpop.f32.mrb[0].mxu0
      %v4339 = vadd.f32 0.0, %v4338
      %v4340 = vpop.f32.mrb[0].mxu0
      %4341 = vmatprep.mubr.bf16.mxu0 0
      %4342 = vmatmul.mubr.bf16.gmra.mrb[0].mxu0 %v4237
      %v4343 = vpop.f32.mrb[0].mxu0
      %v4344 = vadd.f32 0.0, %v4343
      %v4345 = vpop.f32.mrb[0].mxu0
      %v4346 = vpop.f32.mrb[0].mxu0
      %v4347 = vadd.f32 0.0, %v4346
      %v4348 = vpop.f32.mrb[0].mxu0
      %4349 = vmatprep.mubr.bf16.mxu0 0
      %4350 = vmatmul.mubr.bf16.gmra.mrb[0].mxu0 %v4240
      %v4351 = vpop.f32.mrb[0].mxu0
      %v4352 = vadd.f32 0.0, %v4351
      %v4353 = vpop.f32.mrb[0].mxu0
      %v4354 = vpop.f32.mrb[0].mxu0
      %v4355 = vadd.f32 0.0, %v4354
      %v4356 = vpop.f32.mrb[0].mxu0
      %4357 = vmatprep.mubr.bf16.mxu0 0
      %4358 = vmatmul.mubr.bf16.gmra.mrb[0].mxu0 %v4243
      %v4359 = vpop.f32.mrb[0].mxu0
      %v4360 = vadd.f32 0.0, %v4359
      %v4361 = vpop.f32.mrb[0].mxu0
      %v4362 = vpop.f32.mrb[0].mxu0
      %v4363 = vadd.f32 0.0, %v4362
      %v4364 = vpop.f32.mrb[0].mxu0
      %4365 = vmatprep.mubr.bf16.mxu0 0
      %4366 = vmatmul.mubr.bf16.gmra.mrb[0].mxu0 %v4246
      %v4367 = vpop.f32.mrb[0].mxu0
      %v4368 = vadd.f32 0.0, %v4367
      %v4369 = vpop.f32.mrb[0].mxu0
      %v4370 = vpop.f32.mrb[0].mxu0
      %v4371 = vadd.f32 0.0, %v4370
      %v4372 = vpop.f32.mrb[0].mxu0
      %4373 = vmatprep.mubr.bf16.mxu0 0
      %4374 = vmatmul.mubr.bf16.gmra.mrb[0].mxu0 %v4249
      %v4375 = vpop.f32.mrb[0].mxu0
      %v4376 = vadd.f32 0.0, %v4375
      %v4377 = vpop.f32.mrb[0].mxu0
      %v4378 = vpop.f32.mrb[0].mxu0
      %v4379 = vadd.f32 0.0, %v4378
      %v4380 = vpop.f32.mrb[0].mxu0
      %4381 = vmatprep.mubr.bf16.mxu0 0
      %4382 = vmatmul.mubr.bf16.gmra.mrb[0].mxu0 %v4252
      %v4383 = vpop.f32.mrb[0].mxu0
      %v4384 = vadd.f32 0.0, %v4383
      %v4385 = vpop.f32.mrb[0].mxu0
      %v4386 = vpop.f32.mrb[0].mxu0
      %v4387 = vadd.f32 0.0, %v4386
      %v4388 = vpop.f32.mrb[0].mxu0
      %4389 = vmatprep.mubr.bf16.mxu0 0
      %4390 = vmatmul.mubr.bf16.gmra.mrb[0].mxu0 %v4255
      %v4391 = vpop.f32.mrb[0].mxu0
      %v4392 = vadd.f32 0.0, %v4391
      %v4393 = vpop.f32.mrb[0].mxu0
      %v4394 = vpop.f32.mrb[0].mxu0
      %v4395 = vadd.f32 0.0, %v4394
      %v4396 = vpop.f32.mrb[0].mxu0
      %4397 = vmatprep.mubr.bf16.mxu0 0
      %4398 = vmatmul.mubr.bf16.gmra.mrb[0].mxu0 %v4258
      %v4399 = vpop.f32.mrb[0].mxu0
      %v4400 = vadd.f32 0.0, %v4399
      %v4401 = vpop.f32.mrb[0].mxu0
      %v4402 = vpop.f32.mrb[0].mxu0
      %v4403 = vadd.f32 0.0, %v4402
      %v4404 = vpop.f32.mrb[0].mxu0
      %4405 = vmatprep.mubr.bf16.mxu0 0
      %4406 = vmatmul.mubr.bf16.gmra.mrb[0].mxu0 %v4261
      %v4407 = vpop.f32.mrb[0].mxu0
      %v4408 = vadd.f32 0.0, %v4407
      %v4409 = vpop.f32.mrb[0].mxu0
      %v4410 = vpop.f32.mrb[0].mxu0
      %v4411 = vadd.f32 0.0, %v4410
      %v4412 = vpop.f32.mrb[0].mxu0
      %4413 = vmatprep.mubr.bf16.mxu0 0
      %4414 = vmatmul.mubr.bf16.gmra.mrb[0].mxu0 %v4264
      %v4415 = vpop.f32.mrb[0].mxu0
      %v4416 = vadd.f32 0.0, %v4415
      %v4417 = vpop.f32.mrb[0].mxu0
      %v4418 = vpop.f32.mrb[0].mxu0
      %v4419 = vadd.f32 0.0, %v4418
      %v4420 = vpop.f32.mrb[0].mxu0
      %4421 = vmatprep.mubr.bf16.mxu0 0
      %4422 = vmatmul.mubr.bf16.gmra.mrb[0].mxu0 %v4267
      %v4423 = vpop.f32.mrb[0].mxu0
      %v4424 = vadd.f32 0.0, %v4423
      %v4425 = vpop.f32.mrb[0].mxu0
      %v4426 = vpop.f32.mrb[0].mxu0
      %v4427 = vadd.f32 0.0, %v4426
      %v4428 = vpop.f32.mrb[0].mxu0
      %4429 = vdwg.mxu0
      %v4430 = vpack.c.bf16 %v4307, %v4304
      %v4431 = vpack.c.bf16 %v4315, %v4312
      %v4432 = vpack.c.bf16 %v4323, %v4320
      %v4433 = vpack.c.bf16 %v4331, %v4328
      %v4434 = vpack.c.bf16 %v4339, %v4336
      %v4435 = vpack.c.bf16 %v4347, %v4344
      %v4436 = vpack.c.bf16 %v4355, %v4352
      %v4437 = vpack.c.bf16 %v4363, %v4360
      %v4438 = vpack.c.bf16 %v4371, %v4368
      %v4439 = vpack.c.bf16 %v4379, %v4376
      %v4440 = vpack.c.bf16 %v4387, %v4384
      %v4441 = vpack.c.bf16 %v4395, %v4392
      %v4442 = vpack.c.bf16 %v4403, %v4400
      %v4443 = vpack.c.bf16 %v4411, %v4408
      %v4444 = vpack.c.bf16 %v4419, %v4416
      %v4445 = vpack.c.bf16 %v4427, %v4424
      %v4446 = vld [vmem:[%s8] sm:$0xff]
      %v4447 = vld [vmem:[%s8 + $0x8] sm:$0xff]
      %v4448 = vld [vmem:[%s7] sm:$0xf]
      %v4449 = vld [vmem:[%s7 + $0x4] sm:$0xf]
      %v4450 = vld [vmem:[%s7 + $0x8] sm:$0xf]
      %v4451 = vld [vmem:[%s7 + $0xc] sm:$0xf]
      %v4456 = vunpack.c.l.b16 %v4448
      %v4457 = vunpack.c.l.b16 %v4449
      %v4458 = vunpack.c.l.b16 %v4450
      %v4459 = vunpack.c.l.b16 %v4451
      %v4460 = vpack.c.b16 %v4457, %v4456
      %v4461 = vpack.c.b16 %v4459, %v4458
      %v4465 = vsel %vm4006, %v4430, 0
      %4467 = vmatprep.subr.bf16.mxu0 0
      %4468 = vmatpush1.bf16.msra.mxu0 %v4460
      %4469 = vmatprep.subr.bf16.mxu0 0
      %4470 = vmatpush1.bf16.msra.mxu0 %v4461
      %4471 = vmatprep.subr.bf16.mxu0 0
      %4472 = vmatpush1.bf16.msra.mxu0 0
      %4473 = vmatprep.subr.bf16.mxu0 0
      %4474 = vmatpush1.bf16.msra.mxu0 0
      %4475 = vmatprep.subr.bf16.mxu0 0
      %4476 = vmatpush1.bf16.msra.mxu0 0
      %4477 = vmatprep.subr.bf16.mxu0 0
      %4478 = vmatpush1.bf16.msra.mxu0 0
      %4479 = vmatprep.subr.bf16.mxu0 0
      %4480 = vmatpush1.bf16.msra.mxu0 0
      %4481 = vmatprep.subr.bf16.mxu0 0
      %4482 = vmatpush1.bf16.msra.mxu0 0
      %4483 = vmatprep.subr.bf16.mxu0 0
      %4484 = vmatpush1.bf16.msra.mxu0 0
      %4485 = vmatprep.subr.bf16.mxu0 0
      %4486 = vmatpush1.bf16.msra.mxu0 0
      %4487 = vmatprep.subr.bf16.mxu0 0
      %4488 = vmatpush1.bf16.msra.mxu0 0
      %4489 = vmatprep.subr.bf16.mxu0 0
      %4490 = vmatpush1.bf16.msra.mxu0 0
      %4491 = vmatprep.subr.bf16.mxu0 0
      %4492 = vmatpush1.bf16.msra.mxu0 0
      %4493 = vmatprep.subr.bf16.mxu0 0
      %4494 = vmatpush1.bf16.msra.mxu0 0
      %4495 = vmatprep.subr.bf16.mxu0 0
      %4496 = vmatpush1.bf16.msra.mxu0 0
      %4497 = vmatprep.subr.bf16.mxu0 0
      %4498 = vmatpush1.bf16.msra.mxu0 0
      %4499 = vmatprep.mubr.bf16.mxu0 0
      %4500 = vmatmul.mubr.bf16.gmra.mrb[0].mxu0 %v4465
      %v4501 = vpop.f32.mrb[0].mxu0
      %v4502 = vadd.f32 0.0, %v4501
      %v4503 = vpop.f32.mrb[0].mxu0
      %v4504 = vpop.f32.mrb[0].mxu0
      %v4505 = vadd.f32 0.0, %v4504
      %v4506 = vpop.f32.mrb[0].mxu0
      %4507 = vdwg.mxu0
      %v4508 = vadd.f32 %v4446, %v4502
      %v4509 = vadd.f32 %v4447, %v4505
      %s4510 = scalar_lea.vmem %s7, 16
      %v4511 = vld [vmem:[%s4510] sm:$0xf]
      %v4512 = vld [vmem:[%s4510 + $0x4] sm:$0xf]
      %v4513 = vld [vmem:[%s4510 + $0x8] sm:$0xf]
      %v4514 = vld [vmem:[%s4510 + $0xc] sm:$0xf]
      %v4519 = vunpack.c.l.b16 %v4511
      %v4520 = vunpack.c.l.b16 %v4512
      %v4521 = vunpack.c.l.b16 %v4513
      %v4522 = vunpack.c.l.b16 %v4514
      %v4523 = vpack.c.b16 %v4520, %v4519
      %v4524 = vpack.c.b16 %v4522, %v4521
      %v4528 = vsel %vm4006, %v4431, 0
      %4530 = vmatprep.subr.bf16.mxu0 0
      %4531 = vmatpush1.bf16.msra.mxu0 %v4523
      %4532 = vmatprep.subr.bf16.mxu0 0
      %4533 = vmatpush1.bf16.msra.mxu0 %v4524
      %4534 = vmatprep.subr.bf16.mxu0 0
      %4535 = vmatpush1.bf16.msra.mxu0 0
      %4536 = vmatprep.subr.bf16.mxu0 0
      %4537 = vmatpush1.bf16.msra.mxu0 0
      %4538 = vmatprep.subr.bf16.mxu0 0
      %4539 = vmatpush1.bf16.msra.mxu0 0
      %4540 = vmatprep.subr.bf16.mxu0 0
      %4541 = vmatpush1.bf16.msra.mxu0 0
      %4542 = vmatprep.subr.bf16.mxu0 0
      %4543 = vmatpush1.bf16.msra.mxu0 0
      %4544 = vmatprep.subr.bf16.mxu0 0
      %4545 = vmatpush1.bf16.msra.mxu0 0
      %4546 = vmatprep.subr.bf16.mxu0 0
      %4547 = vmatpush1.bf16.msra.mxu0 0
      %4548 = vmatprep.subr.bf16.mxu0 0
      %4549 = vmatpush1.bf16.msra.mxu0 0
      %4550 = vmatprep.subr.bf16.mxu0 0
      %4551 = vmatpush1.bf16.msra.mxu0 0
      %4552 = vmatprep.subr.bf16.mxu0 0
      %4553 = vmatpush1.bf16.msra.mxu0 0
      %4554 = vmatprep.subr.bf16.mxu0 0
      %4555 = vmatpush1.bf16.msra.mxu0 0
      %4556 = vmatprep.subr.bf16.mxu0 0
      %4557 = vmatpush1.bf16.msra.mxu0 0
      %4558 = vmatprep.subr.bf16.mxu0 0
      %4559 = vmatpush1.bf16.msra.mxu0 0
      %4560 = vmatprep.subr.bf16.mxu0 0
      %4561 = vmatpush1.bf16.msra.mxu0 0
      %4562 = vmatprep.mubr.bf16.mxu0 0
      %4563 = vmatmul.mubr.bf16.gmra.mrb[0].mxu0 %v4528
      %v4564 = vpop.f32.mrb[0].mxu0
      %v4565 = vadd.f32 0.0, %v4564
      %v4566 = vpop.f32.mrb[0].mxu0
      %v4567 = vpop.f32.mrb[0].mxu0
      %v4568 = vadd.f32 0.0, %v4567
      %v4569 = vpop.f32.mrb[0].mxu0
      %4570 = vdwg.mxu0
      %v4571 = vadd.f32 %v4508, %v4565
      %v4572 = vadd.f32 %v4509, %v4568
      %s4573 = scalar_lea.vmem %s7, 32
      %v4574 = vld [vmem:[%s4573] sm:$0xf]
      %v4575 = vld [vmem:[%s4573 + $0x4] sm:$0xf]
      %v4576 = vld [vmem:[%s4573 + $0x8] sm:$0xf]
      %v4577 = vld [vmem:[%s4573 + $0xc] sm:$0xf]
      %v4582 = vunpack.c.l.b16 %v4574
      %v4583 = vunpack.c.l.b16 %v4575
      %v4584 = vunpack.c.l.b16 %v4576
      %v4585 = vunpack.c.l.b16 %v4577
      %v4586 = vpack.c.b16 %v4583, %v4582
      %v4587 = vpack.c.b16 %v4585, %v4584
      %v4591 = vsel %vm4006, %v4432, 0
      %4593 = vmatprep.subr.bf16.mxu0 0
      %4594 = vmatpush1.bf16.msra.mxu0 %v4586
      %4595 = vmatprep.subr.bf16.mxu0 0
      %4596 = vmatpush1.bf16.msra.mxu0 %v4587
      %4597 = vmatprep.subr.bf16.mxu0 0
      %4598 = vmatpush1.bf16.msra.mxu0 0
      %4599 = vmatprep.subr.bf16.mxu0 0
      %4600 = vmatpush1.bf16.msra.mxu0 0
      %4601 = vmatprep.subr.bf16.mxu0 0
      %4602 = vmatpush1.bf16.msra.mxu0 0
      %4603 = vmatprep.subr.bf16.mxu0 0
      %4604 = vmatpush1.bf16.msra.mxu0 0
      %4605 = vmatprep.subr.bf16.mxu0 0
      %4606 = vmatpush1.bf16.msra.mxu0 0
      %4607 = vmatprep.subr.bf16.mxu0 0
      %4608 = vmatpush1.bf16.msra.mxu0 0
      %4609 = vmatprep.subr.bf16.mxu0 0
      %4610 = vmatpush1.bf16.msra.mxu0 0
      %4611 = vmatprep.subr.bf16.mxu0 0
      %4612 = vmatpush1.bf16.msra.mxu0 0
      %4613 = vmatprep.subr.bf16.mxu0 0
      %4614 = vmatpush1.bf16.msra.mxu0 0
      %4615 = vmatprep.subr.bf16.mxu0 0
      %4616 = vmatpush1.bf16.msra.mxu0 0
      %4617 = vmatprep.subr.bf16.mxu0 0
      %4618 = vmatpush1.bf16.msra.mxu0 0
      %4619 = vmatprep.subr.bf16.mxu0 0
      %4620 = vmatpush1.bf16.msra.mxu0 0
      %4621 = vmatprep.subr.bf16.mxu0 0
      %4622 = vmatpush1.bf16.msra.mxu0 0
      %4623 = vmatprep.subr.bf16.mxu0 0
      %4624 = vmatpush1.bf16.msra.mxu0 0
      %4625 = vmatprep.mubr.bf16.mxu0 0
      %4626 = vmatmul.mubr.bf16.gmra.mrb[0].mxu0 %v4591
      %v4627 = vpop.f32.mrb[0].mxu0
      %v4628 = vadd.f32 0.0, %v4627
      %v4629 = vpop.f32.mrb[0].mxu0
      %v4630 = vpop.f32.mrb[0].mxu0
      %v4631 = vadd.f32 0.0, %v4630
      %v4632 = vpop.f32.mrb[0].mxu0
      %4633 = vdwg.mxu0
      %v4634 = vadd.f32 %v4571, %v4628
      %v4635 = vadd.f32 %v4572, %v4631
      %s4636 = scalar_lea.vmem %s7, 48
      %v4637 = vld [vmem:[%s4636] sm:$0xf]
      %v4638 = vld [vmem:[%s4636 + $0x4] sm:$0xf]
      %v4639 = vld [vmem:[%s4636 + $0x8] sm:$0xf]
      %v4640 = vld [vmem:[%s4636 + $0xc] sm:$0xf]
      %v4645 = vunpack.c.l.b16 %v4637
      %v4646 = vunpack.c.l.b16 %v4638
      %v4647 = vunpack.c.l.b16 %v4639
      %v4648 = vunpack.c.l.b16 %v4640
      %v4649 = vpack.c.b16 %v4646, %v4645
      %v4650 = vpack.c.b16 %v4648, %v4647
      %v4654 = vsel %vm4006, %v4433, 0
      %4656 = vmatprep.subr.bf16.mxu0 0
      %4657 = vmatpush1.bf16.msra.mxu0 %v4649
      %4658 = vmatprep.subr.bf16.mxu0 0
      %4659 = vmatpush1.bf16.msra.mxu0 %v4650
      %4660 = vmatprep.subr.bf16.mxu0 0
      %4661 = vmatpush1.bf16.msra.mxu0 0
      %4662 = vmatprep.subr.bf16.mxu0 0
      %4663 = vmatpush1.bf16.msra.mxu0 0
      %4664 = vmatprep.subr.bf16.mxu0 0
      %4665 = vmatpush1.bf16.msra.mxu0 0
      %4666 = vmatprep.subr.bf16.mxu0 0
      %4667 = vmatpush1.bf16.msra.mxu0 0
      %4668 = vmatprep.subr.bf16.mxu0 0
      %4669 = vmatpush1.bf16.msra.mxu0 0
      %4670 = vmatprep.subr.bf16.mxu0 0
      %4671 = vmatpush1.bf16.msra.mxu0 0
      %4672 = vmatprep.subr.bf16.mxu0 0
      %4673 = vmatpush1.bf16.msra.mxu0 0
      %4674 = vmatprep.subr.bf16.mxu0 0
      %4675 = vmatpush1.bf16.msra.mxu0 0
      %4676 = vmatprep.subr.bf16.mxu0 0
      %4677 = vmatpush1.bf16.msra.mxu0 0
      %4678 = vmatprep.subr.bf16.mxu0 0
      %4679 = vmatpush1.bf16.msra.mxu0 0
      %4680 = vmatprep.subr.bf16.mxu0 0
      %4681 = vmatpush1.bf16.msra.mxu0 0
      %4682 = vmatprep.subr.bf16.mxu0 0
      %4683 = vmatpush1.bf16.msra.mxu0 0
      %4684 = vmatprep.subr.bf16.mxu0 0
      %4685 = vmatpush1.bf16.msra.mxu0 0
      %4686 = vmatprep.subr.bf16.mxu0 0
      %4687 = vmatpush1.bf16.msra.mxu0 0
      %4688 = vmatprep.mubr.bf16.mxu0 0
      %4689 = vmatmul.mubr.bf16.gmra.mrb[0].mxu0 %v4654
      %v4690 = vpop.f32.mrb[0].mxu0
      %v4691 = vadd.f32 0.0, %v4690
      %v4692 = vpop.f32.mrb[0].mxu0
      %v4693 = vpop.f32.mrb[0].mxu0
      %v4694 = vadd.f32 0.0, %v4693
      %v4695 = vpop.f32.mrb[0].mxu0
      %4696 = vdwg.mxu0
      %v4697 = vadd.f32 %v4634, %v4691
      %v4698 = vadd.f32 %v4635, %v4694
      %s4699 = scalar_lea.vmem %s7, 64
      %v4700 = vld [vmem:[%s4699] sm:$0xf]
      %v4701 = vld [vmem:[%s4699 + $0x4] sm:$0xf]
      %v4702 = vld [vmem:[%s4699 + $0x8] sm:$0xf]
      %v4703 = vld [vmem:[%s4699 + $0xc] sm:$0xf]
      %v4708 = vunpack.c.l.b16 %v4700
      %v4709 = vunpack.c.l.b16 %v4701
      %v4710 = vunpack.c.l.b16 %v4702
      %v4711 = vunpack.c.l.b16 %v4703
      %v4712 = vpack.c.b16 %v4709, %v4708
      %v4713 = vpack.c.b16 %v4711, %v4710
      %v4717 = vsel %vm4006, %v4434, 0
      %4719 = vmatprep.subr.bf16.mxu0 0
      %4720 = vmatpush1.bf16.msra.mxu0 %v4712
      %4721 = vmatprep.subr.bf16.mxu0 0
      %4722 = vmatpush1.bf16.msra.mxu0 %v4713
      %4723 = vmatprep.subr.bf16.mxu0 0
      %4724 = vmatpush1.bf16.msra.mxu0 0
      %4725 = vmatprep.subr.bf16.mxu0 0
      %4726 = vmatpush1.bf16.msra.mxu0 0
      %4727 = vmatprep.subr.bf16.mxu0 0
      %4728 = vmatpush1.bf16.msra.mxu0 0
      %4729 = vmatprep.subr.bf16.mxu0 0
      %4730 = vmatpush1.bf16.msra.mxu0 0
      %4731 = vmatprep.subr.bf16.mxu0 0
      %4732 = vmatpush1.bf16.msra.mxu0 0
      %4733 = vmatprep.subr.bf16.mxu0 0
      %4734 = vmatpush1.bf16.msra.mxu0 0
      %4735 = vmatprep.subr.bf16.mxu0 0
      %4736 = vmatpush1.bf16.msra.mxu0 0
      %4737 = vmatprep.subr.bf16.mxu0 0
      %4738 = vmatpush1.bf16.msra.mxu0 0
      %4739 = vmatprep.subr.bf16.mxu0 0
      %4740 = vmatpush1.bf16.msra.mxu0 0
      %4741 = vmatprep.subr.bf16.mxu0 0
      %4742 = vmatpush1.bf16.msra.mxu0 0
      %4743 = vmatprep.subr.bf16.mxu0 0
      %4744 = vmatpush1.bf16.msra.mxu0 0
      %4745 = vmatprep.subr.bf16.mxu0 0
      %4746 = vmatpush1.bf16.msra.mxu0 0
      %4747 = vmatprep.subr.bf16.mxu0 0
      %4748 = vmatpush1.bf16.msra.mxu0 0
      %4749 = vmatprep.subr.bf16.mxu0 0
      %4750 = vmatpush1.bf16.msra.mxu0 0
      %4751 = vmatprep.mubr.bf16.mxu0 0
      %4752 = vmatmul.mubr.bf16.gmra.mrb[0].mxu0 %v4717
      %v4753 = vpop.f32.mrb[0].mxu0
      %v4754 = vadd.f32 0.0, %v4753
      %v4755 = vpop.f32.mrb[0].mxu0
      %v4756 = vpop.f32.mrb[0].mxu0
      %v4757 = vadd.f32 0.0, %v4756
      %v4758 = vpop.f32.mrb[0].mxu0
      %4759 = vdwg.mxu0
      %v4760 = vadd.f32 %v4697, %v4754
      %v4761 = vadd.f32 %v4698, %v4757
      %s4762 = scalar_lea.vmem %s7, 80
      %v4763 = vld [vmem:[%s4762] sm:$0xf]
      %v4764 = vld [vmem:[%s4762 + $0x4] sm:$0xf]
      %v4765 = vld [vmem:[%s4762 + $0x8] sm:$0xf]
      %v4766 = vld [vmem:[%s4762 + $0xc] sm:$0xf]
      %v4771 = vunpack.c.l.b16 %v4763
      %v4772 = vunpack.c.l.b16 %v4764
      %v4773 = vunpack.c.l.b16 %v4765
      %v4774 = vunpack.c.l.b16 %v4766
      %v4775 = vpack.c.b16 %v4772, %v4771
      %v4776 = vpack.c.b16 %v4774, %v4773
      %v4780 = vsel %vm4006, %v4435, 0
      %4782 = vmatprep.subr.bf16.mxu0 0
      %4783 = vmatpush1.bf16.msra.mxu0 %v4775
      %4784 = vmatprep.subr.bf16.mxu0 0
      %4785 = vmatpush1.bf16.msra.mxu0 %v4776
      %4786 = vmatprep.subr.bf16.mxu0 0
      %4787 = vmatpush1.bf16.msra.mxu0 0
      %4788 = vmatprep.subr.bf16.mxu0 0
      %4789 = vmatpush1.bf16.msra.mxu0 0
      %4790 = vmatprep.subr.bf16.mxu0 0
      %4791 = vmatpush1.bf16.msra.mxu0 0
      %4792 = vmatprep.subr.bf16.mxu0 0
      %4793 = vmatpush1.bf16.msra.mxu0 0
      %4794 = vmatprep.subr.bf16.mxu0 0
      %4795 = vmatpush1.bf16.msra.mxu0 0
      %4796 = vmatprep.subr.bf16.mxu0 0
      %4797 = vmatpush1.bf16.msra.mxu0 0
      %4798 = vmatprep.subr.bf16.mxu0 0
      %4799 = vmatpush1.bf16.msra.mxu0 0
      %4800 = vmatprep.subr.bf16.mxu0 0
      %4801 = vmatpush1.bf16.msra.mxu0 0
      %4802 = vmatprep.subr.bf16.mxu0 0
      %4803 = vmatpush1.bf16.msra.mxu0 0
      %4804 = vmatprep.subr.bf16.mxu0 0
      %4805 = vmatpush1.bf16.msra.mxu0 0
      %4806 = vmatprep.subr.bf16.mxu0 0
      %4807 = vmatpush1.bf16.msra.mxu0 0
      %4808 = vmatprep.subr.bf16.mxu0 0
      %4809 = vmatpush1.bf16.msra.mxu0 0
      %4810 = vmatprep.subr.bf16.mxu0 0
      %4811 = vmatpush1.bf16.msra.mxu0 0
      %4812 = vmatprep.subr.bf16.mxu0 0
      %4813 = vmatpush1.bf16.msra.mxu0 0
      %4814 = vmatprep.mubr.bf16.mxu0 0
      %4815 = vmatmul.mubr.bf16.gmra.mrb[0].mxu0 %v4780
      %v4816 = vpop.f32.mrb[0].mxu0
      %v4817 = vadd.f32 0.0, %v4816
      %v4818 = vpop.f32.mrb[0].mxu0
      %v4819 = vpop.f32.mrb[0].mxu0
      %v4820 = vadd.f32 0.0, %v4819
      %v4821 = vpop.f32.mrb[0].mxu0
      %4822 = vdwg.mxu0
      %v4823 = vadd.f32 %v4760, %v4817
      %v4824 = vadd.f32 %v4761, %v4820
      %s4825 = scalar_lea.vmem %s7, 96
      %v4826 = vld [vmem:[%s4825] sm:$0xf]
      %v4827 = vld [vmem:[%s4825 + $0x4] sm:$0xf]
      %v4828 = vld [vmem:[%s4825 + $0x8] sm:$0xf]
      %v4829 = vld [vmem:[%s4825 + $0xc] sm:$0xf]
      %v4834 = vunpack.c.l.b16 %v4826
      %v4835 = vunpack.c.l.b16 %v4827
      %v4836 = vunpack.c.l.b16 %v4828
      %v4837 = vunpack.c.l.b16 %v4829
      %v4838 = vpack.c.b16 %v4835, %v4834
      %v4839 = vpack.c.b16 %v4837, %v4836
      %v4843 = vsel %vm4006, %v4436, 0
      %4845 = vmatprep.subr.bf16.mxu0 0
      %4846 = vmatpush1.bf16.msra.mxu0 %v4838
      %4847 = vmatprep.subr.bf16.mxu0 0
      %4848 = vmatpush1.bf16.msra.mxu0 %v4839
      %4849 = vmatprep.subr.bf16.mxu0 0
      %4850 = vmatpush1.bf16.msra.mxu0 0
      %4851 = vmatprep.subr.bf16.mxu0 0
      %4852 = vmatpush1.bf16.msra.mxu0 0
      %4853 = vmatprep.subr.bf16.mxu0 0
      %4854 = vmatpush1.bf16.msra.mxu0 0
      %4855 = vmatprep.subr.bf16.mxu0 0
      %4856 = vmatpush1.bf16.msra.mxu0 0
      %4857 = vmatprep.subr.bf16.mxu0 0
      %4858 = vmatpush1.bf16.msra.mxu0 0
      %4859 = vmatprep.subr.bf16.mxu0 0
      %4860 = vmatpush1.bf16.msra.mxu0 0
      %4861 = vmatprep.subr.bf16.mxu0 0
      %4862 = vmatpush1.bf16.msra.mxu0 0
      %4863 = vmatprep.subr.bf16.mxu0 0
      %4864 = vmatpush1.bf16.msra.mxu0 0
      %4865 = vmatprep.subr.bf16.mxu0 0
      %4866 = vmatpush1.bf16.msra.mxu0 0
      %4867 = vmatprep.subr.bf16.mxu0 0
      %4868 = vmatpush1.bf16.msra.mxu0 0
      %4869 = vmatprep.subr.bf16.mxu0 0
      %4870 = vmatpush1.bf16.msra.mxu0 0
      %4871 = vmatprep.subr.bf16.mxu0 0
      %4872 = vmatpush1.bf16.msra.mxu0 0
      %4873 = vmatprep.subr.bf16.mxu0 0
      %4874 = vmatpush1.bf16.msra.mxu0 0
      %4875 = vmatprep.subr.bf16.mxu0 0
      %4876 = vmatpush1.bf16.msra.mxu0 0
      %4877 = vmatprep.mubr.bf16.mxu0 0
      %4878 = vmatmul.mubr.bf16.gmra.mrb[0].mxu0 %v4843
      %v4879 = vpop.f32.mrb[0].mxu0
      %v4880 = vadd.f32 0.0, %v4879
      %v4881 = vpop.f32.mrb[0].mxu0
      %v4882 = vpop.f32.mrb[0].mxu0
      %v4883 = vadd.f32 0.0, %v4882
      %v4884 = vpop.f32.mrb[0].mxu0
      %4885 = vdwg.mxu0
      %v4886 = vadd.f32 %v4823, %v4880
      %v4887 = vadd.f32 %v4824, %v4883
      %s4888 = scalar_lea.vmem %s7, 112
      %v4889 = vld [vmem:[%s4888] sm:$0xf]
      %v4890 = vld [vmem:[%s4888 + $0x4] sm:$0xf]
      %v4891 = vld [vmem:[%s4888 + $0x8] sm:$0xf]
      %v4892 = vld [vmem:[%s4888 + $0xc] sm:$0xf]
      %v4897 = vunpack.c.l.b16 %v4889
      %v4898 = vunpack.c.l.b16 %v4890
      %v4899 = vunpack.c.l.b16 %v4891
      %v4900 = vunpack.c.l.b16 %v4892
      %v4901 = vpack.c.b16 %v4898, %v4897
      %v4902 = vpack.c.b16 %v4900, %v4899
      %v4906 = vsel %vm4006, %v4437, 0
      %4908 = vmatprep.subr.bf16.mxu0 0
      %4909 = vmatpush1.bf16.msra.mxu0 %v4901
      %4910 = vmatprep.subr.bf16.mxu0 0
      %4911 = vmatpush1.bf16.msra.mxu0 %v4902
      %4912 = vmatprep.subr.bf16.mxu0 0
      %4913 = vmatpush1.bf16.msra.mxu0 0
      %4914 = vmatprep.subr.bf16.mxu0 0
      %4915 = vmatpush1.bf16.msra.mxu0 0
      %4916 = vmatprep.subr.bf16.mxu0 0
      %4917 = vmatpush1.bf16.msra.mxu0 0
      %4918 = vmatprep.subr.bf16.mxu0 0
      %4919 = vmatpush1.bf16.msra.mxu0 0
      %4920 = vmatprep.subr.bf16.mxu0 0
      %4921 = vmatpush1.bf16.msra.mxu0 0
      %4922 = vmatprep.subr.bf16.mxu0 0
      %4923 = vmatpush1.bf16.msra.mxu0 0
      %4924 = vmatprep.subr.bf16.mxu0 0
      %4925 = vmatpush1.bf16.msra.mxu0 0
      %4926 = vmatprep.subr.bf16.mxu0 0
      %4927 = vmatpush1.bf16.msra.mxu0 0
      %4928 = vmatprep.subr.bf16.mxu0 0
      %4929 = vmatpush1.bf16.msra.mxu0 0
      %4930 = vmatprep.subr.bf16.mxu0 0
      %4931 = vmatpush1.bf16.msra.mxu0 0
      %4932 = vmatprep.subr.bf16.mxu0 0
      %4933 = vmatpush1.bf16.msra.mxu0 0
      %4934 = vmatprep.subr.bf16.mxu0 0
      %4935 = vmatpush1.bf16.msra.mxu0 0
      %4936 = vmatprep.subr.bf16.mxu0 0
      %4937 = vmatpush1.bf16.msra.mxu0 0
      %4938 = vmatprep.subr.bf16.mxu0 0
      %4939 = vmatpush1.bf16.msra.mxu0 0
      %4940 = vmatprep.mubr.bf16.mxu0 0
      %4941 = vmatmul.mubr.bf16.gmra.mrb[0].mxu0 %v4906
      %v4942 = vpop.f32.mrb[0].mxu0
      %v4943 = vadd.f32 0.0, %v4942
      %v4944 = vpop.f32.mrb[0].mxu0
      %v4945 = vpop.f32.mrb[0].mxu0
      %v4946 = vadd.f32 0.0, %v4945
      %v4947 = vpop.f32.mrb[0].mxu0
      %4948 = vdwg.mxu0
      %v4949 = vadd.f32 %v4886, %v4943
      %v4950 = vadd.f32 %v4887, %v4946
      %s4951 = scalar_lea.vmem %s7, 128
      %v4952 = vld [vmem:[%s4951] sm:$0xf]
      %v4953 = vld [vmem:[%s4951 + $0x4] sm:$0xf]
      %v4954 = vld [vmem:[%s4951 + $0x8] sm:$0xf]
      %v4955 = vld [vmem:[%s4951 + $0xc] sm:$0xf]
      %v4960 = vunpack.c.l.b16 %v4952
      %v4961 = vunpack.c.l.b16 %v4953
      %v4962 = vunpack.c.l.b16 %v4954
      %v4963 = vunpack.c.l.b16 %v4955
      %v4964 = vpack.c.b16 %v4961, %v4960
      %v4965 = vpack.c.b16 %v4963, %v4962
      %v4969 = vsel %vm4006, %v4438, 0
      %4971 = vmatprep.subr.bf16.mxu0 0
      %4972 = vmatpush1.bf16.msra.mxu0 %v4964
      %4973 = vmatprep.subr.bf16.mxu0 0
      %4974 = vmatpush1.bf16.msra.mxu0 %v4965
      %4975 = vmatprep.subr.bf16.mxu0 0
      %4976 = vmatpush1.bf16.msra.mxu0 0
      %4977 = vmatprep.subr.bf16.mxu0 0
      %4978 = vmatpush1.bf16.msra.mxu0 0
      %4979 = vmatprep.subr.bf16.mxu0 0
      %4980 = vmatpush1.bf16.msra.mxu0 0
      %4981 = vmatprep.subr.bf16.mxu0 0
      %4982 = vmatpush1.bf16.msra.mxu0 0
      %4983 = vmatprep.subr.bf16.mxu0 0
      %4984 = vmatpush1.bf16.msra.mxu0 0
      %4985 = vmatprep.subr.bf16.mxu0 0
      %4986 = vmatpush1.bf16.msra.mxu0 0
      %4987 = vmatprep.subr.bf16.mxu0 0
      %4988 = vmatpush1.bf16.msra.mxu0 0
      %4989 = vmatprep.subr.bf16.mxu0 0
      %4990 = vmatpush1.bf16.msra.mxu0 0
      %4991 = vmatprep.subr.bf16.mxu0 0
      %4992 = vmatpush1.bf16.msra.mxu0 0
      %4993 = vmatprep.subr.bf16.mxu0 0
      %4994 = vmatpush1.bf16.msra.mxu0 0
      %4995 = vmatprep.subr.bf16.mxu0 0
      %4996 = vmatpush1.bf16.msra.mxu0 0
      %4997 = vmatprep.subr.bf16.mxu0 0
      %4998 = vmatpush1.bf16.msra.mxu0 0
      %4999 = vmatprep.subr.bf16.mxu0 0
      %5000 = vmatpush1.bf16.msra.mxu0 0
      %5001 = vmatprep.subr.bf16.mxu0 0
      %5002 = vmatpush1.bf16.msra.mxu0 0
      %5003 = vmatprep.mubr.bf16.mxu0 0
      %5004 = vmatmul.mubr.bf16.gmra.mrb[0].mxu0 %v4969
      %v5005 = vpop.f32.mrb[0].mxu0
      %v5006 = vadd.f32 0.0, %v5005
      %v5007 = vpop.f32.mrb[0].mxu0
      %v5008 = vpop.f32.mrb[0].mxu0
      %v5009 = vadd.f32 0.0, %v5008
      %v5010 = vpop.f32.mrb[0].mxu0
      %5011 = vdwg.mxu0
      %v5012 = vadd.f32 %v4949, %v5006
      %v5013 = vadd.f32 %v4950, %v5009
      %s5014 = scalar_lea.vmem %s7, 144
      %v5015 = vld [vmem:[%s5014] sm:$0xf]
      %v5016 = vld [vmem:[%s5014 + $0x4] sm:$0xf]
      %v5017 = vld [vmem:[%s5014 + $0x8] sm:$0xf]
      %v5018 = vld [vmem:[%s5014 + $0xc] sm:$0xf]
      %v5023 = vunpack.c.l.b16 %v5015
      %v5024 = vunpack.c.l.b16 %v5016
      %v5025 = vunpack.c.l.b16 %v5017
      %v5026 = vunpack.c.l.b16 %v5018
      %v5027 = vpack.c.b16 %v5024, %v5023
      %v5028 = vpack.c.b16 %v5026, %v5025
      %v5032 = vsel %vm4006, %v4439, 0
      %5034 = vmatprep.subr.bf16.mxu0 0
      %5035 = vmatpush1.bf16.msra.mxu0 %v5027
      %5036 = vmatprep.subr.bf16.mxu0 0
      %5037 = vmatpush1.bf16.msra.mxu0 %v5028
      %5038 = vmatprep.subr.bf16.mxu0 0
      %5039 = vmatpush1.bf16.msra.mxu0 0
      %5040 = vmatprep.subr.bf16.mxu0 0
      %5041 = vmatpush1.bf16.msra.mxu0 0
      %5042 = vmatprep.subr.bf16.mxu0 0
      %5043 = vmatpush1.bf16.msra.mxu0 0
      %5044 = vmatprep.subr.bf16.mxu0 0
      %5045 = vmatpush1.bf16.msra.mxu0 0
      %5046 = vmatprep.subr.bf16.mxu0 0
      %5047 = vmatpush1.bf16.msra.mxu0 0
      %5048 = vmatprep.subr.bf16.mxu0 0
      %5049 = vmatpush1.bf16.msra.mxu0 0
      %5050 = vmatprep.subr.bf16.mxu0 0
      %5051 = vmatpush1.bf16.msra.mxu0 0
      %5052 = vmatprep.subr.bf16.mxu0 0
      %5053 = vmatpush1.bf16.msra.mxu0 0
      %5054 = vmatprep.subr.bf16.mxu0 0
      %5055 = vmatpush1.bf16.msra.mxu0 0
      %5056 = vmatprep.subr.bf16.mxu0 0
      %5057 = vmatpush1.bf16.msra.mxu0 0
      %5058 = vmatprep.subr.bf16.mxu0 0
      %5059 = vmatpush1.bf16.msra.mxu0 0
      %5060 = vmatprep.subr.bf16.mxu0 0
      %5061 = vmatpush1.bf16.msra.mxu0 0
      %5062 = vmatprep.subr.bf16.mxu0 0
      %5063 = vmatpush1.bf16.msra.mxu0 0
      %5064 = vmatprep.subr.bf16.mxu0 0
      %5065 = vmatpush1.bf16.msra.mxu0 0
      %5066 = vmatprep.mubr.bf16.mxu0 0
      %5067 = vmatmul.mubr.bf16.gmra.mrb[0].mxu0 %v5032
      %v5068 = vpop.f32.mrb[0].mxu0
      %v5069 = vadd.f32 0.0, %v5068
      %v5070 = vpop.f32.mrb[0].mxu0
      %v5071 = vpop.f32.mrb[0].mxu0
      %v5072 = vadd.f32 0.0, %v5071
      %v5073 = vpop.f32.mrb[0].mxu0
      %5074 = vdwg.mxu0
      %v5075 = vadd.f32 %v5012, %v5069
      %v5076 = vadd.f32 %v5013, %v5072
      %s5077 = scalar_lea.vmem %s7, 160
      %v5078 = vld [vmem:[%s5077] sm:$0xf]
      %v5079 = vld [vmem:[%s5077 + $0x4] sm:$0xf]
      %v5080 = vld [vmem:[%s5077 + $0x8] sm:$0xf]
      %v5081 = vld [vmem:[%s5077 + $0xc] sm:$0xf]
      %v5086 = vunpack.c.l.b16 %v5078
      %v5087 = vunpack.c.l.b16 %v5079
      %v5088 = vunpack.c.l.b16 %v5080
      %v5089 = vunpack.c.l.b16 %v5081
      %v5090 = vpack.c.b16 %v5087, %v5086
      %v5091 = vpack.c.b16 %v5089, %v5088
      %v5095 = vsel %vm4006, %v4440, 0
      %5097 = vmatprep.subr.bf16.mxu0 0
      %5098 = vmatpush1.bf16.msra.mxu0 %v5090
      %5099 = vmatprep.subr.bf16.mxu0 0
      %5100 = vmatpush1.bf16.msra.mxu0 %v5091
      %5101 = vmatprep.subr.bf16.mxu0 0
      %5102 = vmatpush1.bf16.msra.mxu0 0
      %5103 = vmatprep.subr.bf16.mxu0 0
      %5104 = vmatpush1.bf16.msra.mxu0 0
      %5105 = vmatprep.subr.bf16.mxu0 0
      %5106 = vmatpush1.bf16.msra.mxu0 0
      %5107 = vmatprep.subr.bf16.mxu0 0
      %5108 = vmatpush1.bf16.msra.mxu0 0
      %5109 = vmatprep.subr.bf16.mxu0 0
      %5110 = vmatpush1.bf16.msra.mxu0 0
      %5111 = vmatprep.subr.bf16.mxu0 0
      %5112 = vmatpush1.bf16.msra.mxu0 0
      %5113 = vmatprep.subr.bf16.mxu0 0
      %5114 = vmatpush1.bf16.msra.mxu0 0
      %5115 = vmatprep.subr.bf16.mxu0 0
      %5116 = vmatpush1.bf16.msra.mxu0 0
      %5117 = vmatprep.subr.bf16.mxu0 0
      %5118 = vmatpush1.bf16.msra.mxu0 0
      %5119 = vmatprep.subr.bf16.mxu0 0
      %5120 = vmatpush1.bf16.msra.mxu0 0
      %5121 = vmatprep.subr.bf16.mxu0 0
      %5122 = vmatpush1.bf16.msra.mxu0 0
      %5123 = vmatprep.subr.bf16.mxu0 0
      %5124 = vmatpush1.bf16.msra.mxu0 0
      %5125 = vmatprep.subr.bf16.mxu0 0
      %5126 = vmatpush1.bf16.msra.mxu0 0
      %5127 = vmatprep.subr.bf16.mxu0 0
      %5128 = vmatpush1.bf16.msra.mxu0 0
      %5129 = vmatprep.mubr.bf16.mxu0 0
      %5130 = vmatmul.mubr.bf16.gmra.mrb[0].mxu0 %v5095
      %v5131 = vpop.f32.mrb[0].mxu0
      %v5132 = vadd.f32 0.0, %v5131
      %v5133 = vpop.f32.mrb[0].mxu0
      %v5134 = vpop.f32.mrb[0].mxu0
      %v5135 = vadd.f32 0.0, %v5134
      %v5136 = vpop.f32.mrb[0].mxu0
      %5137 = vdwg.mxu0
      %v5138 = vadd.f32 %v5075, %v5132
      %v5139 = vadd.f32 %v5076, %v5135
      %s5140 = scalar_lea.vmem %s7, 176
      %v5141 = vld [vmem:[%s5140] sm:$0xf]
      %v5142 = vld [vmem:[%s5140 + $0x4] sm:$0xf]
      %v5143 = vld [vmem:[%s5140 + $0x8] sm:$0xf]
      %v5144 = vld [vmem:[%s5140 + $0xc] sm:$0xf]
      %v5149 = vunpack.c.l.b16 %v5141
      %v5150 = vunpack.c.l.b16 %v5142
      %v5151 = vunpack.c.l.b16 %v5143
      %v5152 = vunpack.c.l.b16 %v5144
      %v5153 = vpack.c.b16 %v5150, %v5149
      %v5154 = vpack.c.b16 %v5152, %v5151
      %v5158 = vsel %vm4006, %v4441, 0
      %5160 = vmatprep.subr.bf16.mxu0 0
      %5161 = vmatpush1.bf16.msra.mxu0 %v5153
      %5162 = vmatprep.subr.bf16.mxu0 0
      %5163 = vmatpush1.bf16.msra.mxu0 %v5154
      %5164 = vmatprep.subr.bf16.mxu0 0
      %5165 = vmatpush1.bf16.msra.mxu0 0
      %5166 = vmatprep.subr.bf16.mxu0 0
      %5167 = vmatpush1.bf16.msra.mxu0 0
      %5168 = vmatprep.subr.bf16.mxu0 0
      %5169 = vmatpush1.bf16.msra.mxu0 0
      %5170 = vmatprep.subr.bf16.mxu0 0
      %5171 = vmatpush1.bf16.msra.mxu0 0
      %5172 = vmatprep.subr.bf16.mxu0 0
      %5173 = vmatpush1.bf16.msra.mxu0 0
      %5174 = vmatprep.subr.bf16.mxu0 0
      %5175 = vmatpush1.bf16.msra.mxu0 0
      %5176 = vmatprep.subr.bf16.mxu0 0
      %5177 = vmatpush1.bf16.msra.mxu0 0
      %5178 = vmatprep.subr.bf16.mxu0 0
      %5179 = vmatpush1.bf16.msra.mxu0 0
      %5180 = vmatprep.subr.bf16.mxu0 0
      %5181 = vmatpush1.bf16.msra.mxu0 0
      %5182 = vmatprep.subr.bf16.mxu0 0
      %5183 = vmatpush1.bf16.msra.mxu0 0
      %5184 = vmatprep.subr.bf16.mxu0 0
      %5185 = vmatpush1.bf16.msra.mxu0 0
      %5186 = vmatprep.subr.bf16.mxu0 0
      %5187 = vmatpush1.bf16.msra.mxu0 0
      %5188 = vmatprep.subr.bf16.mxu0 0
      %5189 = vmatpush1.bf16.msra.mxu0 0
      %5190 = vmatprep.subr.bf16.mxu0 0
      %5191 = vmatpush1.bf16.msra.mxu0 0
      %5192 = vmatprep.mubr.bf16.mxu0 0
      %5193 = vmatmul.mubr.bf16.gmra.mrb[0].mxu0 %v5158
      %v5194 = vpop.f32.mrb[0].mxu0
      %v5195 = vadd.f32 0.0, %v5194
      %v5196 = vpop.f32.mrb[0].mxu0
      %v5197 = vpop.f32.mrb[0].mxu0
      %v5198 = vadd.f32 0.0, %v5197
      %v5199 = vpop.f32.mrb[0].mxu0
      %5200 = vdwg.mxu0
      %v5201 = vadd.f32 %v5138, %v5195
      %v5202 = vadd.f32 %v5139, %v5198
      %s5203 = scalar_lea.vmem %s7, 192
      %v5204 = vld [vmem:[%s5203] sm:$0xf]
      %v5205 = vld [vmem:[%s5203 + $0x4] sm:$0xf]
      %v5206 = vld [vmem:[%s5203 + $0x8] sm:$0xf]
      %v5207 = vld [vmem:[%s5203 + $0xc] sm:$0xf]
      %v5212 = vunpack.c.l.b16 %v5204
      %v5213 = vunpack.c.l.b16 %v5205
      %v5214 = vunpack.c.l.b16 %v5206
      %v5215 = vunpack.c.l.b16 %v5207
      %v5216 = vpack.c.b16 %v5213, %v5212
      %v5217 = vpack.c.b16 %v5215, %v5214
      %v5221 = vsel %vm4006, %v4442, 0
      %5223 = vmatprep.subr.bf16.mxu0 0
      %5224 = vmatpush1.bf16.msra.mxu0 %v5216
      %5225 = vmatprep.subr.bf16.mxu0 0
      %5226 = vmatpush1.bf16.msra.mxu0 %v5217
      %5227 = vmatprep.subr.bf16.mxu0 0
      %5228 = vmatpush1.bf16.msra.mxu0 0
      %5229 = vmatprep.subr.bf16.mxu0 0
      %5230 = vmatpush1.bf16.msra.mxu0 0
      %5231 = vmatprep.subr.bf16.mxu0 0
      %5232 = vmatpush1.bf16.msra.mxu0 0
      %5233 = vmatprep.subr.bf16.mxu0 0
      %5234 = vmatpush1.bf16.msra.mxu0 0
      %5235 = vmatprep.subr.bf16.mxu0 0
      %5236 = vmatpush1.bf16.msra.mxu0 0
      %5237 = vmatprep.subr.bf16.mxu0 0
      %5238 = vmatpush1.bf16.msra.mxu0 0
      %5239 = vmatprep.subr.bf16.mxu0 0
      %5240 = vmatpush1.bf16.msra.mxu0 0
      %5241 = vmatprep.subr.bf16.mxu0 0
      %5242 = vmatpush1.bf16.msra.mxu0 0
      %5243 = vmatprep.subr.bf16.mxu0 0
      %5244 = vmatpush1.bf16.msra.mxu0 0
      %5245 = vmatprep.subr.bf16.mxu0 0
      %5246 = vmatpush1.bf16.msra.mxu0 0
      %5247 = vmatprep.subr.bf16.mxu0 0
      %5248 = vmatpush1.bf16.msra.mxu0 0
      %5249 = vmatprep.subr.bf16.mxu0 0
      %5250 = vmatpush1.bf16.msra.mxu0 0
      %5251 = vmatprep.subr.bf16.mxu0 0
      %5252 = vmatpush1.bf16.msra.mxu0 0
      %5253 = vmatprep.subr.bf16.mxu0 0
      %5254 = vmatpush1.bf16.msra.mxu0 0
      %5255 = vmatprep.mubr.bf16.mxu0 0
      %5256 = vmatmul.mubr.bf16.gmra.mrb[0].mxu0 %v5221
      %v5257 = vpop.f32.mrb[0].mxu0
      %v5258 = vadd.f32 0.0, %v5257
      %v5259 = vpop.f32.mrb[0].mxu0
      %v5260 = vpop.f32.mrb[0].mxu0
      %v5261 = vadd.f32 0.0, %v5260
      %v5262 = vpop.f32.mrb[0].mxu0
      %5263 = vdwg.mxu0
      %v5264 = vadd.f32 %v5201, %v5258
      %v5265 = vadd.f32 %v5202, %v5261
      %s5266 = scalar_lea.vmem %s7, 208
      %v5267 = vld [vmem:[%s5266] sm:$0xf]
      %v5268 = vld [vmem:[%s5266 + $0x4] sm:$0xf]
      %v5269 = vld [vmem:[%s5266 + $0x8] sm:$0xf]
      %v5270 = vld [vmem:[%s5266 + $0xc] sm:$0xf]
      %v5275 = vunpack.c.l.b16 %v5267
      %v5276 = vunpack.c.l.b16 %v5268
      %v5277 = vunpack.c.l.b16 %v5269
      %v5278 = vunpack.c.l.b16 %v5270
      %v5279 = vpack.c.b16 %v5276, %v5275
      %v5280 = vpack.c.b16 %v5278, %v5277
      %v5284 = vsel %vm4006, %v4443, 0
      %5286 = vmatprep.subr.bf16.mxu0 0
      %5287 = vmatpush1.bf16.msra.mxu0 %v5279
      %5288 = vmatprep.subr.bf16.mxu0 0
      %5289 = vmatpush1.bf16.msra.mxu0 %v5280
      %5290 = vmatprep.subr.bf16.mxu0 0
      %5291 = vmatpush1.bf16.msra.mxu0 0
      %5292 = vmatprep.subr.bf16.mxu0 0
      %5293 = vmatpush1.bf16.msra.mxu0 0
      %5294 = vmatprep.subr.bf16.mxu0 0
      %5295 = vmatpush1.bf16.msra.mxu0 0
      %5296 = vmatprep.subr.bf16.mxu0 0
      %5297 = vmatpush1.bf16.msra.mxu0 0
      %5298 = vmatprep.subr.bf16.mxu0 0
      %5299 = vmatpush1.bf16.msra.mxu0 0
      %5300 = vmatprep.subr.bf16.mxu0 0
      %5301 = vmatpush1.bf16.msra.mxu0 0
      %5302 = vmatprep.subr.bf16.mxu0 0
      %5303 = vmatpush1.bf16.msra.mxu0 0
      %5304 = vmatprep.subr.bf16.mxu0 0
      %5305 = vmatpush1.bf16.msra.mxu0 0
      %5306 = vmatprep.subr.bf16.mxu0 0
      %5307 = vmatpush1.bf16.msra.mxu0 0
      %5308 = vmatprep.subr.bf16.mxu0 0
      %5309 = vmatpush1.bf16.msra.mxu0 0
      %5310 = vmatprep.subr.bf16.mxu0 0
      %5311 = vmatpush1.bf16.msra.mxu0 0
      %5312 = vmatprep.subr.bf16.mxu0 0
      %5313 = vmatpush1.bf16.msra.mxu0 0
      %5314 = vmatprep.subr.bf16.mxu0 0
      %5315 = vmatpush1.bf16.msra.mxu0 0
      %5316 = vmatprep.subr.bf16.mxu0 0
      %5317 = vmatpush1.bf16.msra.mxu0 0
      %5318 = vmatprep.mubr.bf16.mxu0 0
      %5319 = vmatmul.mubr.bf16.gmra.mrb[0].mxu0 %v5284
      %v5320 = vpop.f32.mrb[0].mxu0
      %v5321 = vadd.f32 0.0, %v5320
      %v5322 = vpop.f32.mrb[0].mxu0
      %v5323 = vpop.f32.mrb[0].mxu0
      %v5324 = vadd.f32 0.0, %v5323
      %v5325 = vpop.f32.mrb[0].mxu0
      %5326 = vdwg.mxu0
      %v5327 = vadd.f32 %v5264, %v5321
      %v5328 = vadd.f32 %v5265, %v5324
      %s5329 = scalar_lea.vmem %s7, 224
      %v5330 = vld [vmem:[%s5329] sm:$0xf]
      %v5331 = vld [vmem:[%s5329 + $0x4] sm:$0xf]
      %v5332 = vld [vmem:[%s5329 + $0x8] sm:$0xf]
      %v5333 = vld [vmem:[%s5329 + $0xc] sm:$0xf]
      %v5338 = vunpack.c.l.b16 %v5330
      %v5339 = vunpack.c.l.b16 %v5331
      %v5340 = vunpack.c.l.b16 %v5332
      %v5341 = vunpack.c.l.b16 %v5333
      %v5342 = vpack.c.b16 %v5339, %v5338
      %v5343 = vpack.c.b16 %v5341, %v5340
      %v5347 = vsel %vm4006, %v4444, 0
      %5349 = vmatprep.subr.bf16.mxu0 0
      %5350 = vmatpush1.bf16.msra.mxu0 %v5342
      %5351 = vmatprep.subr.bf16.mxu0 0
      %5352 = vmatpush1.bf16.msra.mxu0 %v5343
      %5353 = vmatprep.subr.bf16.mxu0 0
      %5354 = vmatpush1.bf16.msra.mxu0 0
      %5355 = vmatprep.subr.bf16.mxu0 0
      %5356 = vmatpush1.bf16.msra.mxu0 0
      %5357 = vmatprep.subr.bf16.mxu0 0
      %5358 = vmatpush1.bf16.msra.mxu0 0
      %5359 = vmatprep.subr.bf16.mxu0 0
      %5360 = vmatpush1.bf16.msra.mxu0 0
      %5361 = vmatprep.subr.bf16.mxu0 0
      %5362 = vmatpush1.bf16.msra.mxu0 0
      %5363 = vmatprep.subr.bf16.mxu0 0
      %5364 = vmatpush1.bf16.msra.mxu0 0
      %5365 = vmatprep.subr.bf16.mxu0 0
      %5366 = vmatpush1.bf16.msra.mxu0 0
      %5367 = vmatprep.subr.bf16.mxu0 0
      %5368 = vmatpush1.bf16.msra.mxu0 0
      %5369 = vmatprep.subr.bf16.mxu0 0
      %5370 = vmatpush1.bf16.msra.mxu0 0
      %5371 = vmatprep.subr.bf16.mxu0 0
      %5372 = vmatpush1.bf16.msra.mxu0 0
      %5373 = vmatprep.subr.bf16.mxu0 0
      %5374 = vmatpush1.bf16.msra.mxu0 0
      %5375 = vmatprep.subr.bf16.mxu0 0
      %5376 = vmatpush1.bf16.msra.mxu0 0
      %5377 = vmatprep.subr.bf16.mxu0 0
      %5378 = vmatpush1.bf16.msra.mxu0 0
      %5379 = vmatprep.subr.bf16.mxu0 0
      %5380 = vmatpush1.bf16.msra.mxu0 0
      %5381 = vmatprep.mubr.bf16.mxu0 0
      %5382 = vmatmul.mubr.bf16.gmra.mrb[0].mxu0 %v5347
      %v5383 = vpop.f32.mrb[0].mxu0
      %v5384 = vadd.f32 0.0, %v5383
      %v5385 = vpop.f32.mrb[0].mxu0
      %v5386 = vpop.f32.mrb[0].mxu0
      %v5387 = vadd.f32 0.0, %v5386
      %v5388 = vpop.f32.mrb[0].mxu0
      %5389 = vdwg.mxu0
      %v5390 = vadd.f32 %v5327, %v5384
      %v5391 = vadd.f32 %v5328, %v5387
      %s5392 = scalar_lea.vmem %s7, 240
      %v5393 = vld [vmem:[%s5392] sm:$0xf]
      %v5394 = vld [vmem:[%s5392 + $0x4] sm:$0xf]
      %v5395 = vld [vmem:[%s5392 + $0x8] sm:$0xf]
      %v5396 = vld [vmem:[%s5392 + $0xc] sm:$0xf]
      %v5401 = vunpack.c.l.b16 %v5393
      %v5402 = vunpack.c.l.b16 %v5394
      %v5403 = vunpack.c.l.b16 %v5395
      %v5404 = vunpack.c.l.b16 %v5396
      %v5405 = vpack.c.b16 %v5402, %v5401
      %v5406 = vpack.c.b16 %v5404, %v5403
      %v5410 = vsel %vm4006, %v4445, 0
      %5412 = vmatprep.subr.bf16.mxu0 0
      %5413 = vmatpush1.bf16.msra.mxu0 %v5405
      %5414 = vmatprep.subr.bf16.mxu0 0
      %5415 = vmatpush1.bf16.msra.mxu0 %v5406
      %5416 = vmatprep.subr.bf16.mxu0 0
      %5417 = vmatpush1.bf16.msra.mxu0 0
      %5418 = vmatprep.subr.bf16.mxu0 0
      %5419 = vmatpush1.bf16.msra.mxu0 0
      %5420 = vmatprep.subr.bf16.mxu0 0
      %5421 = vmatpush1.bf16.msra.mxu0 0
      %5422 = vmatprep.subr.bf16.mxu0 0
      %5423 = vmatpush1.bf16.msra.mxu0 0
      %5424 = vmatprep.subr.bf16.mxu0 0
      %5425 = vmatpush1.bf16.msra.mxu0 0
      %5426 = vmatprep.subr.bf16.mxu0 0
      %5427 = vmatpush1.bf16.msra.mxu0 0
      %5428 = vmatprep.subr.bf16.mxu0 0
      %5429 = vmatpush1.bf16.msra.mxu0 0
      %5430 = vmatprep.subr.bf16.mxu0 0
      %5431 = vmatpush1.bf16.msra.mxu0 0
      %5432 = vmatprep.subr.bf16.mxu0 0
      %5433 = vmatpush1.bf16.msra.mxu0 0
      %5434 = vmatprep.subr.bf16.mxu0 0
      %5435 = vmatpush1.bf16.msra.mxu0 0
      %5436 = vmatprep.subr.bf16.mxu0 0
      %5437 = vmatpush1.bf16.msra.mxu0 0
      %5438 = vmatprep.subr.bf16.mxu0 0
      %5439 = vmatpush1.bf16.msra.mxu0 0
      %5440 = vmatprep.subr.bf16.mxu0 0
      %5441 = vmatpush1.bf16.msra.mxu0 0
      %5442 = vmatprep.subr.bf16.mxu0 0
      %5443 = vmatpush1.bf16.msra.mxu0 0
      %5444 = vmatprep.mubr.bf16.mxu0 0
      %5445 = vmatmul.mubr.bf16.gmra.mrb[0].mxu0 %v5410
      %v5446 = vpop.f32.mrb[0].mxu0
      %v5447 = vadd.f32 0.0, %v5446
      %v5448 = vpop.f32.mrb[0].mxu0
      %v5449 = vpop.f32.mrb[0].mxu0
      %v5450 = vadd.f32 0.0, %v5449
      %v5451 = vpop.f32.mrb[0].mxu0
      %5452 = vdwg.mxu0
      %v5453 = vadd.f32 %v5390, %v5447
      %v5454 = vadd.f32 %v5391, %v5450
      %v5455 = vsel %vm4220, %v5453, 0.0
      %v5456 = vsel %vm4220, %v5454, 0.0
      %v5457 = vadd.f32 %v5455, %v5456
      %v5458 = vrot.slane %v5457, 4
      %v5459 = vadd.f32 %v5457, %v5458
      %v5460 = vrot.slane %v5459, 2
      %v5461 = vadd.f32 %v5459, %v5460
      %v5462 = vrot.slane %v5461, 1
      %v5463 = vadd.f32 %v5461, %v5462
      %v5464 = vrcp.pop 16.0
      %v5465 = vmul.f32 %v5463, %v5464
      %v5466 = vmul.f32 %v5453, %v5453
      %v5467 = vmul.f32 %v5454, %v5454
      %v5468 = vsel %vm4220, %v5466, 0.0
      %v5469 = vsel %vm4220, %v5467, 0.0
      %v5470 = vadd.f32 %v5468, %v5469
      %v5471 = vrot.slane %v5470, 4
      %v5472 = vadd.f32 %v5470, %v5471
      %v5473 = vrot.slane %v5472, 2
      %v5474 = vadd.f32 %v5472, %v5473
      %v5475 = vrot.slane %v5474, 1
      %v5476 = vadd.f32 %v5474, %v5475
      %v5477 = vmul.f32 %v5476, %v5464
      %v5478 = vmul.f32 %v5465, %v5465
      %v5479 = vsub.f32 %v5477, %v5478
      %v5480 = vsub.f32 %v5453, %v5465
      %v5481 = vsub.f32 %v5454, %v5465
      %v5482 = vadd.f32 %v5479, 1e-05
      %v5483 = vrsqrt.pop %v5482
      %v5484 = vmul.f32 %v5480, %v5483
      %v5485 = vmul.f32 %v5481, %v5483
      %vm5486 = vcmp.gt.f32.partialorder %v5484, 0.0
      %vm5487 = vcmp.gt.f32.partialorder %v5485, 0.0
      %v5488 = vmul.f32 %v5484, 0.2
      %v5489 = vmul.f32 %v5485, 0.2
      %v5490 = vsel %vm5486, %v5484, %v5488
      %v5491 = vsel %vm5487, %v5485, %v5489
      %v5492 = vld [vmem:[%s9] sm:$0xff]
      %v5493 = vld [vmem:[%s9 + $0x8] sm:$0xff]
      %v5494 = vmul.f32 %v5490, %v5492
      %v5495 = vmul.f32 %v5491, %v5493
      %v5496 = vsel %vm4220, %v5494, 0.0
      %5497 = vadd.xlane.f32.xlu0 %v5496
      %v5498 = vpop.xlane.xlu0 %5497
      %v5499 = vsel %vm4220, %v5495, 0.0
      %5500 = vadd.xlane.f32.xlu0 %v5499
      %v5501 = vpop.xlane.xlu0 %5500
      %v5502 = vadd.f32 %v5498, %v5501
      %v5503 = vrot.slane %v5502, 4
      %v5504 = vadd.f32 %v5502, %v5503
      %v5505 = vrot.slane %v5504, 2
      %v5506 = vadd.f32 %v5504, %v5505
      %v5507 = vrot.slane %v5506, 1
      %v5508 = vadd.f32 %v5506, %v5507
      %v5509 = vld [vmem:[#allocation2] sm:$0x1]
      %v5510 = vadd.f32 %v5508, %v5509
      %vm5511 = vcmask 0
      %5512 = vst.msk [vmem:[%s384] sm:$0x1] %vm5511, %v5510
      %p5513 = scmp.lt.s32.totalorder %s24, 1
      %s5514 = scalar_select %p5513, %s24, 1
      %s5515 = scalar_lea.vmem %s11, %s5514
      // Predicated region
      $region65: #{_lambda_.1} parent=63 // pred_check
        %p5516 = pneg %p278
      $region66: #{_lambda_.1} parent=63 // pred_check_branch
        %5518 = sbr.rel (%p5516) target = $region68
      $region67: #{_lambda_.1} parent=63 // pred_region
        _
      $region68: #{_lambda_.1} parent=63 // pred_fallthru
        _
    $region64: #{_lambda_.1} parent=5 // pred_fallthru
      _
    %p5519 = scmp.le.s32.totalorder 2, %s19
    // Predicated region
    $region69: #{_lambda_.1} parent=5 // pred_check
      %p5520 = pneg %p5519
    $region70: #{_lambda_.1} parent=5 // pred_check_branch
      %5522 = sbr.rel (%p5520) target = $region72
    $region71: #{_lambda_.1} parent=5 // pred_region
      %s5523 = ssub.s32 %s19, 2
      // Predicated region
      $region73: #{_lambda_.1} parent=71 // pred_check
        %p5524 = pneg %p284
      $region74: #{_lambda_.1} parent=71 // pred_check_branch
        %5526 = sbr.rel (%p5524) target = $region76
      $region75: #{_lambda_.1} parent=71 // pred_region
        %p5527 = scmp.lt.s32.totalorder %s25, 1
        %s5528 = scalar_select %p5527, %s25, 1
        %s5529 = scalar_lea.vmem %s11, %s5528
      $region76: #{_lambda_.1} parent=71 // pred_fallthru
        _
    $region72: #{_lambda_.1} parent=5 // pred_fallthru
      _
  $region6: #{_lambda_.1} parent=0 // loop_footer
    %s23 = sadd.s32 1, %s19
  $region7: #{_lambda_.1} parent=0 // loop_footer_branch
    %18 = sbr.rel target = $region3
  $region8: #{_lambda_.1} parent=0 // loop_exit
    _

</llo_original>
